<compile_context>
chip_gen: v6e
topology: v6e:2x2x1
jax: 0.10.0
libtpu: 0.0.40
codegen_flags: <defaults>
</compile_context>

<pallas_src>
import functools

import jax
import jax.numpy as jnp
from jax.experimental import pallas as pl
from jax.experimental.pallas import tpu as pltpu


# ----------------------------------------------------------------------------
# In-kernel helpers (pure jnp, trace into the Pallas body)
# ----------------------------------------------------------------------------
def _erf(x):
    # Abramowitz & Stegun 7.1.26 rational approximation, |err| < 1.5e-7.
    a1, a2, a3, a4, a5 = 0.254829592, -0.284496736, 1.421413741, -1.453152027, 1.061405429
    p = 0.3275911
    sgn = jnp.where(x >= 0.0, 1.0, -1.0)
    ax = jnp.abs(x)
    t = 1.0 / (1.0 + p * ax)
    poly = t * (a1 + t * (a2 + t * (a3 + t * (a4 + t * a5))))
    return sgn * (1.0 - poly * jnp.exp(-ax * ax))


def _gelu_exact(x):
    # PyTorch nn.GELU default: 0.5 * x * (1 + erf(x / sqrt(2)))
    return 0.5 * x * (1.0 + _erf(x * 0.7071067811865476))


def _matmul(a, b):
    # 2-D matmul, f32 accumulation on the MXU regardless of operand dtype.
    return jax.lax.dot_general(a, b, (((1,), (0,)), ((), ())),
                               preferred_element_type=jnp.float32)


# ----------------------------------------------------------------------------
# Fused kernel: PreNorm space-attn + PreNorm time-attn + Linear + residual
#               + PreNorm MLP + residual, for a block of `TB` batch elements.
# ----------------------------------------------------------------------------
def transformer_block_kernel(
        x_ref,            # (TB, S, D) activations (f32)
        mask_ref,         # (2, S, S) additive masks: [space, time] (f32)
        wqkv_ref,         # (D, 6*inner) LN-folded QKV weights, both branches (bf16)
        bqkv_ref,         # (1, 6*inner) LN-folded QKV bias (f32)
        wlin_ref,         # (2*inner, D) output projection (bf16)
        blin_ref,         # (1, D) output projection bias (f32)
        w1_ref,           # (D, mlp_dim) LN-folded MLP weight 1 (bf16)
        b1_ref,           # (1, mlp_dim) LN-folded MLP bias 1 (f32)
        w2_ref,           # (mlp_dim, D) MLP weight 2 (bf16)
        b2_ref,           # (1, D) MLP bias 2 (f32)
        o_ref,            # (TB, S, D) output
        *, heads, dim_head):
    TB, S, D = x_ref.shape
    R = TB * S
    inner = heads * dim_head
    scale = float(dim_head) ** -0.5
    f32, bf16 = jnp.float32, jnp.bfloat16

    x = x_ref[...].astype(f32).reshape(R, D)          # rows are time-major tokens

    # ---- shared LayerNorm statistics (affines folded into wqkv/bqkv) -------
    mu = jnp.mean(x, axis=-1, keepdims=True)
    var = jnp.mean((x - mu) ** 2, axis=-1, keepdims=True)
    xhat = (x - mu) * jax.lax.rsqrt(var + 1e-5)

    # ---- ONE fat QKV matmul produces both branches' q/k/v (bf16 -> f32) ----
    qkv = _matmul(xhat.astype(bf16), wqkv_ref[...]) + bqkv_ref[...]   # (R, 6*inner)

    mask_space = mask_ref[0]                           # (S, S) additive, 0 / -1e30
    mask_time = mask_ref[1]

    # ---- factorized attention -----------------------------------------------
    # TODO(synk): at production head counts batch heads via (TB, heads, S, dh)
    # 4-D einsums; here heads=2 per branch, so a static loop of 3-D batched
    # einsums (batch = TB sequences) is used to stay on safe Mosaic lowerings.
    head_outs = []
    for branch in range(2):                            # 0 = space, 1 = time
        base = branch * 3 * inner
        mask = mask_space if branch == 0 else mask_time
        for h in range(heads):
            lo = h * dim_head
            q = (qkv[:, base + lo:base + lo + dim_head] * scale)
            k = qkv[:, base + inner + lo:base + inner + lo + dim_head]
            v = qkv[:, base + 2 * inner + lo:base + 2 * inner + lo + dim_head]
            q = q.reshape(TB, S, dim_head).astype(bf16)
            k = k.reshape(TB, S, dim_head).astype(bf16)
            v = v.reshape(TB, S, dim_head).astype(bf16)
            dots = jnp.einsum('bqd,bkd->bqk', q, k, preferred_element_type=f32)
            dots = dots + mask                          # additive mask (f32)
            m = jnp.max(dots, axis=-1, keepdims=True)
            e = jnp.exp(dots - m)
            p = e * pl.reciprocal(jnp.sum(e, axis=-1, keepdims=True), approx=True)
            o = jnp.einsum('bqk,bkd->bqd', p.astype(bf16), v,
                           preferred_element_type=f32)
            head_outs.append(o.reshape(R, dim_head))

    # ---- ONE output projection for both branches: (R, 2*inner) @ (2*inner, D)
    att = jnp.concatenate(head_outs, axis=-1).astype(bf16)
    out_att = _matmul(att, wlin_ref[...]) + blin_ref[...] + x          # residual 1

    # ---- PreNorm MLP (LN affine folded into w1/b1) + residual --------------
    mu2 = jnp.mean(out_att, axis=-1, keepdims=True)
    var2 = jnp.mean((out_att - mu2) ** 2, axis=-1, keepdims=True)
    yhat = (out_att - mu2) * jax.lax.rsqrt(var2 + 1e-5)
    hid = _matmul(yhat.astype(bf16), w1_ref[...]) + b1_ref[...]
    hid = _gelu_exact(hid)                             # exact-erf GELU in f32
    mlp = _matmul(hid.astype(bf16), w2_ref[...]) + b2_ref[...]

    o_ref[...] = (mlp + out_att).reshape(TB, S, D).astype(o_ref.dtype)


# ----------------------------------------------------------------------------
# Wrapper-side parameter preparation (LN folding, branch concat, masks, bf16)
# ----------------------------------------------------------------------------
def prepare_params(p, *, t, n):
    f32, bf16 = jnp.float32, jnp.bfloat16
    S = t * n

    g_s = p["ln_s_g"].astype(f32).reshape(-1)
    b_s = p["ln_s_b"].astype(f32).reshape(-1)
    g_t = p["ln_t_g"].astype(f32).reshape(-1)
    b_t = p["ln_t_b"].astype(f32).reshape(-1)
    wqkv_s = p["wqkv_s"].astype(f32)
    wqkv_t = p["wqkv_t"].astype(f32)

    # Fold LN affine into the QKV weights:  (xhat*g + b) @ W = xhat @ (g*W) + b@W
    wqkv_cat = jnp.concatenate([g_s[:, None] * wqkv_s,
                                g_t[:, None] * wqkv_t], axis=1).astype(bf16)
    bqkv_cat = jnp.concatenate([b_s @ wqkv_s, b_t @ wqkv_t])[None, :].astype(f32)

    # Fold the MLP PreNorm affine into w1/b1 the same way.
    g_m = p["ln_m_g"].astype(f32).reshape(-1)
    b_m = p["ln_m_b"].astype(f32).reshape(-1)
    w1 = p["w1"].astype(f32)
    w1_fold = (g_m[:, None] * w1).astype(bf16)
    b1_fold = (p["b1"].astype(f32).reshape(1, -1) + (b_m @ w1)[None, :]).astype(f32)

    # Additive block-diagonal masks built once with integer arithmetic
    # (token index s = ti*n + ni; space: same ti, time: same ni).
    sidx = jnp.arange(S, dtype=jnp.int32)
    ti, ni = sidx // n, sidx % n
    neg = jnp.float32(-1e30)
    mask_space = jnp.where(ti[:, None] == ti[None, :], 0.0, neg).astype(f32)
    mask_time = jnp.where(ni[:, None] == ni[None, :], 0.0, neg).astype(f32)
    masks = jnp.stack([mask_space, mask_time])

    return dict(
        masks=masks, wqkv=wqkv_cat, bqkv=bqkv_cat,
        w_lin=p["w_lin"].astype(bf16), b_lin=p["b_lin"].astype(f32),
        w1=w1_fold, b1=b1_fold,
        w2=p["w2"].astype(bf16), b2=p["b2"].astype(f32))


# ----------------------------------------------------------------------------
# Wrapper: single fused pallas_call over batch blocks
# ----------------------------------------------------------------------------
def transformer_forward(x, params, *, t, n, heads, dim_head, block_b=None):
    B, S, D = x.shape
    assert S == t * n
    inner = heads * dim_head
    mlp_dim = params["w1"].shape[1]
    pp = prepare_params(params, t=t, n=n)

    # Batch-block size: keep >= 2 grid steps when B allows (v7x: 2 TensorCores
    # sharded via dimension_semantics=("parallel",)), and prefer >= 512 rows
    # per step for MXU fill (v6e 256x256 MXU) when the batch is large enough.
    if block_b is None:
        divisors = [d for d in range(1, B + 1) if B % d == 0]
        usable = [d for d in divisors if (B // d) >= 2] or [B]
        block_b = next((d for d in usable if d * S >= 512), usable[-1])
    assert B % block_b == 0
    grid = (B // block_b,)

    kernel = functools.partial(transformer_block_kernel,
                               heads=heads, dim_head=dim_head)

    operands = (x, pp["masks"], pp["wqkv"], pp["bqkv"], pp["w_lin"], pp["b_lin"],
                pp["w1"], pp["b1"], pp["w2"], pp["b2"])

    # Explicit VMEM budget (review: v7x only has 64 MiB physical VMEM).
    R = block_b * S
    act_bytes = 4 * R * (3 * D + 6 * inner + 2 * inner + mlp_dim) \
        + 4 * 2 * heads * R * S
    weight_bytes = sum(int(a.size) * a.dtype.itemsize for a in operands[1:])
    io_bytes = 2 * 2 * block_b * S * D * x.dtype.itemsize
    vmem_limit = int(min(64 * 2 ** 20,
                         max(16 * 2 ** 20, 2 * (act_bytes + 2 * weight_bytes + io_bytes))))

    def build_specs(single_buffer_weights):
        if single_buffer_weights:
            # Grid-invariant operands: don't double-buffer them in VMEM.
            const = lambda shp: pl.BlockSpec(shp, lambda i: (0,) * len(shp),
                                             pipeline_mode=pl.Buffered(1))
        else:
            const = lambda shp: pl.BlockSpec(shp, lambda i: (0,) * len(shp))
        return [
            pl.BlockSpec((block_b, S, D), lambda i: (i, 0, 0)),   # x
            const((2, S, S)),                                     # masks
            const((D, 6 * inner)), const((1, 6 * inner)),         # folded QKV
            const((2 * inner, D)), const((1, D)),                 # output Linear
            const((D, mlp_dim)), const((1, mlp_dim)),             # folded MLP w1/b1
            const((mlp_dim, D)), const((1, D)),                   # MLP w2/b2
        ]

    def call(single_buffer_weights):
        out = pl.pallas_call(
            kernel,
            out_shape=jax.ShapeDtypeStruct((B, S, D), x.dtype),
            grid=grid,
            in_specs=build_specs(single_buffer_weights),
            out_specs=pl.BlockSpec((block_b, S, D), lambda i: (i, 0, 0)),
            compiler_params=pltpu.CompilerParams(
                dimension_semantics=("parallel",),
                vmem_limit_bytes=vmem_limit),
        )(*operands)
        return jax.block_until_ready(out)

    try:
        return call(True)
    except Exception:
        # TODO(synk): pipeline_mode=pl.Buffered(1) unsupported on this jax
        # version; fall back to default (double-buffered) weight pipelining.
        return call(False)


# ----------------------------------------------------------------------------
# Pure-JAX reference (PyTorch-equivalent f32 math, used for a sanity check)
# ----------------------------------------------------------------------------
def reference_forward(x, p, *, t, n, heads, dim_head):
    B, S, D = x.shape
    inner = heads * dim_head

    def ln(z, g, b):
        m = z.mean(-1, keepdims=True)
        v = ((z - m) ** 2).mean(-1, keepdims=True)
        return (z - m) / jnp.sqrt(v + 1e-5) * g + b

    def attn(seq, g, b, wqkv):
        xn = ln(seq, g, b)
        qkv = xn @ wqkv
        q, k, v = (qkv[..., i * inner:(i + 1) * inner] for i in range(3))
        split = lambda z: z.reshape(z.shape[0], z.shape[1], heads,
                                    dim_head).transpose(0, 2, 1, 3)
        q, k, v = split(q), split(k), split(v)
        dots = jnp.einsum("bhid,bhjd->bhij", q, k) * dim_head ** -0.5
        a = jax.nn.softmax(dots, axis=-1)
        o = jnp.einsum("bhij,bhjd->bhid", a, v)
        return o.transpose(0, 2, 1, 3).reshape(seq.shape[0], seq.shape[1], inner)

    xs = attn(x.reshape(B * t, n, D), p["ln_s_g"], p["ln_s_b"],
              p["wqkv_s"]).reshape(B, S, inner)
    xt_in = x.reshape(B, t, n, D).transpose(0, 2, 1, 3).reshape(B * n, t, D)
    xt = attn(xt_in, p["ln_t_g"], p["ln_t_b"], p["wqkv_t"])
    xt = xt.reshape(B, n, t, inner).transpose(0, 2, 1, 3).reshape(B, S, inner)

    out_att = jnp.concatenate([xs, xt], -1) @ p["w_lin"] + p["b_lin"] + x
    y = ln(out_att, p["ln_m_g"], p["ln_m_b"])
    h = jax.nn.gelu(y @ p["w1"] + p["b1"], approximate=False)
    return h @ p["w2"] + p["b2"] + out_att


# ----------------------------------------------------------------------------
# Main
# ----------------------------------------------------------------------------
if __name__ == "__main__":
    B = 2
    t = 2                      # num_patches_time
    n = 4                      # num_patches_space
    dim = 32
    heads_total = 4
    heads = heads_total // 2   # heads per factorized-attention branch
    dim_head = 16
    mlp_dim = 64
    S = t * n
    inner = heads * dim_head
    dtype = jnp.float32

    key = jax.random.PRNGKey(0)
    ks = jax.random.split(key, 9)
    w = lambda k, shp: (0.02 * jax.random.normal(k, shp)).astype(dtype)

    params = {
        # PreNorm + Attention (space)
        "ln_s_g": jnp.ones((1, dim), dtype), "ln_s_b": jnp.zeros((1, dim), dtype),
        "wqkv_s": w(ks[0], (dim, 3 * inner)),
        # PreNorm + Attention (time)
        "ln_t_g": jnp.ones((1, dim), dtype), "ln_t_b": jnp.zeros((1, dim), dtype),
        "wqkv_t": w(ks[1], (dim, 3 * inner)),
        # output Linear (2*inner -> dim); Dropout(p=0) is identity
        "w_lin": w(ks[2], (2 * inner, dim)), "b_lin": w(ks[3], (1, dim)),
        # PreNorm + FeedForward
        "ln_m_g": jnp.ones((1, dim), dtype), "ln_m_b": jnp.zeros((1, dim), dtype),
        "w1": w(ks[4], (dim, mlp_dim)), "b1": w(ks[5], (1, mlp_dim)),
        "w2": w(ks[6], (mlp_dim, dim)), "b2": w(ks[7], (1, dim)),
    }

    x = jax.random.normal(ks[8], (B, S, dim), dtype)

    out = transformer_forward(x, params, t=t, n=n, heads=heads, dim_head=dim_head)
    out = jax.block_until_ready(out)

    ref = reference_forward(x, params, t=t, n=n, heads=heads, dim_head=dim_head)
    assert out.shape == (B, S, dim)
    max_err = float(jnp.max(jnp.abs(out - ref)))
    # bf16 matmul operands (f32 accumulate) + EUP approx reciprocal in the
    # softmax vs. a pure-f32 reference => allow ~1e-2 absolute slack.
    assert max_err < 2e-2, max_err
    print("KERNEL_OK")
</pallas_src>

<mosaic_0001>
module attributes {stable_mosaic.version = 11 : i64} {
  func.func @transformer_block_kernel(%arg0: i32, %arg1: memref<1x8x32xf32, #tpu.memory_space<vmem>>, %arg2: memref<2x8x8xf32, #tpu.memory_space<vmem>>, %arg3: memref<32x192xbf16, #tpu.memory_space<vmem>>, %arg4: memref<1x192xf32, #tpu.memory_space<vmem>>, %arg5: memref<64x32xbf16, #tpu.memory_space<vmem>>, %arg6: memref<1x32xf32, #tpu.memory_space<vmem>>, %arg7: memref<32x64xbf16, #tpu.memory_space<vmem>>, %arg8: memref<1x64xf32, #tpu.memory_space<vmem>>, %arg9: memref<64x32xbf16, #tpu.memory_space<vmem>>, %arg10: memref<1x32xf32, #tpu.memory_space<vmem>>, %arg11: memref<1x8x32xf32, #tpu.memory_space<vmem>>) attributes {dimension_semantics = [#tpu.dimension_semantics<parallel>], iteration_bounds = array<i64: 2>, scalar_prefetch = 0 : i64, scratch_operands = 0 : i64, tpu.core_type = #tpu.core_type<tc>, window_params = [{transform_indices = @transform_0, window_bounds = array<i64: 1, 8, 32>}, {pipeline_mode = #tpu.pipeline_mode<synchronous>, transform_indices = @transform_1, window_bounds = array<i64: 2, 8, 8>}, {pipeline_mode = #tpu.pipeline_mode<synchronous>, transform_indices = @transform_2, window_bounds = array<i64: 32, 192>}, {pipeline_mode = #tpu.pipeline_mode<synchronous>, transform_indices = @transform_3, window_bounds = array<i64: 1, 192>}, {pipeline_mode = #tpu.pipeline_mode<synchronous>, transform_indices = @transform_4, window_bounds = array<i64: 64, 32>}, {pipeline_mode = #tpu.pipeline_mode<synchronous>, transform_indices = @transform_5, window_bounds = array<i64: 1, 32>}, {pipeline_mode = #tpu.pipeline_mode<synchronous>, transform_indices = @transform_6, window_bounds = array<i64: 32, 64>}, {pipeline_mode = #tpu.pipeline_mode<synchronous>, transform_indices = @transform_7, window_bounds = array<i64: 1, 64>}, {pipeline_mode = #tpu.pipeline_mode<synchronous>, transform_indices = @transform_8, window_bounds = array<i64: 64, 32>}, {pipeline_mode = #tpu.pipeline_mode<synchronous>, transform_indices = @transform_9, window_bounds = array<i64: 1, 32>}, {transform_indices = @transform_10, window_bounds = array<i64: 1, 8, 32>}]} {
    %c0 = arith.constant 0 : index
    %c0_0 = arith.constant 0 : index
    %c0_1 = arith.constant 0 : index
    %0 = vector.load %arg1[%c0, %c0_0, %c0_1] : memref<1x8x32xf32, #tpu.memory_space<vmem>>, vector<1x8x32xf32>
    %1 = vector.shape_cast %0 : vector<1x8x32xf32> to vector<8x32xf32>
    %cst = arith.constant dense<0.000000e+00> : vector<8xf32>
    %2 = vector.multi_reduction <add>, %1, %cst [1] : vector<8x32xf32> to vector<8xf32>
    %3 = vector.shape_cast %2 : vector<8xf32> to vector<8x1xf32>
    %cst_2 = arith.constant 3.200000e+01 : f32
    %4 = vector.broadcast %cst_2 : f32 to vector<8x1xf32>
    %5 = arith.divf %3, %4 : vector<8x1xf32>
    %6 = vector.broadcast %5 : vector<8x1xf32> to vector<8x32xf32>
    %7 = arith.subf %1, %6 : vector<8x32xf32>
    %8 = arith.mulf %7, %7 : vector<8x32xf32>
    %cst_3 = arith.constant dense<0.000000e+00> : vector<8xf32>
    %9 = vector.multi_reduction <add>, %8, %cst_3 [1] : vector<8x32xf32> to vector<8xf32>
    %10 = vector.shape_cast %9 : vector<8xf32> to vector<8x1xf32>
    %cst_4 = arith.constant 3.200000e+01 : f32
    %11 = vector.broadcast %cst_4 : f32 to vector<8x1xf32>
    %12 = arith.divf %10, %11 : vector<8x1xf32>
    %13 = vector.broadcast %5 : vector<8x1xf32> to vector<8x32xf32>
    %14 = arith.subf %1, %13 : vector<8x32xf32>
    %cst_5 = arith.constant 9.99999974E-6 : f32
    %15 = vector.broadcast %cst_5 : f32 to vector<8x1xf32>
    %16 = arith.addf %12, %15 : vector<8x1xf32>
    %17 = math.rsqrt %16 : vector<8x1xf32>
    %18 = vector.broadcast %17 : vector<8x1xf32> to vector<8x32xf32>
    %19 = arith.mulf %14, %18 : vector<8x32xf32>
    %20 = arith.truncf %19 : vector<8x32xf32> to vector<8x32xbf16>
    %c0_6 = arith.constant 0 : index
    %c0_7 = arith.constant 0 : index
    %21 = vector.load %arg3[%c0_6, %c0_7] : memref<32x192xbf16, #tpu.memory_space<vmem>>, vector<32x192xbf16>
    %cst_8 = arith.constant dense<0.000000e+00> : vector<8x192xf32>
    %22 = tpu.matmul %20, %21, %cst_8 {dimension_numbers = #tpu.dot_dimension_numbers<[1], [0], [0], [1], [0, 0, 1, 1], [], []>} : vector<8x32xbf16>, vector<32x192xbf16>, vector<8x192xf32> -> vector<8x192xf32>
    %c0_9 = arith.constant 0 : index
    %c0_10 = arith.constant 0 : index
    %23 = vector.load %arg4[%c0_9, %c0_10] : memref<1x192xf32, #tpu.memory_space<vmem>>, vector<1x192xf32>
    %24 = vector.broadcast %23 : vector<1x192xf32> to vector<8x192xf32>
    %25 = arith.addf %22, %24 : vector<8x192xf32>
    %c0_11 = arith.constant 0 : index
    %c0_12 = arith.constant 0 : index
    %c0_13 = arith.constant 0 : index
    %26 = vector.load %arg2[%c0_11, %c0_12, %c0_13] : memref<2x8x8xf32, #tpu.memory_space<vmem>>, vector<1x8x8xf32>
    %27 = vector.shape_cast %26 : vector<1x8x8xf32> to vector<8x8xf32>
    %c1 = arith.constant 1 : index
    %c0_14 = arith.constant 0 : index
    %c0_15 = arith.constant 0 : index
    %28 = vector.load %arg2[%c1, %c0_14, %c0_15] : memref<2x8x8xf32, #tpu.memory_space<vmem>>, vector<1x8x8xf32>
    %29 = vector.shape_cast %28 : vector<1x8x8xf32> to vector<8x8xf32>
    %30 = vector.extract_strided_slice %25 {offsets = [0, 0], sizes = [8, 16], strides = [1, 1]} : vector<8x192xf32> to vector<8x16xf32>
    %cst_16 = arith.constant 2.500000e-01 : f32
    %31 = vector.broadcast %cst_16 : f32 to vector<8x16xf32>
    %32 = arith.mulf %30, %31 : vector<8x16xf32>
    %33 = vector.extract_strided_slice %25 {offsets = [0, 32], sizes = [8, 16], strides = [1, 1]} : vector<8x192xf32> to vector<8x16xf32>
    %34 = vector.extract_strided_slice %25 {offsets = [0, 64], sizes = [8, 16], strides = [1, 1]} : vector<8x192xf32> to vector<8x16xf32>
    %35 = vector.shape_cast %32 : vector<8x16xf32> to vector<1x8x16xf32>
    %36 = arith.truncf %35 : vector<1x8x16xf32> to vector<1x8x16xbf16>
    %37 = vector.shape_cast %33 : vector<8x16xf32> to vector<1x8x16xf32>
    %38 = arith.truncf %37 : vector<1x8x16xf32> to vector<1x8x16xbf16>
    %39 = vector.shape_cast %34 : vector<8x16xf32> to vector<1x8x16xf32>
    %40 = arith.truncf %39 : vector<1x8x16xf32> to vector<1x8x16xbf16>
    "tpu.trace_start"() <{level = 10 : i32, message = "bqd,bkd->bqk"}> : () -> ()
    %cst_17 = arith.constant dense<0.000000e+00> : vector<1x8x8xf32>
    %41 = tpu.matmul %36, %38, %cst_17 {dimension_numbers = #tpu.dot_dimension_numbers<[2], [2], [1], [1], [0, 0, 0, 1, 1, 1], [0], [0]>} : vector<1x8x16xbf16>, vector<1x8x16xbf16>, vector<1x8x8xf32> -> vector<1x8x8xf32>
    "tpu.trace_stop"() : () -> ()
    %42 = vector.shape_cast %27 : vector<8x8xf32> to vector<1x8x8xf32>
    %43 = arith.addf %41, %42 : vector<1x8x8xf32>
    %cst_18 = arith.constant dense<0xFF800000> : vector<1x8xf32>
    %44 = vector.multi_reduction <maximumf>, %43, %cst_18 [2] : vector<1x8x8xf32> to vector<1x8xf32>
    %45 = vector.shape_cast %44 : vector<1x8xf32> to vector<1x8x1xf32>
    %46 = vector.broadcast %45 : vector<1x8x1xf32> to vector<1x8x8xf32>
    %47 = arith.subf %43, %46 : vector<1x8x8xf32>
    %48 = math.exp %47 : vector<1x8x8xf32>
    %cst_19 = arith.constant dense<0.000000e+00> : vector<1x8xf32>
    %49 = vector.multi_reduction <add>, %48, %cst_19 [2] : vector<1x8x8xf32> to vector<1x8xf32>
    %50 = vector.shape_cast %49 : vector<1x8xf32> to vector<1x8x1xf32>
    %51 = tpu.reciprocal %50 {approx = true} : vector<1x8x1xf32> -> vector<1x8x1xf32>
    %52 = vector.broadcast %51 : vector<1x8x1xf32> to vector<1x8x8xf32>
    %53 = arith.mulf %48, %52 : vector<1x8x8xf32>
    %54 = arith.truncf %53 : vector<1x8x8xf32> to vector<1x8x8xbf16>
    "tpu.trace_start"() <{level = 10 : i32, message = "bqk,bkd->bqd"}> : () -> ()
    %cst_20 = arith.constant dense<0.000000e+00> : vector<1x8x16xf32>
    %55 = tpu.matmul %54, %40, %cst_20 {dimension_numbers = #tpu.dot_dimension_numbers<[2], [1], [1], [2], [0, 0, 0, 1, 1, 2], [0], [0]>} : vector<1x8x8xbf16>, vector<1x8x16xbf16>, vector<1x8x16xf32> -> vector<1x8x16xf32>
    "tpu.trace_stop"() : () -> ()
    %56 = vector.shape_cast %55 : vector<1x8x16xf32> to vector<8x16xf32>
    %57 = vector.extract_strided_slice %25 {offsets = [0, 16], sizes = [8, 16], strides = [1, 1]} : vector<8x192xf32> to vector<8x16xf32>
    %cst_21 = arith.constant 2.500000e-01 : f32
    %58 = vector.broadcast %cst_21 : f32 to vector<8x16xf32>
    %59 = arith.mulf %57, %58 : vector<8x16xf32>
    %60 = vector.extract_strided_slice %25 {offsets = [0, 48], sizes = [8, 16], strides = [1, 1]} : vector<8x192xf32> to vector<8x16xf32>
    %61 = vector.extract_strided_slice %25 {offsets = [0, 80], sizes = [8, 16], strides = [1, 1]} : vector<8x192xf32> to vector<8x16xf32>
    %62 = vector.shape_cast %59 : vector<8x16xf32> to vector<1x8x16xf32>
    %63 = arith.truncf %62 : vector<1x8x16xf32> to vector<1x8x16xbf16>
    %64 = vector.shape_cast %60 : vector<8x16xf32> to vector<1x8x16xf32>
    %65 = arith.truncf %64 : vector<1x8x16xf32> to vector<1x8x16xbf16>
    %66 = vector.shape_cast %61 : vector<8x16xf32> to vector<1x8x16xf32>
    %67 = arith.truncf %66 : vector<1x8x16xf32> to vector<1x8x16xbf16>
    "tpu.trace_start"() <{level = 10 : i32, message = "bqd,bkd->bqk"}> : () -> ()
    %cst_22 = arith.constant dense<0.000000e+00> : vector<1x8x8xf32>
    %68 = tpu.matmul %63, %65, %cst_22 {dimension_numbers = #tpu.dot_dimension_numbers<[2], [2], [1], [1], [0, 0, 0, 1, 1, 1], [0], [0]>} : vector<1x8x16xbf16>, vector<1x8x16xbf16>, vector<1x8x8xf32> -> vector<1x8x8xf32>
    "tpu.trace_stop"() : () -> ()
    %69 = vector.shape_cast %27 : vector<8x8xf32> to vector<1x8x8xf32>
    %70 = arith.addf %68, %69 : vector<1x8x8xf32>
    %cst_23 = arith.constant dense<0xFF800000> : vector<1x8xf32>
    %71 = vector.multi_reduction <maximumf>, %70, %cst_23 [2] : vector<1x8x8xf32> to vector<1x8xf32>
    %72 = vector.shape_cast %71 : vector<1x8xf32> to vector<1x8x1xf32>
    %73 = vector.broadcast %72 : vector<1x8x1xf32> to vector<1x8x8xf32>
    %74 = arith.subf %70, %73 : vector<1x8x8xf32>
    %75 = math.exp %74 : vector<1x8x8xf32>
    %cst_24 = arith.constant dense<0.000000e+00> : vector<1x8xf32>
    %76 = vector.multi_reduction <add>, %75, %cst_24 [2] : vector<1x8x8xf32> to vector<1x8xf32>
    %77 = vector.shape_cast %76 : vector<1x8xf32> to vector<1x8x1xf32>
    %78 = tpu.reciprocal %77 {approx = true} : vector<1x8x1xf32> -> vector<1x8x1xf32>
    %79 = vector.broadcast %78 : vector<1x8x1xf32> to vector<1x8x8xf32>
    %80 = arith.mulf %75, %79 : vector<1x8x8xf32>
    %81 = arith.truncf %80 : vector<1x8x8xf32> to vector<1x8x8xbf16>
    "tpu.trace_start"() <{level = 10 : i32, message = "bqk,bkd->bqd"}> : () -> ()
    %cst_25 = arith.constant dense<0.000000e+00> : vector<1x8x16xf32>
    %82 = tpu.matmul %81, %67, %cst_25 {dimension_numbers = #tpu.dot_dimension_numbers<[2], [1], [1], [2], [0, 0, 0, 1, 1, 2], [0], [0]>} : vector<1x8x8xbf16>, vector<1x8x16xbf16>, vector<1x8x16xf32> -> vector<1x8x16xf32>
    "tpu.trace_stop"() : () -> ()
    %83 = vector.shape_cast %82 : vector<1x8x16xf32> to vector<8x16xf32>
    %84 = vector.extract_strided_slice %25 {offsets = [0, 96], sizes = [8, 16], strides = [1, 1]} : vector<8x192xf32> to vector<8x16xf32>
    %cst_26 = arith.constant 2.500000e-01 : f32
    %85 = vector.broadcast %cst_26 : f32 to vector<8x16xf32>
    %86 = arith.mulf %84, %85 : vector<8x16xf32>
    %87 = vector.extract_strided_slice %25 {offsets = [0, 128], sizes = [8, 16], strides = [1, 1]} : vector<8x192xf32> to vector<8x16xf32>
    %88 = vector.extract_strided_slice %25 {offsets = [0, 160], sizes = [8, 16], strides = [1, 1]} : vector<8x192xf32> to vector<8x16xf32>
    %89 = vector.shape_cast %86 : vector<8x16xf32> to vector<1x8x16xf32>
    %90 = arith.truncf %89 : vector<1x8x16xf32> to vector<1x8x16xbf16>
    %91 = vector.shape_cast %87 : vector<8x16xf32> to vector<1x8x16xf32>
    %92 = arith.truncf %91 : vector<1x8x16xf32> to vector<1x8x16xbf16>
    %93 = vector.shape_cast %88 : vector<8x16xf32> to vector<1x8x16xf32>
    %94 = arith.truncf %93 : vector<1x8x16xf32> to vector<1x8x16xbf16>
    "tpu.trace_start"() <{level = 10 : i32, message = "bqd,bkd->bqk"}> : () -> ()
    %cst_27 = arith.constant dense<0.000000e+00> : vector<1x8x8xf32>
    %95 = tpu.matmul %90, %92, %cst_27 {dimension_numbers = #tpu.dot_dimension_numbers<[2], [2], [1], [1], [0, 0, 0, 1, 1, 1], [0], [0]>} : vector<1x8x16xbf16>, vector<1x8x16xbf16>, vector<1x8x8xf32> -> vector<1x8x8xf32>
    "tpu.trace_stop"() : () -> ()
    %96 = vector.shape_cast %29 : vector<8x8xf32> to vector<1x8x8xf32>
    %97 = arith.addf %95, %96 : vector<1x8x8xf32>
    %cst_28 = arith.constant dense<0xFF800000> : vector<1x8xf32>
    %98 = vector.multi_reduction <maximumf>, %97, %cst_28 [2] : vector<1x8x8xf32> to vector<1x8xf32>
    %99 = vector.shape_cast %98 : vector<1x8xf32> to vector<1x8x1xf32>
    %100 = vector.broadcast %99 : vector<1x8x1xf32> to vector<1x8x8xf32>
    %101 = arith.subf %97, %100 : vector<1x8x8xf32>
    %102 = math.exp %101 : vector<1x8x8xf32>
    %cst_29 = arith.constant dense<0.000000e+00> : vector<1x8xf32>
    %103 = vector.multi_reduction <add>, %102, %cst_29 [2] : vector<1x8x8xf32> to vector<1x8xf32>
    %104 = vector.shape_cast %103 : vector<1x8xf32> to vector<1x8x1xf32>
    %105 = tpu.reciprocal %104 {approx = true} : vector<1x8x1xf32> -> vector<1x8x1xf32>
    %106 = vector.broadcast %105 : vector<1x8x1xf32> to vector<1x8x8xf32>
    %107 = arith.mulf %102, %106 : vector<1x8x8xf32>
    %108 = arith.truncf %107 : vector<1x8x8xf32> to vector<1x8x8xbf16>
    "tpu.trace_start"() <{level = 10 : i32, message = "bqk,bkd->bqd"}> : () -> ()
    %cst_30 = arith.constant dense<0.000000e+00> : vector<1x8x16xf32>
    %109 = tpu.matmul %108, %94, %cst_30 {dimension_numbers = #tpu.dot_dimension_numbers<[2], [1], [1], [2], [0, 0, 0, 1, 1, 2], [0], [0]>} : vector<1x8x8xbf16>, vector<1x8x16xbf16>, vector<1x8x16xf32> -> vector<1x8x16xf32>
    "tpu.trace_stop"() : () -> ()
    %110 = vector.shape_cast %109 : vector<1x8x16xf32> to vector<8x16xf32>
    %111 = vector.extract_strided_slice %25 {offsets = [0, 112], sizes = [8, 16], strides = [1, 1]} : vector<8x192xf32> to vector<8x16xf32>
    %cst_31 = arith.constant 2.500000e-01 : f32
    %112 = vector.broadcast %cst_31 : f32 to vector<8x16xf32>
    %113 = arith.mulf %111, %112 : vector<8x16xf32>
    %114 = vector.extract_strided_slice %25 {offsets = [0, 144], sizes = [8, 16], strides = [1, 1]} : vector<8x192xf32> to vector<8x16xf32>
    %115 = vector.extract_strided_slice %25 {offsets = [0, 176], sizes = [8, 16], strides = [1, 1]} : vector<8x192xf32> to vector<8x16xf32>
    %116 = vector.shape_cast %113 : vector<8x16xf32> to vector<1x8x16xf32>
    %117 = arith.truncf %116 : vector<1x8x16xf32> to vector<1x8x16xbf16>
    %118 = vector.shape_cast %114 : vector<8x16xf32> to vector<1x8x16xf32>
    %119 = arith.truncf %118 : vector<1x8x16xf32> to vector<1x8x16xbf16>
    %120 = vector.shape_cast %115 : vector<8x16xf32> to vector<1x8x16xf32>
    %121 = arith.truncf %120 : vector<1x8x16xf32> to vector<1x8x16xbf16>
    "tpu.trace_start"() <{level = 10 : i32, message = "bqd,bkd->bqk"}> : () -> ()
    %cst_32 = arith.constant dense<0.000000e+00> : vector<1x8x8xf32>
    %122 = tpu.matmul %117, %119, %cst_32 {dimension_numbers = #tpu.dot_dimension_numbers<[2], [2], [1], [1], [0, 0, 0, 1, 1, 1], [0], [0]>} : vector<1x8x16xbf16>, vector<1x8x16xbf16>, vector<1x8x8xf32> -> vector<1x8x8xf32>
    "tpu.trace_stop"() : () -> ()
    %123 = vector.shape_cast %29 : vector<8x8xf32> to vector<1x8x8xf32>
    %124 = arith.addf %122, %123 : vector<1x8x8xf32>
    %cst_33 = arith.constant dense<0xFF800000> : vector<1x8xf32>
    %125 = vector.multi_reduction <maximumf>, %124, %cst_33 [2] : vector<1x8x8xf32> to vector<1x8xf32>
    %126 = vector.shape_cast %125 : vector<1x8xf32> to vector<1x8x1xf32>
    %127 = vector.broadcast %126 : vector<1x8x1xf32> to vector<1x8x8xf32>
    %128 = arith.subf %124, %127 : vector<1x8x8xf32>
    %129 = math.exp %128 : vector<1x8x8xf32>
    %cst_34 = arith.constant dense<0.000000e+00> : vector<1x8xf32>
    %130 = vector.multi_reduction <add>, %129, %cst_34 [2] : vector<1x8x8xf32> to vector<1x8xf32>
    %131 = vector.shape_cast %130 : vector<1x8xf32> to vector<1x8x1xf32>
    %132 = tpu.reciprocal %131 {approx = true} : vector<1x8x1xf32> -> vector<1x8x1xf32>
    %133 = vector.broadcast %132 : vector<1x8x1xf32> to vector<1x8x8xf32>
    %134 = arith.mulf %129, %133 : vector<1x8x8xf32>
    %135 = arith.truncf %134 : vector<1x8x8xf32> to vector<1x8x8xbf16>
    "tpu.trace_start"() <{level = 10 : i32, message = "bqk,bkd->bqd"}> : () -> ()
    %cst_35 = arith.constant dense<0.000000e+00> : vector<1x8x16xf32>
    %136 = tpu.matmul %135, %121, %cst_35 {dimension_numbers = #tpu.dot_dimension_numbers<[2], [1], [1], [2], [0, 0, 0, 1, 1, 2], [0], [0]>} : vector<1x8x8xbf16>, vector<1x8x16xbf16>, vector<1x8x16xf32> -> vector<1x8x16xf32>
    "tpu.trace_stop"() : () -> ()
    %137 = vector.shape_cast %136 : vector<1x8x16xf32> to vector<8x16xf32>
    %138 = tpu.concatenate %56, %83, %110, %137 in 1 : vector<8x16xf32>, vector<8x16xf32>, vector<8x16xf32>, vector<8x16xf32> -> vector<8x64xf32>
    %139 = arith.truncf %138 : vector<8x64xf32> to vector<8x64xbf16>
    %c0_36 = arith.constant 0 : index
    %c0_37 = arith.constant 0 : index
    %140 = vector.load %arg5[%c0_36, %c0_37] : memref<64x32xbf16, #tpu.memory_space<vmem>>, vector<64x32xbf16>
    %cst_38 = arith.constant dense<0.000000e+00> : vector<8x32xf32>
    %141 = tpu.matmul %139, %140, %cst_38 {dimension_numbers = #tpu.dot_dimension_numbers<[1], [0], [0], [1], [0, 0, 1, 1], [], []>} : vector<8x64xbf16>, vector<64x32xbf16>, vector<8x32xf32> -> vector<8x32xf32>
    %c0_39 = arith.constant 0 : index
    %c0_40 = arith.constant 0 : index
    %142 = vector.load %arg6[%c0_39, %c0_40] : memref<1x32xf32, #tpu.memory_space<vmem>>, vector<1x32xf32>
    %143 = vector.broadcast %142 : vector<1x32xf32> to vector<8x32xf32>
    %144 = arith.addf %141, %143 : vector<8x32xf32>
    %145 = arith.addf %144, %1 : vector<8x32xf32>
    %cst_41 = arith.constant dense<0.000000e+00> : vector<8xf32>
    %146 = vector.multi_reduction <add>, %145, %cst_41 [1] : vector<8x32xf32> to vector<8xf32>
    %147 = vector.shape_cast %146 : vector<8xf32> to vector<8x1xf32>
    %cst_42 = arith.constant 3.200000e+01 : f32
    %148 = vector.broadcast %cst_42 : f32 to vector<8x1xf32>
    %149 = arith.divf %147, %148 : vector<8x1xf32>
    %150 = vector.broadcast %149 : vector<8x1xf32> to vector<8x32xf32>
    %151 = arith.subf %145, %150 : vector<8x32xf32>
    %152 = arith.mulf %151, %151 : vector<8x32xf32>
    %cst_43 = arith.constant dense<0.000000e+00> : vector<8xf32>
    %153 = vector.multi_reduction <add>, %152, %cst_43 [1] : vector<8x32xf32> to vector<8xf32>
    %154 = vector.shape_cast %153 : vector<8xf32> to vector<8x1xf32>
    %cst_44 = arith.constant 3.200000e+01 : f32
    %155 = vector.broadcast %cst_44 : f32 to vector<8x1xf32>
    %156 = arith.divf %154, %155 : vector<8x1xf32>
    %157 = vector.broadcast %149 : vector<8x1xf32> to vector<8x32xf32>
    %158 = arith.subf %145, %157 : vector<8x32xf32>
    %cst_45 = arith.constant 9.99999974E-6 : f32
    %159 = vector.broadcast %cst_45 : f32 to vector<8x1xf32>
    %160 = arith.addf %156, %159 : vector<8x1xf32>
    %161 = math.rsqrt %160 : vector<8x1xf32>
    %162 = vector.broadcast %161 : vector<8x1xf32> to vector<8x32xf32>
    %163 = arith.mulf %158, %162 : vector<8x32xf32>
    %164 = arith.truncf %163 : vector<8x32xf32> to vector<8x32xbf16>
    %c0_46 = arith.constant 0 : index
    %c0_47 = arith.constant 0 : index
    %165 = vector.load %arg7[%c0_46, %c0_47] : memref<32x64xbf16, #tpu.memory_space<vmem>>, vector<32x64xbf16>
    %cst_48 = arith.constant dense<0.000000e+00> : vector<8x64xf32>
    %166 = tpu.matmul %164, %165, %cst_48 {dimension_numbers = #tpu.dot_dimension_numbers<[1], [0], [0], [1], [0, 0, 1, 1], [], []>} : vector<8x32xbf16>, vector<32x64xbf16>, vector<8x64xf32> -> vector<8x64xf32>
    %c0_49 = arith.constant 0 : index
    %c0_50 = arith.constant 0 : index
    %167 = vector.load %arg8[%c0_49, %c0_50] : memref<1x64xf32, #tpu.memory_space<vmem>>, vector<1x64xf32>
    %168 = vector.broadcast %167 : vector<1x64xf32> to vector<8x64xf32>
    %169 = arith.addf %166, %168 : vector<8x64xf32>
    %cst_51 = arith.constant 5.000000e-01 : f32
    %170 = vector.broadcast %cst_51 : f32 to vector<8x64xf32>
    %171 = arith.mulf %170, %169 : vector<8x64xf32>
    %cst_52 = arith.constant 0.707106769 : f32
    %172 = vector.broadcast %cst_52 : f32 to vector<8x64xf32>
    %173 = arith.mulf %169, %172 : vector<8x64xf32>
    %cst_53 = arith.constant 0.000000e+00 : f32
    %174 = vector.broadcast %cst_53 : f32 to vector<8x64xf32>
    %175 = arith.cmpf oge, %173, %174 : vector<8x64xf32>
    %cst_54 = arith.constant 1.000000e+00 : f32
    %cst_55 = arith.constant -1.000000e+00 : f32
    %176 = vector.broadcast %cst_54 : f32 to vector<8x64xf32>
    %177 = vector.broadcast %cst_55 : f32 to vector<8x64xf32>
    %178 = arith.select %175, %176, %177 : vector<8x64xi1>, vector<8x64xf32>
    %179 = math.absf %173 : vector<8x64xf32>
    %cst_56 = arith.constant 0.327591091 : f32
    %180 = vector.broadcast %cst_56 : f32 to vector<8x64xf32>
    %181 = arith.mulf %180, %179 : vector<8x64xf32>
    %cst_57 = arith.constant 1.000000e+00 : f32
    %182 = vector.broadcast %cst_57 : f32 to vector<8x64xf32>
    %183 = arith.addf %182, %181 : vector<8x64xf32>
    %cst_58 = arith.constant 1.000000e+00 : f32
    %184 = vector.broadcast %cst_58 : f32 to vector<8x64xf32>
    %185 = arith.divf %184, %183 : vector<8x64xf32>
    %cst_59 = arith.constant 1.06140542 : f32
    %186 = vector.broadcast %cst_59 : f32 to vector<8x64xf32>
    %187 = arith.mulf %185, %186 : vector<8x64xf32>
    %cst_60 = arith.constant -1.45315206 : f32
    %188 = vector.broadcast %cst_60 : f32 to vector<8x64xf32>
    %189 = arith.addf %188, %187 : vector<8x64xf32>
    %190 = arith.mulf %185, %189 : vector<8x64xf32>
    %cst_61 = arith.constant 1.42141378 : f32
    %191 = vector.broadcast %cst_61 : f32 to vector<8x64xf32>
    %192 = arith.addf %191, %190 : vector<8x64xf32>
    %193 = arith.mulf %185, %192 : vector<8x64xf32>
    %cst_62 = arith.constant -0.284496725 : f32
    %194 = vector.broadcast %cst_62 : f32 to vector<8x64xf32>
    %195 = arith.addf %194, %193 : vector<8x64xf32>
    %196 = arith.mulf %185, %195 : vector<8x64xf32>
    %cst_63 = arith.constant 0.254829586 : f32
    %197 = vector.broadcast %cst_63 : f32 to vector<8x64xf32>
    %198 = arith.addf %197, %196 : vector<8x64xf32>
    %199 = arith.mulf %185, %198 : vector<8x64xf32>
    %cst_64 = arith.constant 0.000000e+00 : f32
    %200 = vector.broadcast %cst_64 : f32 to vector<8x64xf32>
    %201 = arith.subf %200, %179 : vector<8x64xf32>
    %202 = arith.mulf %201, %179 : vector<8x64xf32>
    %203 = math.exp %202 : vector<8x64xf32>
    %204 = arith.mulf %199, %203 : vector<8x64xf32>
    %cst_65 = arith.constant 1.000000e+00 : f32
    %205 = vector.broadcast %cst_65 : f32 to vector<8x64xf32>
    %206 = arith.subf %205, %204 : vector<8x64xf32>
    %207 = arith.mulf %178, %206 : vector<8x64xf32>
    %cst_66 = arith.constant 1.000000e+00 : f32
    %208 = vector.broadcast %cst_66 : f32 to vector<8x64xf32>
    %209 = arith.addf %208, %207 : vector<8x64xf32>
    %210 = arith.mulf %171, %209 : vector<8x64xf32>
    %211 = arith.truncf %210 : vector<8x64xf32> to vector<8x64xbf16>
    %c0_67 = arith.constant 0 : index
    %c0_68 = arith.constant 0 : index
    %212 = vector.load %arg9[%c0_67, %c0_68] : memref<64x32xbf16, #tpu.memory_space<vmem>>, vector<64x32xbf16>
    %cst_69 = arith.constant dense<0.000000e+00> : vector<8x32xf32>
    %213 = tpu.matmul %211, %212, %cst_69 {dimension_numbers = #tpu.dot_dimension_numbers<[1], [0], [0], [1], [0, 0, 1, 1], [], []>} : vector<8x64xbf16>, vector<64x32xbf16>, vector<8x32xf32> -> vector<8x32xf32>
    %c0_70 = arith.constant 0 : index
    %c0_71 = arith.constant 0 : index
    %214 = vector.load %arg10[%c0_70, %c0_71] : memref<1x32xf32, #tpu.memory_space<vmem>>, vector<1x32xf32>
    %215 = vector.broadcast %214 : vector<1x32xf32> to vector<8x32xf32>
    %216 = arith.addf %213, %215 : vector<8x32xf32>
    %217 = arith.addf %216, %145 : vector<8x32xf32>
    %218 = vector.shape_cast %217 : vector<8x32xf32> to vector<1x8x32xf32>
    %c0_72 = arith.constant 0 : index
    %c0_73 = arith.constant 0 : index
    %c0_74 = arith.constant 0 : index
    %219 = vector.load %arg11[%c0_72, %c0_73, %c0_74] : memref<1x8x32xf32, #tpu.memory_space<vmem>>, vector<1x8x32xf32>
    tpu.vector_store %arg11[%c0_72, %c0_73, %c0_74], %218 {strides = array<i32>} : memref<1x8x32xf32, #tpu.memory_space<vmem>>, vector<1x8x32xf32>,
    return
  }
  func.func @transform_0(%arg0: i32) -> (i32, i32, i32) {
    %c0_i32 = arith.constant 0 : i32
    %c0_i32_0 = arith.constant 0 : i32
    %c0_i32_1 = arith.constant 0 : i32
    return %arg0, %c0_i32, %c0_i32_0 : i32, i32, i32
  }
  func.func @transform_1(%arg0: i32) -> (i32, i32, i32) {
    %c0_i32 = arith.constant 0 : i32
    %c0_i32_0 = arith.constant 0 : i32
    %c0_i32_1 = arith.constant 0 : i32
    %c0_i32_2 = arith.constant 0 : i32
    return %c0_i32, %c0_i32_0, %c0_i32_1 : i32, i32, i32
  }
  func.func @transform_2(%arg0: i32) -> (i32, i32) {
    %c0_i32 = arith.constant 0 : i32
    %c0_i32_0 = arith.constant 0 : i32
    %c0_i32_1 = arith.constant 0 : i32
    return %c0_i32, %c0_i32_0 : i32, i32
  }
  func.func @transform_3(%arg0: i32) -> (i32, i32) {
    %c0_i32 = arith.constant 0 : i32
    %c0_i32_0 = arith.constant 0 : i32
    %c0_i32_1 = arith.constant 0 : i32
    return %c0_i32, %c0_i32_0 : i32, i32
  }
  func.func @transform_4(%arg0: i32) -> (i32, i32) {
    %c0_i32 = arith.constant 0 : i32
    %c0_i32_0 = arith.constant 0 : i32
    %c0_i32_1 = arith.constant 0 : i32
    return %c0_i32, %c0_i32_0 : i32, i32
  }
  func.func @transform_5(%arg0: i32) -> (i32, i32) {
    %c0_i32 = arith.constant 0 : i32
    %c0_i32_0 = arith.constant 0 : i32
    %c0_i32_1 = arith.constant 0 : i32
    return %c0_i32, %c0_i32_0 : i32, i32
  }
  func.func @transform_6(%arg0: i32) -> (i32, i32) {
    %c0_i32 = arith.constant 0 : i32
    %c0_i32_0 = arith.constant 0 : i32
    %c0_i32_1 = arith.constant 0 : i32
    return %c0_i32, %c0_i32_0 : i32, i32
  }
  func.func @transform_7(%arg0: i32) -> (i32, i32) {
    %c0_i32 = arith.constant 0 : i32
    %c0_i32_0 = arith.constant 0 : i32
    %c0_i32_1 = arith.constant 0 : i32
    return %c0_i32, %c0_i32_0 : i32, i32
  }
  func.func @transform_8(%arg0: i32) -> (i32, i32) {
    %c0_i32 = arith.constant 0 : i32
    %c0_i32_0 = arith.constant 0 : i32
    %c0_i32_1 = arith.constant 0 : i32
    return %c0_i32, %c0_i32_0 : i32, i32
  }
  func.func @transform_9(%arg0: i32) -> (i32, i32) {
    %c0_i32 = arith.constant 0 : i32
    %c0_i32_0 = arith.constant 0 : i32
    %c0_i32_1 = arith.constant 0 : i32
    return %c0_i32, %c0_i32_0 : i32, i32
  }
  func.func @transform_10(%arg0: i32) -> (i32, i32, i32) {
    %c0_i32 = arith.constant 0 : i32
    %c0_i32_0 = arith.constant 0 : i32
    %c0_i32_1 = arith.constant 0 : i32
    return %arg0, %c0_i32, %c0_i32_0 : i32, i32, i32
  }
}

module attributes {stable_mosaic.version = 11 : i64} {
  func.func @transformer_block_kernel(%arg0: i32, %arg1: memref<1x8x32xf32, #tpu.memory_space<vmem>>, %arg2: memref<2x8x8xf32, #tpu.memory_space<vmem>>, %arg3: memref<32x192xbf16, #tpu.memory_space<vmem>>, %arg4: memref<1x192xf32, #tpu.memory_space<vmem>>, %arg5: memref<64x32xbf16, #tpu.memory_space<vmem>>, %arg6: memref<1x32xf32, #tpu.memory_space<vmem>>, %arg7: memref<32x64xbf16, #tpu.memory_space<vmem>>, %arg8: memref<1x64xf32, #tpu.memory_space<vmem>>, %arg9: memref<64x32xbf16, #tpu.memory_space<vmem>>, %arg10: memref<1x32xf32, #tpu.memory_space<vmem>>, %arg11: memref<1x8x32xf32, #tpu.memory_space<vmem>>) attributes {dimension_semantics = [#tpu.dimension_semantics<parallel>], iteration_bounds = array<i64: 2>, scalar_prefetch = 0 : i64, scratch_operands = 0 : i64, tpu.core_type = #tpu.core_type<tc>, window_params = [{transform_indices = @transform_0, window_bounds = array<i64: 1, 8, 32>}, {pipeline_mode = #tpu.pipeline_mode<synchronous>, transform_indices = @transform_1, window_bounds = array<i64: 2, 8, 8>}, {pipeline_mode = #tpu.pipeline_mode<synchronous>, transform_indices = @transform_2, window_bounds = array<i64: 32, 192>}, {pipeline_mode = #tpu.pipeline_mode<synchronous>, transform_indices = @transform_3, window_bounds = array<i64: 1, 192>}, {pipeline_mode = #tpu.pipeline_mode<synchronous>, transform_indices = @transform_4, window_bounds = array<i64: 64, 32>}, {pipeline_mode = #tpu.pipeline_mode<synchronous>, transform_indices = @transform_5, window_bounds = array<i64: 1, 32>}, {pipeline_mode = #tpu.pipeline_mode<synchronous>, transform_indices = @transform_6, window_bounds = array<i64: 32, 64>}, {pipeline_mode = #tpu.pipeline_mode<synchronous>, transform_indices = @transform_7, window_bounds = array<i64: 1, 64>}, {pipeline_mode = #tpu.pipeline_mode<synchronous>, transform_indices = @transform_8, window_bounds = array<i64: 64, 32>}, {pipeline_mode = #tpu.pipeline_mode<synchronous>, transform_indices = @transform_9, window_bounds = array<i64: 1, 32>}, {transform_indices = @transform_10, window_bounds = array<i64: 1, 8, 32>}]} {
    %c0 = arith.constant 0 : index
    %c0_0 = arith.constant 0 : index
    %c0_1 = arith.constant 0 : index
    %0 = vector.load %arg1[%c0, %c0_0, %c0_1] : memref<1x8x32xf32, #tpu.memory_space<vmem>>, vector<1x8x32xf32>
    %1 = vector.shape_cast %0 : vector<1x8x32xf32> to vector<8x32xf32>
    %cst = arith.constant dense<0.000000e+00> : vector<8xf32>
    %2 = vector.multi_reduction <add>, %1, %cst [1] : vector<8x32xf32> to vector<8xf32>
    %3 = vector.shape_cast %2 : vector<8xf32> to vector<8x1xf32>
    %cst_2 = arith.constant 3.200000e+01 : f32
    %4 = vector.broadcast %cst_2 : f32 to vector<8x1xf32>
    %5 = arith.divf %3, %4 : vector<8x1xf32>
    %6 = vector.broadcast %5 : vector<8x1xf32> to vector<8x32xf32>
    %7 = arith.subf %1, %6 : vector<8x32xf32>
    %8 = arith.mulf %7, %7 : vector<8x32xf32>
    %cst_3 = arith.constant dense<0.000000e+00> : vector<8xf32>
    %9 = vector.multi_reduction <add>, %8, %cst_3 [1] : vector<8x32xf32> to vector<8xf32>
    %10 = vector.shape_cast %9 : vector<8xf32> to vector<8x1xf32>
    %cst_4 = arith.constant 3.200000e+01 : f32
    %11 = vector.broadcast %cst_4 : f32 to vector<8x1xf32>
    %12 = arith.divf %10, %11 : vector<8x1xf32>
    %13 = vector.broadcast %5 : vector<8x1xf32> to vector<8x32xf32>
    %14 = arith.subf %1, %13 : vector<8x32xf32>
    %cst_5 = arith.constant 9.99999974E-6 : f32
    %15 = vector.broadcast %cst_5 : f32 to vector<8x1xf32>
    %16 = arith.addf %12, %15 : vector<8x1xf32>
    %17 = math.rsqrt %16 : vector<8x1xf32>
    %18 = vector.broadcast %17 : vector<8x1xf32> to vector<8x32xf32>
    %19 = arith.mulf %14, %18 : vector<8x32xf32>
    %20 = arith.truncf %19 : vector<8x32xf32> to vector<8x32xbf16>
    %c0_6 = arith.constant 0 : index
    %c0_7 = arith.constant 0 : index
    %21 = vector.load %arg3[%c0_6, %c0_7] : memref<32x192xbf16, #tpu.memory_space<vmem>>, vector<32x192xbf16>
    %cst_8 = arith.constant dense<0.000000e+00> : vector<8x192xf32>
    %22 = tpu.matmul %20, %21, %cst_8 {dimension_numbers = #tpu.dot_dimension_numbers<[1], [0], [0], [1], [0, 0, 1, 1], [], []>} : vector<8x32xbf16>, vector<32x192xbf16>, vector<8x192xf32> -> vector<8x192xf32>
    %c0_9 = arith.constant 0 : index
    %c0_10 = arith.constant 0 : index
    %23 = vector.load %arg4[%c0_9, %c0_10] : memref<1x192xf32, #tpu.memory_space<vmem>>, vector<1x192xf32>
    %24 = vector.broadcast %23 : vector<1x192xf32> to vector<8x192xf32>
    %25 = arith.addf %22, %24 : vector<8x192xf32>
    %c0_11 = arith.constant 0 : index
    %c0_12 = arith.constant 0 : index
    %c0_13 = arith.constant 0 : index
    %26 = vector.load %arg2[%c0_11, %c0_12, %c0_13] : memref<2x8x8xf32, #tpu.memory_space<vmem>>, vector<1x8x8xf32>
    %27 = vector.shape_cast %26 : vector<1x8x8xf32> to vector<8x8xf32>
    %c1 = arith.constant 1 : index
    %c0_14 = arith.constant 0 : index
    %c0_15 = arith.constant 0 : index
    %28 = vector.load %arg2[%c1, %c0_14, %c0_15] : memref<2x8x8xf32, #tpu.memory_space<vmem>>, vector<1x8x8xf32>
    %29 = vector.shape_cast %28 : vector<1x8x8xf32> to vector<8x8xf32>
    %30 = vector.extract_strided_slice %25 {offsets = [0, 0], sizes = [8, 16], strides = [1, 1]} : vector<8x192xf32> to vector<8x16xf32>
    %cst_16 = arith.constant 2.500000e-01 : f32
    %31 = vector.broadcast %cst_16 : f32 to vector<8x16xf32>
    %32 = arith.mulf %30, %31 : vector<8x16xf32>
    %33 = vector.extract_strided_slice %25 {offsets = [0, 32], sizes = [8, 16], strides = [1, 1]} : vector<8x192xf32> to vector<8x16xf32>
    %34 = vector.extract_strided_slice %25 {offsets = [0, 64], sizes = [8, 16], strides = [1, 1]} : vector<8x192xf32> to vector<8x16xf32>
    %35 = vector.shape_cast %32 : vector<8x16xf32> to vector<1x8x16xf32>
    %36 = arith.truncf %35 : vector<1x8x16xf32> to vector<1x8x16xbf16>
    %37 = vector.shape_cast %33 : vector<8x16xf32> to vector<1x8x16xf32>
    %38 = arith.truncf %37 : vector<1x8x16xf32> to vector<1x8x16xbf16>
    %39 = vector.shape_cast %34 : vector<8x16xf32> to vector<1x8x16xf32>
    %40 = arith.truncf %39 : vector<1x8x16xf32> to vector<1x8x16xbf16>
    "tpu.trace_start"() <{level = 10 : i32, message = "bqd,bkd->bqk"}> : () -> ()
    %cst_17 = arith.constant dense<0.000000e+00> : vector<1x8x8xf32>
    %41 = tpu.matmul %36, %38, %cst_17 {dimension_numbers = #tpu.dot_dimension_numbers<[2], [2], [1], [1], [0, 0, 0, 1, 1, 1], [0], [0]>} : vector<1x8x16xbf16>, vector<1x8x16xbf16>, vector<1x8x8xf32> -> vector<1x8x8xf32>
    "tpu.trace_stop"() : () -> ()
    %42 = vector.shape_cast %27 : vector<8x8xf32> to vector<1x8x8xf32>
    %43 = arith.addf %41, %42 : vector<1x8x8xf32>
    %cst_18 = arith.constant dense<0xFF800000> : vector<1x8xf32>
    %44 = vector.multi_reduction <maximumf>, %43, %cst_18 [2] : vector<1x8x8xf32> to vector<1x8xf32>
    %45 = vector.shape_cast %44 : vector<1x8xf32> to vector<1x8x1xf32>
    %46 = vector.broadcast %45 : vector<1x8x1xf32> to vector<1x8x8xf32>
    %47 = arith.subf %43, %46 : vector<1x8x8xf32>
    %48 = math.exp %47 : vector<1x8x8xf32>
    %cst_19 = arith.constant dense<0.000000e+00> : vector<1x8xf32>
    %49 = vector.multi_reduction <add>, %48, %cst_19 [2] : vector<1x8x8xf32> to vector<1x8xf32>
    %50 = vector.shape_cast %49 : vector<1x8xf32> to vector<1x8x1xf32>
    %51 = tpu.reciprocal %50 {approx = true} : vector<1x8x1xf32> -> vector<1x8x1xf32>
    %52 = vector.broadcast %51 : vector<1x8x1xf32> to vector<1x8x8xf32>
    %53 = arith.mulf %48, %52 : vector<1x8x8xf32>
    %54 = arith.truncf %53 : vector<1x8x8xf32> to vector<1x8x8xbf16>
    "tpu.trace_start"() <{level = 10 : i32, message = "bqk,bkd->bqd"}> : () -> ()
    %cst_20 = arith.constant dense<0.000000e+00> : vector<1x8x16xf32>
    %55 = tpu.matmul %54, %40, %cst_20 {dimension_numbers = #tpu.dot_dimension_numbers<[2], [1], [1], [2], [0, 0, 0, 1, 1, 2], [0], [0]>} : vector<1x8x8xbf16>, vector<1x8x16xbf16>, vector<1x8x16xf32> -> vector<1x8x16xf32>
    "tpu.trace_stop"() : () -> ()
    %56 = vector.shape_cast %55 : vector<1x8x16xf32> to vector<8x16xf32>
    %57 = vector.extract_strided_slice %25 {offsets = [0, 16], sizes = [8, 16], strides = [1, 1]} : vector<8x192xf32> to vector<8x16xf32>
    %cst_21 = arith.constant 2.500000e-01 : f32
    %58 = vector.broadcast %cst_21 : f32 to vector<8x16xf32>
    %59 = arith.mulf %57, %58 : vector<8x16xf32>
    %60 = vector.extract_strided_slice %25 {offsets = [0, 48], sizes = [8, 16], strides = [1, 1]} : vector<8x192xf32> to vector<8x16xf32>
    %61 = vector.extract_strided_slice %25 {offsets = [0, 80], sizes = [8, 16], strides = [1, 1]} : vector<8x192xf32> to vector<8x16xf32>
    %62 = vector.shape_cast %59 : vector<8x16xf32> to vector<1x8x16xf32>
    %63 = arith.truncf %62 : vector<1x8x16xf32> to vector<1x8x16xbf16>
    %64 = vector.shape_cast %60 : vector<8x16xf32> to vector<1x8x16xf32>
    %65 = arith.truncf %64 : vector<1x8x16xf32> to vector<1x8x16xbf16>
    %66 = vector.shape_cast %61 : vector<8x16xf32> to vector<1x8x16xf32>
    %67 = arith.truncf %66 : vector<1x8x16xf32> to vector<1x8x16xbf16>
    "tpu.trace_start"() <{level = 10 : i32, message = "bqd,bkd->bqk"}> : () -> ()
    %cst_22 = arith.constant dense<0.000000e+00> : vector<1x8x8xf32>
    %68 = tpu.matmul %63, %65, %cst_22 {dimension_numbers = #tpu.dot_dimension_numbers<[2], [2], [1], [1], [0, 0, 0, 1, 1, 1], [0], [0]>} : vector<1x8x16xbf16>, vector<1x8x16xbf16>, vector<1x8x8xf32> -> vector<1x8x8xf32>
    "tpu.trace_stop"() : () -> ()
    %69 = vector.shape_cast %27 : vector<8x8xf32> to vector<1x8x8xf32>
    %70 = arith.addf %68, %69 : vector<1x8x8xf32>
    %cst_23 = arith.constant dense<0xFF800000> : vector<1x8xf32>
    %71 = vector.multi_reduction <maximumf>, %70, %cst_23 [2] : vector<1x8x8xf32> to vector<1x8xf32>
    %72 = vector.shape_cast %71 : vector<1x8xf32> to vector<1x8x1xf32>
    %73 = vector.broadcast %72 : vector<1x8x1xf32> to vector<1x8x8xf32>
    %74 = arith.subf %70, %73 : vector<1x8x8xf32>
    %75 = math.exp %74 : vector<1x8x8xf32>
    %cst_24 = arith.constant dense<0.000000e+00> : vector<1x8xf32>
    %76 = vector.multi_reduction <add>, %75, %cst_24 [2] : vector<1x8x8xf32> to vector<1x8xf32>
    %77 = vector.shape_cast %76 : vector<1x8xf32> to vector<1x8x1xf32>
    %78 = tpu.reciprocal %77 {approx = true} : vector<1x8x1xf32> -> vector<1x8x1xf32>
    %79 = vector.broadcast %78 : vector<1x8x1xf32> to vector<1x8x8xf32>
    %80 = arith.mulf %75, %79 : vector<1x8x8xf32>
    %81 = arith.truncf %80 : vector<1x8x8xf32> to vector<1x8x8xbf16>
    "tpu.trace_start"() <{level = 10 : i32, message = "bqk,bkd->bqd"}> : () -> ()
    %cst_25 = arith.constant dense<0.000000e+00> : vector<1x8x16xf32>
    %82 = tpu.matmul %81, %67, %cst_25 {dimension_numbers = #tpu.dot_dimension_numbers<[2], [1], [1], [2], [0, 0, 0, 1, 1, 2], [0], [0]>} : vector<1x8x8xbf16>, vector<1x8x16xbf16>, vector<1x8x16xf32> -> vector<1x8x16xf32>
    "tpu.trace_stop"() : () -> ()
    %83 = vector.shape_cast %82 : vector<1x8x16xf32> to vector<8x16xf32>
    %84 = vector.extract_strided_slice %25 {offsets = [0, 96], sizes = [8, 16], strides = [1, 1]} : vector<8x192xf32> to vector<8x16xf32>
    %cst_26 = arith.constant 2.500000e-01 : f32
    %85 = vector.broadcast %cst_26 : f32 to vector<8x16xf32>
    %86 = arith.mulf %84, %85 : vector<8x16xf32>
    %87 = vector.extract_strided_slice %25 {offsets = [0, 128], sizes = [8, 16], strides = [1, 1]} : vector<8x192xf32> to vector<8x16xf32>
    %88 = vector.extract_strided_slice %25 {offsets = [0, 160], sizes = [8, 16], strides = [1, 1]} : vector<8x192xf32> to vector<8x16xf32>
    %89 = vector.shape_cast %86 : vector<8x16xf32> to vector<1x8x16xf32>
    %90 = arith.truncf %89 : vector<1x8x16xf32> to vector<1x8x16xbf16>
    %91 = vector.shape_cast %87 : vector<8x16xf32> to vector<1x8x16xf32>
    %92 = arith.truncf %91 : vector<1x8x16xf32> to vector<1x8x16xbf16>
    %93 = vector.shape_cast %88 : vector<8x16xf32> to vector<1x8x16xf32>
    %94 = arith.truncf %93 : vector<1x8x16xf32> to vector<1x8x16xbf16>
    "tpu.trace_start"() <{level = 10 : i32, message = "bqd,bkd->bqk"}> : () -> ()
    %cst_27 = arith.constant dense<0.000000e+00> : vector<1x8x8xf32>
    %95 = tpu.matmul %90, %92, %cst_27 {dimension_numbers = #tpu.dot_dimension_numbers<[2], [2], [1], [1], [0, 0, 0, 1, 1, 1], [0], [0]>} : vector<1x8x16xbf16>, vector<1x8x16xbf16>, vector<1x8x8xf32> -> vector<1x8x8xf32>
    "tpu.trace_stop"() : () -> ()
    %96 = vector.shape_cast %29 : vector<8x8xf32> to vector<1x8x8xf32>
    %97 = arith.addf %95, %96 : vector<1x8x8xf32>
    %cst_28 = arith.constant dense<0xFF800000> : vector<1x8xf32>
    %98 = vector.multi_reduction <maximumf>, %97, %cst_28 [2] : vector<1x8x8xf32> to vector<1x8xf32>
    %99 = vector.shape_cast %98 : vector<1x8xf32> to vector<1x8x1xf32>
    %100 = vector.broadcast %99 : vector<1x8x1xf32> to vector<1x8x8xf32>
    %101 = arith.subf %97, %100 : vector<1x8x8xf32>
    %102 = math.exp %101 : vector<1x8x8xf32>
    %cst_29 = arith.constant dense<0.000000e+00> : vector<1x8xf32>
    %103 = vector.multi_reduction <add>, %102, %cst_29 [2] : vector<1x8x8xf32> to vector<1x8xf32>
    %104 = vector.shape_cast %103 : vector<1x8xf32> to vector<1x8x1xf32>
    %105 = tpu.reciprocal %104 {approx = true} : vector<1x8x1xf32> -> vector<1x8x1xf32>
    %106 = vector.broadcast %105 : vector<1x8x1xf32> to vector<1x8x8xf32>
    %107 = arith.mulf %102, %106 : vector<1x8x8xf32>
    %108 = arith.truncf %107 : vector<1x8x8xf32> to vector<1x8x8xbf16>
    "tpu.trace_start"() <{level = 10 : i32, message = "bqk,bkd->bqd"}> : () -> ()
    %cst_30 = arith.constant dense<0.000000e+00> : vector<1x8x16xf32>
    %109 = tpu.matmul %108, %94, %cst_30 {dimension_numbers = #tpu.dot_dimension_numbers<[2], [1], [1], [2], [0, 0, 0, 1, 1, 2], [0], [0]>} : vector<1x8x8xbf16>, vector<1x8x16xbf16>, vector<1x8x16xf32> -> vector<1x8x16xf32>
    "tpu.trace_stop"() : () -> ()
    %110 = vector.shape_cast %109 : vector<1x8x16xf32> to vector<8x16xf32>
    %111 = vector.extract_strided_slice %25 {offsets = [0, 112], sizes = [8, 16], strides = [1, 1]} : vector<8x192xf32> to vector<8x16xf32>
    %cst_31 = arith.constant 2.500000e-01 : f32
    %112 = vector.broadcast %cst_31 : f32 to vector<8x16xf32>
    %113 = arith.mulf %111, %112 : vector<8x16xf32>
    %114 = vector.extract_strided_slice %25 {offsets = [0, 144], sizes = [8, 16], strides = [1, 1]} : vector<8x192xf32> to vector<8x16xf32>
    %115 = vector.extract_strided_slice %25 {offsets = [0, 176], sizes = [8, 16], strides = [1, 1]} : vector<8x192xf32> to vector<8x16xf32>
    %116 = vector.shape_cast %113 : vector<8x16xf32> to vector<1x8x16xf32>
    %117 = arith.truncf %116 : vector<1x8x16xf32> to vector<1x8x16xbf16>
    %118 = vector.shape_cast %114 : vector<8x16xf32> to vector<1x8x16xf32>
    %119 = arith.truncf %118 : vector<1x8x16xf32> to vector<1x8x16xbf16>
    %120 = vector.shape_cast %115 : vector<8x16xf32> to vector<1x8x16xf32>
    %121 = arith.truncf %120 : vector<1x8x16xf32> to vector<1x8x16xbf16>
    "tpu.trace_start"() <{level = 10 : i32, message = "bqd,bkd->bqk"}> : () -> ()
    %cst_32 = arith.constant dense<0.000000e+00> : vector<1x8x8xf32>
    %122 = tpu.matmul %117, %119, %cst_32 {dimension_numbers = #tpu.dot_dimension_numbers<[2], [2], [1], [1], [0, 0, 0, 1, 1, 1], [0], [0]>} : vector<1x8x16xbf16>, vector<1x8x16xbf16>, vector<1x8x8xf32> -> vector<1x8x8xf32>
    "tpu.trace_stop"() : () -> ()
    %123 = vector.shape_cast %29 : vector<8x8xf32> to vector<1x8x8xf32>
    %124 = arith.addf %122, %123 : vector<1x8x8xf32>
    %cst_33 = arith.constant dense<0xFF800000> : vector<1x8xf32>
    %125 = vector.multi_reduction <maximumf>, %124, %cst_33 [2] : vector<1x8x8xf32> to vector<1x8xf32>
    %126 = vector.shape_cast %125 : vector<1x8xf32> to vector<1x8x1xf32>
    %127 = vector.broadcast %126 : vector<1x8x1xf32> to vector<1x8x8xf32>
    %128 = arith.subf %124, %127 : vector<1x8x8xf32>
    %129 = math.exp %128 : vector<1x8x8xf32>
    %cst_34 = arith.constant dense<0.000000e+00> : vector<1x8xf32>
    %130 = vector.multi_reduction <add>, %129, %cst_34 [2] : vector<1x8x8xf32> to vector<1x8xf32>
    %131 = vector.shape_cast %130 : vector<1x8xf32> to vector<1x8x1xf32>
    %132 = tpu.reciprocal %131 {approx = true} : vector<1x8x1xf32> -> vector<1x8x1xf32>
    %133 = vector.broadcast %132 : vector<1x8x1xf32> to vector<1x8x8xf32>
    %134 = arith.mulf %129, %133 : vector<1x8x8xf32>
    %135 = arith.truncf %134 : vector<1x8x8xf32> to vector<1x8x8xbf16>
    "tpu.trace_start"() <{level = 10 : i32, message = "bqk,bkd->bqd"}> : () -> ()
    %cst_35 = arith.constant dense<0.000000e+00> : vector<1x8x16xf32>
    %136 = tpu.matmul %135, %121, %cst_35 {dimension_numbers = #tpu.dot_dimension_numbers<[2], [1], [1], [2], [0, 0, 0, 1, 1, 2], [0], [0]>} : vector<1x8x8xbf16>, vector<1x8x16xbf16>, vector<1x8x16xf32> -> vector<1x8x16xf32>
    "tpu.trace_stop"() : () -> ()
    %137 = vector.shape_cast %136 : vector<1x8x16xf32> to vector<8x16xf32>
    %138 = tpu.concatenate %56, %83, %110, %137 in 1 : vector<8x16xf32>, vector<8x16xf32>, vector<8x16xf32>, vector<8x16xf32> -> vector<8x64xf32>
    %139 = arith.truncf %138 : vector<8x64xf32> to vector<8x64xbf16>
    %c0_36 = arith.constant 0 : index
    %c0_37 = arith.constant 0 : index
    %140 = vector.load %arg5[%c0_36, %c0_37] : memref<64x32xbf16, #tpu.memory_space<vmem>>, vector<64x32xbf16>
    %cst_38 = arith.constant dense<0.000000e+00> : vector<8x32xf32>
    %141 = tpu.matmul %139, %140, %cst_38 {dimension_numbers = #tpu.dot_dimension_numbers<[1], [0], [0], [1], [0, 0, 1, 1], [], []>} : vector<8x64xbf16>, vector<64x32xbf16>, vector<8x32xf32> -> vector<8x32xf32>
    %c0_39 = arith.constant 0 : index
    %c0_40 = arith.constant 0 : index
    %142 = vector.load %arg6[%c0_39, %c0_40] : memref<1x32xf32, #tpu.memory_space<vmem>>, vector<1x32xf32>
    %143 = vector.broadcast %142 : vector<1x32xf32> to vector<8x32xf32>
    %144 = arith.addf %141, %143 : vector<8x32xf32>
    %145 = arith.addf %144, %1 : vector<8x32xf32>
    %cst_41 = arith.constant dense<0.000000e+00> : vector<8xf32>
    %146 = vector.multi_reduction <add>, %145, %cst_41 [1] : vector<8x32xf32> to vector<8xf32>
    %147 = vector.shape_cast %146 : vector<8xf32> to vector<8x1xf32>
    %cst_42 = arith.constant 3.200000e+01 : f32
    %148 = vector.broadcast %cst_42 : f32 to vector<8x1xf32>
    %149 = arith.divf %147, %148 : vector<8x1xf32>
    %150 = vector.broadcast %149 : vector<8x1xf32> to vector<8x32xf32>
    %151 = arith.subf %145, %150 : vector<8x32xf32>
    %152 = arith.mulf %151, %151 : vector<8x32xf32>
    %cst_43 = arith.constant dense<0.000000e+00> : vector<8xf32>
    %153 = vector.multi_reduction <add>, %152, %cst_43 [1] : vector<8x32xf32> to vector<8xf32>
    %154 = vector.shape_cast %153 : vector<8xf32> to vector<8x1xf32>
    %cst_44 = arith.constant 3.200000e+01 : f32
    %155 = vector.broadcast %cst_44 : f32 to vector<8x1xf32>
    %156 = arith.divf %154, %155 : vector<8x1xf32>
    %157 = vector.broadcast %149 : vector<8x1xf32> to vector<8x32xf32>
    %158 = arith.subf %145, %157 : vector<8x32xf32>
    %cst_45 = arith.constant 9.99999974E-6 : f32
    %159 = vector.broadcast %cst_45 : f32 to vector<8x1xf32>
    %160 = arith.addf %156, %159 : vector<8x1xf32>
    %161 = math.rsqrt %160 : vector<8x1xf32>
    %162 = vector.broadcast %161 : vector<8x1xf32> to vector<8x32xf32>
    %163 = arith.mulf %158, %162 : vector<8x32xf32>
    %164 = arith.truncf %163 : vector<8x32xf32> to vector<8x32xbf16>
    %c0_46 = arith.constant 0 : index
    %c0_47 = arith.constant 0 : index
    %165 = vector.load %arg7[%c0_46, %c0_47] : memref<32x64xbf16, #tpu.memory_space<vmem>>, vector<32x64xbf16>
    %cst_48 = arith.constant dense<0.000000e+00> : vector<8x64xf32>
    %166 = tpu.matmul %164, %165, %cst_48 {dimension_numbers = #tpu.dot_dimension_numbers<[1], [0], [0], [1], [0, 0, 1, 1], [], []>} : vector<8x32xbf16>, vector<32x64xbf16>, vector<8x64xf32> -> vector<8x64xf32>
    %c0_49 = arith.constant 0 : index
    %c0_50 = arith.constant 0 : index
    %167 = vector.load %arg8[%c0_49, %c0_50] : memref<1x64xf32, #tpu.memory_space<vmem>>, vector<1x64xf32>
    %168 = vector.broadcast %167 : vector<1x64xf32> to vector<8x64xf32>
    %169 = arith.addf %166, %168 : vector<8x64xf32>
    %cst_51 = arith.constant 5.000000e-01 : f32
    %170 = vector.broadcast %cst_51 : f32 to vector<8x64xf32>
    %171 = arith.mulf %170, %169 : vector<8x64xf32>
    %cst_52 = arith.constant 0.707106769 : f32
    %172 = vector.broadcast %cst_52 : f32 to vector<8x64xf32>
    %173 = arith.mulf %169, %172 : vector<8x64xf32>
    %cst_53 = arith.constant 0.000000e+00 : f32
    %174 = vector.broadcast %cst_53 : f32 to vector<8x64xf32>
    %175 = arith.cmpf oge, %173, %174 : vector<8x64xf32>
    %cst_54 = arith.constant 1.000000e+00 : f32
    %cst_55 = arith.constant -1.000000e+00 : f32
    %176 = vector.broadcast %cst_54 : f32 to vector<8x64xf32>
    %177 = vector.broadcast %cst_55 : f32 to vector<8x64xf32>
    %178 = arith.select %175, %176, %177 : vector<8x64xi1>, vector<8x64xf32>
    %179 = math.absf %173 : vector<8x64xf32>
    %cst_56 = arith.constant 0.327591091 : f32
    %180 = vector.broadcast %cst_56 : f32 to vector<8x64xf32>
    %181 = arith.mulf %180, %179 : vector<8x64xf32>
    %cst_57 = arith.constant 1.000000e+00 : f32
    %182 = vector.broadcast %cst_57 : f32 to vector<8x64xf32>
    %183 = arith.addf %182, %181 : vector<8x64xf32>
    %cst_58 = arith.constant 1.000000e+00 : f32
    %184 = vector.broadcast %cst_58 : f32 to vector<8x64xf32>
    %185 = arith.divf %184, %183 : vector<8x64xf32>
    %cst_59 = arith.constant 1.06140542 : f32
    %186 = vector.broadcast %cst_59 : f32 to vector<8x64xf32>
    %187 = arith.mulf %185, %186 : vector<8x64xf32>
    %cst_60 = arith.constant -1.45315206 : f32
    %188 = vector.broadcast %cst_60 : f32 to vector<8x64xf32>
    %189 = arith.addf %188, %187 : vector<8x64xf32>
    %190 = arith.mulf %185, %189 : vector<8x64xf32>
    %cst_61 = arith.constant 1.42141378 : f32
    %191 = vector.broadcast %cst_61 : f32 to vector<8x64xf32>
    %192 = arith.addf %191, %190 : vector<8x64xf32>
    %193 = arith.mulf %185, %192 : vector<8x64xf32>
    %cst_62 = arith.constant -0.284496725 : f32
    %194 = vector.broadcast %cst_62 : f32 to vector<8x64xf32>
    %195 = arith.addf %194, %193 : vector<8x64xf32>
    %196 = arith.mulf %185, %195 : vector<8x64xf32>
    %cst_63 = arith.constant 0.254829586 : f32
    %197 = vector.broadcast %cst_63 : f32 to vector<8x64xf32>
    %198 = arith.addf %197, %196 : vector<8x64xf32>
    %199 = arith.mulf %185, %198 : vector<8x64xf32>
    %cst_64 = arith.constant 0.000000e+00 : f32
    %200 = vector.broadcast %cst_64 : f32 to vector<8x64xf32>
    %201 = arith.subf %200, %179 : vector<8x64xf32>
    %202 = arith.mulf %201, %179 : vector<8x64xf32>
    %203 = math.exp %202 : vector<8x64xf32>
    %204 = arith.mulf %199, %203 : vector<8x64xf32>
    %cst_65 = arith.constant 1.000000e+00 : f32
    %205 = vector.broadcast %cst_65 : f32 to vector<8x64xf32>
    %206 = arith.subf %205, %204 : vector<8x64xf32>
    %207 = arith.mulf %178, %206 : vector<8x64xf32>
    %cst_66 = arith.constant 1.000000e+00 : f32
    %208 = vector.broadcast %cst_66 : f32 to vector<8x64xf32>
    %209 = arith.addf %208, %207 : vector<8x64xf32>
    %210 = arith.mulf %171, %209 : vector<8x64xf32>
    %211 = arith.truncf %210 : vector<8x64xf32> to vector<8x64xbf16>
    %c0_67 = arith.constant 0 : index
    %c0_68 = arith.constant 0 : index
    %212 = vector.load %arg9[%c0_67, %c0_68] : memref<64x32xbf16, #tpu.memory_space<vmem>>, vector<64x32xbf16>
    %cst_69 = arith.constant dense<0.000000e+00> : vector<8x32xf32>
    %213 = tpu.matmul %211, %212, %cst_69 {dimension_numbers = #tpu.dot_dimension_numbers<[1], [0], [0], [1], [0, 0, 1, 1], [], []>} : vector<8x64xbf16>, vector<64x32xbf16>, vector<8x32xf32> -> vector<8x32xf32>
    %c0_70 = arith.constant 0 : index
    %c0_71 = arith.constant 0 : index
    %214 = vector.load %arg10[%c0_70, %c0_71] : memref<1x32xf32, #tpu.memory_space<vmem>>, vector<1x32xf32>
    %215 = vector.broadcast %214 : vector<1x32xf32> to vector<8x32xf32>
    %216 = arith.addf %213, %215 : vector<8x32xf32>
    %217 = arith.addf %216, %145 : vector<8x32xf32>
    %218 = vector.shape_cast %217 : vector<8x32xf32> to vector<1x8x32xf32>
    %c0_72 = arith.constant 0 : index
    %c0_73 = arith.constant 0 : index
    %c0_74 = arith.constant 0 : index
    %219 = vector.load %arg11[%c0_72, %c0_73, %c0_74] : memref<1x8x32xf32, #tpu.memory_space<vmem>>, vector<1x8x32xf32>
    tpu.vector_store %arg11[%c0_72, %c0_73, %c0_74], %218 {strides = array<i32>} : memref<1x8x32xf32, #tpu.memory_space<vmem>>, vector<1x8x32xf32>,
    return
  }
  func.func @transform_0(%arg0: i32) -> (i32, i32, i32) {
    %c0_i32 = arith.constant 0 : i32
    %c0_i32_0 = arith.constant 0 : i32
    %c0_i32_1 = arith.constant 0 : i32
    return %arg0, %c0_i32, %c0_i32_0 : i32, i32, i32
  }
  func.func @transform_1(%arg0: i32) -> (i32, i32, i32) {
    %c0_i32 = arith.constant 0 : i32
    %c0_i32_0 = arith.constant 0 : i32
    %c0_i32_1 = arith.constant 0 : i32
    %c0_i32_2 = arith.constant 0 : i32
    return %c0_i32, %c0_i32_0, %c0_i32_1 : i32, i32, i32
  }
  func.func @transform_2(%arg0: i32) -> (i32, i32) {
    %c0_i32 = arith.constant 0 : i32
    %c0_i32_0 = arith.constant 0 : i32
    %c0_i32_1 = arith.constant 0 : i32
    return %c0_i32, %c0_i32_0 : i32, i32
  }
  func.func @transform_3(%arg0: i32) -> (i32, i32) {
    %c0_i32 = arith.constant 0 : i32
    %c0_i32_0 = arith.constant 0 : i32
    %c0_i32_1 = arith.constant 0 : i32
    return %c0_i32, %c0_i32_0 : i32, i32
  }
  func.func @transform_4(%arg0: i32) -> (i32, i32) {
    %c0_i32 = arith.constant 0 : i32
    %c0_i32_0 = arith.constant 0 : i32
    %c0_i32_1 = arith.constant 0 : i32
    return %c0_i32, %c0_i32_0 : i32, i32
  }
  func.func @transform_5(%arg0: i32) -> (i32, i32) {
    %c0_i32 = arith.constant 0 : i32
    %c0_i32_0 = arith.constant 0 : i32
    %c0_i32_1 = arith.constant 0 : i32
    return %c0_i32, %c0_i32_0 : i32, i32
  }
  func.func @transform_6(%arg0: i32) -> (i32, i32) {
    %c0_i32 = arith.constant 0 : i32
    %c0_i32_0 = arith.constant 0 : i32
    %c0_i32_1 = arith.constant 0 : i32
    return %c0_i32, %c0_i32_0 : i32, i32
  }
  func.func @transform_7(%arg0: i32) -> (i32, i32) {
    %c0_i32 = arith.constant 0 : i32
    %c0_i32_0 = arith.constant 0 : i32
    %c0_i32_1 = arith.constant 0 : i32
    return %c0_i32, %c0_i32_0 : i32, i32
  }
  func.func @transform_8(%arg0: i32) -> (i32, i32) {
    %c0_i32 = arith.constant 0 : i32
    %c0_i32_0 = arith.constant 0 : i32
    %c0_i32_1 = arith.constant 0 : i32
    return %c0_i32, %c0_i32_0 : i32, i32
  }
  func.func @transform_9(%arg0: i32) -> (i32, i32) {
    %c0_i32 = arith.constant 0 : i32
    %c0_i32_0 = arith.constant 0 : i32
    %c0_i32_1 = arith.constant 0 : i32
    return %c0_i32, %c0_i32_0 : i32, i32
  }
  func.func @transform_10(%arg0: i32) -> (i32, i32, i32) {
    %c0_i32 = arith.constant 0 : i32
    %c0_i32_0 = arith.constant 0 : i32
    %c0_i32_1 = arith.constant 0 : i32
    return %arg0, %c0_i32, %c0_i32_0 : i32, i32, i32
  }
}

</mosaic_0001>

<llo_original>
// kernel: tpu_custom_call.1
$region0: #{tpu_custom_call.1}
  #allocation0 [shape = 'u32[]', space=smem, size = 0x4, offset = 0x4, fixed_abs, tag = 'smem constant byte address 0x4 - core index']
  #allocation1 [shape = 'u32[144,128]{1,0:T(1,128)}', space=vmem, size = 0x12000, scoped, tag = 'internal scratch']
  %s0 = inlined_call_operand.vmem [shape: f32[2,8,32], index: 0, kind: input, shape index: {}]
  %s1 = inlined_call_operand.vmem [shape: f32[2,8,8], index: 1, kind: input, shape index: {}]
  %s2 = inlined_call_operand.vmem [shape: bf16[32,192], index: 2, kind: input, shape index: {}]
  %s3 = inlined_call_operand.vmem [shape: f32[1,192], index: 3, kind: input, shape index: {}]
  %s4 = inlined_call_operand.vmem [shape: bf16[64,32], index: 4, kind: input, shape index: {}]
  %s5 = inlined_call_operand.vmem [shape: f32[1,32], index: 5, kind: input, shape index: {}]
  %s6 = inlined_call_operand.vmem [shape: bf16[32,64], index: 6, kind: input, shape index: {}]
  %s7 = inlined_call_operand.vmem [shape: f32[1,64], index: 7, kind: input, shape index: {}]
  %s8 = inlined_call_operand.vmem [shape: bf16[64,32], index: 8, kind: input, shape index: {}]
  %s9 = inlined_call_operand.vmem [shape: f32[1,32], index: 9, kind: input, shape index: {}]
  %s10 = inlined_call_operand.hbm [shape: f32[2,8,32], index: 10, kind: output, shape index: {}]
  %s11 = sld [smem:[#allocation0]]
  $region73: #{tpu_custom_call.1} parent=0
    _
  %s13 = ssub.s32 1, %s11
  %s14 = scalar_select 0, %s13, %s11
  $region1: #{tpu_custom_call.1} parent=0
    #allocation2 [shape = 'u8[8192]{0}', space=vmem, size = 0x2000, scoped, tag = 'output window, operand 0']
    #allocation3 [shape = 's32[2]{0}', space=sflag, size = 0x8, scoped, tag = 'scoped memory for tpu_custom_call.1']
    %15 = vsyncpa [#allocation3], 0
    %s16 = scalar_lea.sflag [#allocation3], 1
    %17 = vsyncpa %s16, 0
    loop: start=0, step=1, limit=4
    $region2: #{tpu_custom_call.1} parent=1 // loop_pre_header
      _
    $region3: #{tpu_custom_call.1} parent=1 // loop_header
      %s19 = sphi 0, %s23
      %p20 = scmp.ge.s32.totalorder %s19, 4
      %s29 = sphi 0, %s31
      %s32 = sphi 0, %s29
      %s33 = sphi 0, %s32
      %s49 = sphi 0, %s33
      %s53 = sphi 0, %s53
      %s55 = sphi 0, %s53
      %s56 = sphi 0, %s55
      %s70 = sphi 0, %s56
      %s74 = sphi 0, %s74
      %s76 = sphi 0, %s74
      %s77 = sphi 0, %s76
      %s91 = sphi 0, %s77
      %s95 = sphi 0, %s95
      %s97 = sphi 0, %s95
      %s98 = sphi 0, %s97
      %s112 = sphi 0, %s98
      %s116 = sphi 0, %s116
      %s118 = sphi 0, %s116
      %s119 = sphi 0, %s118
      %s133 = sphi 0, %s119
      %s137 = sphi 0, %s137
      %s139 = sphi 0, %s137
      %s140 = sphi 0, %s139
      %s154 = sphi 0, %s140
      %s158 = sphi 0, %s158
      %s160 = sphi 0, %s158
      %s161 = sphi 0, %s160
      %s175 = sphi 0, %s161
      %s179 = sphi 0, %s179
      %s181 = sphi 0, %s179
      %s182 = sphi 0, %s181
      %s196 = sphi 0, %s182
      %s200 = sphi 0, %s200
      %s202 = sphi 0, %s200
      %s203 = sphi 0, %s202
      %s217 = sphi 0, %s203
      %s221 = sphi 0, %s221
      %s223 = sphi 0, %s221
      %s224 = sphi 0, %s223
      %s238 = sphi 0, %s224
      %s244 = sphi 0, %s246
      %s247 = sphi 0, %s244
      %s248 = sphi 0, %s247
      %s264 = sphi 0, %s248
    $region4: #{tpu_custom_call.1} parent=1 // loop_header_branch
      %22 = sbr.rel (%p20) target = $region8
    $region5: #{tpu_custom_call.1} parent=1 // loop_body
      %s24 = ssub.s32 %s19, 1
      %s25 = ssub.s32 %s19, 2
      %s26 = sadd.s32 %s19, 1
      %s27 = ssub.s32 %s19, %s26
      %p28 = scmp.eq.s32.totalorder %s27, 0
      %s30 = sadd.s32 %s29, 1
      %s31 = scalar_select %p28, %s29, %s30
      %p34 = pneg %p28
      %p35 = scmp.eq.s32.totalorder %s19, 1
      %p36 = por %p34, %p35
      %p37 = scmp.ne.s32.totalorder %s29, %s32
      %p38 = scmp.eq.s32.totalorder %s19, 0
      %p39 = por %p37, %p38
      %p40 = scmp.ne.s32.totalorder %s29, %s32
      %p41 = scmp.eq.s32.totalorder %s24, 1
      %p42 = por %p40, %p41
      %p43 = scmp.ne.s32.totalorder %s32, %s33
      %p44 = scmp.eq.s32.totalorder %s24, 0
      %p45 = por %p43, %p44
      %p46 = scmp.ne.s32.totalorder %s32, %s33
      %p47 = scmp.eq.s32.totalorder %s25, 1
      %p48 = por %p46, %p47
      %p50 = scmp.ne.s32.totalorder %s33, %s49
      %p51 = scmp.eq.s32.totalorder %s25, 0
      %p52 = por %p50, %p51
      %s54 = sadd.s32 %s53, 1
      %p57 = scmp.eq.s32.totalorder %s19, 1
      %p58 = scmp.ne.s32.totalorder %s53, %s55
      %p59 = scmp.eq.s32.totalorder %s19, 0
      %p60 = por %p58, %p59
      %p61 = scmp.ne.s32.totalorder %s53, %s55
      %p62 = scmp.eq.s32.totalorder %s24, 1
      %p63 = por %p61, %p62
      %p64 = scmp.ne.s32.totalorder %s55, %s56
      %p65 = scmp.eq.s32.totalorder %s24, 0
      %p66 = por %p64, %p65
      %p67 = scmp.ne.s32.totalorder %s55, %s56
      %p68 = scmp.eq.s32.totalorder %s25, 1
      %p69 = por %p67, %p68
      %p71 = scmp.ne.s32.totalorder %s56, %s70
      %p72 = scmp.eq.s32.totalorder %s25, 0
      %p73 = por %p71, %p72
      %s75 = sadd.s32 %s74, 1
      %p78 = scmp.eq.s32.totalorder %s19, 1
      %p79 = scmp.ne.s32.totalorder %s74, %s76
      %p80 = scmp.eq.s32.totalorder %s19, 0
      %p81 = por %p79, %p80
      %p82 = scmp.ne.s32.totalorder %s74, %s76
      %p83 = scmp.eq.s32.totalorder %s24, 1
      %p84 = por %p82, %p83
      %p85 = scmp.ne.s32.totalorder %s76, %s77
      %p86 = scmp.eq.s32.totalorder %s24, 0
      %p87 = por %p85, %p86
      %p88 = scmp.ne.s32.totalorder %s76, %s77
      %p89 = scmp.eq.s32.totalorder %s25, 1
      %p90 = por %p88, %p89
      %p92 = scmp.ne.s32.totalorder %s77, %s91
      %p93 = scmp.eq.s32.totalorder %s25, 0
      %p94 = por %p92, %p93
      %s96 = sadd.s32 %s95, 1
      %p99 = scmp.eq.s32.totalorder %s19, 1
      %p100 = scmp.ne.s32.totalorder %s95, %s97
      %p101 = scmp.eq.s32.totalorder %s19, 0
      %p102 = por %p100, %p101
      %p103 = scmp.ne.s32.totalorder %s95, %s97
      %p104 = scmp.eq.s32.totalorder %s24, 1
      %p105 = por %p103, %p104
      %p106 = scmp.ne.s32.totalorder %s97, %s98
      %p107 = scmp.eq.s32.totalorder %s24, 0
      %p108 = por %p106, %p107
      %p109 = scmp.ne.s32.totalorder %s97, %s98
      %p110 = scmp.eq.s32.totalorder %s25, 1
      %p111 = por %p109, %p110
      %p113 = scmp.ne.s32.totalorder %s98, %s112
      %p114 = scmp.eq.s32.totalorder %s25, 0
      %p115 = por %p113, %p114
      %s117 = sadd.s32 %s116, 1
      %p120 = scmp.eq.s32.totalorder %s19, 1
      %p121 = scmp.ne.s32.totalorder %s116, %s118
      %p122 = scmp.eq.s32.totalorder %s19, 0
      %p123 = por %p121, %p122
      %p124 = scmp.ne.s32.totalorder %s116, %s118
      %p125 = scmp.eq.s32.totalorder %s24, 1
      %p126 = por %p124, %p125
      %p127 = scmp.ne.s32.totalorder %s118, %s119
      %p128 = scmp.eq.s32.totalorder %s24, 0
      %p129 = por %p127, %p128
      %p130 = scmp.ne.s32.totalorder %s118, %s119
      %p131 = scmp.eq.s32.totalorder %s25, 1
      %p132 = por %p130, %p131
      %p134 = scmp.ne.s32.totalorder %s119, %s133
      %p135 = scmp.eq.s32.totalorder %s25, 0
      %p136 = por %p134, %p135
      %s138 = sadd.s32 %s137, 1
      %p141 = scmp.eq.s32.totalorder %s19, 1
      %p142 = scmp.ne.s32.totalorder %s137, %s139
      %p143 = scmp.eq.s32.totalorder %s19, 0
      %p144 = por %p142, %p143
      %p145 = scmp.ne.s32.totalorder %s137, %s139
      %p146 = scmp.eq.s32.totalorder %s24, 1
      %p147 = por %p145, %p146
      %p148 = scmp.ne.s32.totalorder %s139, %s140
      %p149 = scmp.eq.s32.totalorder %s24, 0
      %p150 = por %p148, %p149
      %p151 = scmp.ne.s32.totalorder %s139, %s140
      %p152 = scmp.eq.s32.totalorder %s25, 1
      %p153 = por %p151, %p152
      %p155 = scmp.ne.s32.totalorder %s140, %s154
      %p156 = scmp.eq.s32.totalorder %s25, 0
      %p157 = por %p155, %p156
      %s159 = sadd.s32 %s158, 1
      %p162 = scmp.eq.s32.totalorder %s19, 1
      %p163 = scmp.ne.s32.totalorder %s158, %s160
      %p164 = scmp.eq.s32.totalorder %s19, 0
      %p165 = por %p163, %p164
      %p166 = scmp.ne.s32.totalorder %s158, %s160
      %p167 = scmp.eq.s32.totalorder %s24, 1
      %p168 = por %p166, %p167
      %p169 = scmp.ne.s32.totalorder %s160, %s161
      %p170 = scmp.eq.s32.totalorder %s24, 0
      %p171 = por %p169, %p170
      %p172 = scmp.ne.s32.totalorder %s160, %s161
      %p173 = scmp.eq.s32.totalorder %s25, 1
      %p174 = por %p172, %p173
      %p176 = scmp.ne.s32.totalorder %s161, %s175
      %p177 = scmp.eq.s32.totalorder %s25, 0
      %p178 = por %p176, %p177
      %s180 = sadd.s32 %s179, 1
      %p183 = scmp.eq.s32.totalorder %s19, 1
      %p184 = scmp.ne.s32.totalorder %s179, %s181
      %p185 = scmp.eq.s32.totalorder %s19, 0
      %p186 = por %p184, %p185
      %p187 = scmp.ne.s32.totalorder %s179, %s181
      %p188 = scmp.eq.s32.totalorder %s24, 1
      %p189 = por %p187, %p188
      %p190 = scmp.ne.s32.totalorder %s181, %s182
      %p191 = scmp.eq.s32.totalorder %s24, 0
      %p192 = por %p190, %p191
      %p193 = scmp.ne.s32.totalorder %s181, %s182
      %p194 = scmp.eq.s32.totalorder %s25, 1
      %p195 = por %p193, %p194
      %p197 = scmp.ne.s32.totalorder %s182, %s196
      %p198 = scmp.eq.s32.totalorder %s25, 0
      %p199 = por %p197, %p198
      %s201 = sadd.s32 %s200, 1
      %p204 = scmp.eq.s32.totalorder %s19, 1
      %p205 = scmp.ne.s32.totalorder %s200, %s202
      %p206 = scmp.eq.s32.totalorder %s19, 0
      %p207 = por %p205, %p206
      %p208 = scmp.ne.s32.totalorder %s200, %s202
      %p209 = scmp.eq.s32.totalorder %s24, 1
      %p210 = por %p208, %p209
      %p211 = scmp.ne.s32.totalorder %s202, %s203
      %p212 = scmp.eq.s32.totalorder %s24, 0
      %p213 = por %p211, %p212
      %p214 = scmp.ne.s32.totalorder %s202, %s203
      %p215 = scmp.eq.s32.totalorder %s25, 1
      %p216 = por %p214, %p215
      %p218 = scmp.ne.s32.totalorder %s203, %s217
      %p219 = scmp.eq.s32.totalorder %s25, 0
      %p220 = por %p218, %p219
      %s222 = sadd.s32 %s221, 1
      %p225 = scmp.eq.s32.totalorder %s19, 1
      %p226 = scmp.ne.s32.totalorder %s221, %s223
      %p227 = scmp.eq.s32.totalorder %s19, 0
      %p228 = por %p226, %p227
      %p229 = scmp.ne.s32.totalorder %s221, %s223
      %p230 = scmp.eq.s32.totalorder %s24, 1
      %p231 = por %p229, %p230
      %p232 = scmp.ne.s32.totalorder %s223, %s224
      %p233 = scmp.eq.s32.totalorder %s24, 0
      %p234 = por %p232, %p233
      %p235 = scmp.ne.s32.totalorder %s223, %s224
      %p236 = scmp.eq.s32.totalorder %s25, 1
      %p237 = por %p235, %p236
      %p239 = scmp.ne.s32.totalorder %s224, %s238
      %p240 = scmp.eq.s32.totalorder %s25, 0
      %p241 = por %p239, %p240
      %s242 = ssub.s32 %s19, %s26
      %p243 = scmp.eq.s32.totalorder %s242, 0
      %s245 = sadd.s32 %s244, 1
      %s246 = scalar_select %p243, %s244, %s245
      %p249 = pneg %p243
      %p250 = scmp.eq.s32.totalorder %s19, 1
      %p251 = por %p249, %p250
      %p252 = scmp.ne.s32.totalorder %s244, %s247
      %p253 = scmp.eq.s32.totalorder %s19, 0
      %p254 = por %p252, %p253
      %p255 = scmp.ne.s32.totalorder %s244, %s247
      %p256 = scmp.eq.s32.totalorder %s24, 1
      %p257 = por %p255, %p256
      %p258 = scmp.ne.s32.totalorder %s247, %s248
      %p259 = scmp.eq.s32.totalorder %s24, 0
      %p260 = por %p258, %p259
      %p261 = scmp.ne.s32.totalorder %s247, %s248
      %p262 = scmp.eq.s32.totalorder %s25, 1
      %p263 = por %p261, %p262
      %p265 = scmp.ne.s32.totalorder %s248, %s264
      %p266 = scmp.eq.s32.totalorder %s25, 0
      %p267 = por %p265, %p266
      %p268 = scmp.le.s32.totalorder 1, %s19
      %p269 = scmp.lt.s32.totalorder %s19, 3
      %p270 = pnand %p268, %p269
      %p271 = pneg %p270
      // Predicated region
      $region9: #{tpu_custom_call.1} parent=5 // pred_check
        _
      $region10: #{tpu_custom_call.1} parent=5 // pred_check_branch
        %273 = sbr.rel (%p270) target = $region12
      $region11: #{tpu_custom_call.1} parent=5 // pred_region
        %s274 = ssub.s32 %s19, 1
        // Predicated region
        $region13: #{tpu_custom_call.1} parent=11 // pred_check
          %p275 = pneg %p66
        $region14: #{tpu_custom_call.1} parent=11 // pred_check_branch
          %277 = sbr.rel (%p275) target = $region16
        $region15: #{tpu_custom_call.1} parent=11 // pred_region
          _
        $region16: #{tpu_custom_call.1} parent=11 // pred_fallthru
          _
        // Predicated region
        $region17: #{tpu_custom_call.1} parent=11 // pred_check
          %p278 = pneg %p87
        $region18: #{tpu_custom_call.1} parent=11 // pred_check_branch
          %280 = sbr.rel (%p278) target = $region20
        $region19: #{tpu_custom_call.1} parent=11 // pred_region
          _
        $region20: #{tpu_custom_call.1} parent=11 // pred_fallthru
          _
        // Predicated region
        $region21: #{tpu_custom_call.1} parent=11 // pred_check
          %p281 = pneg %p108
        $region22: #{tpu_custom_call.1} parent=11 // pred_check_branch
          %283 = sbr.rel (%p281) target = $region24
        $region23: #{tpu_custom_call.1} parent=11 // pred_region
          _
        $region24: #{tpu_custom_call.1} parent=11 // pred_fallthru
          _
        // Predicated region
        $region25: #{tpu_custom_call.1} parent=11 // pred_check
          %p284 = pneg %p129
        $region26: #{tpu_custom_call.1} parent=11 // pred_check_branch
          %286 = sbr.rel (%p284) target = $region28
        $region27: #{tpu_custom_call.1} parent=11 // pred_region
          _
        $region28: #{tpu_custom_call.1} parent=11 // pred_fallthru
          _
        // Predicated region
        $region29: #{tpu_custom_call.1} parent=11 // pred_check
          %p287 = pneg %p150
        $region30: #{tpu_custom_call.1} parent=11 // pred_check_branch
          %289 = sbr.rel (%p287) target = $region32
        $region31: #{tpu_custom_call.1} parent=11 // pred_region
          _
        $region32: #{tpu_custom_call.1} parent=11 // pred_fallthru
          _
        // Predicated region
        $region33: #{tpu_custom_call.1} parent=11 // pred_check
          %p290 = pneg %p171
        $region34: #{tpu_custom_call.1} parent=11 // pred_check_branch
          %292 = sbr.rel (%p290) target = $region36
        $region35: #{tpu_custom_call.1} parent=11 // pred_region
          _
        $region36: #{tpu_custom_call.1} parent=11 // pred_fallthru
          _
        // Predicated region
        $region37: #{tpu_custom_call.1} parent=11 // pred_check
          %p293 = pneg %p192
        $region38: #{tpu_custom_call.1} parent=11 // pred_check_branch
          %295 = sbr.rel (%p293) target = $region40
        $region39: #{tpu_custom_call.1} parent=11 // pred_region
          _
        $region40: #{tpu_custom_call.1} parent=11 // pred_fallthru
          _
        // Predicated region
        $region41: #{tpu_custom_call.1} parent=11 // pred_check
          %p296 = pneg %p213
        $region42: #{tpu_custom_call.1} parent=11 // pred_check_branch
          %298 = sbr.rel (%p296) target = $region44
        $region43: #{tpu_custom_call.1} parent=11 // pred_region
          _
        $region44: #{tpu_custom_call.1} parent=11 // pred_fallthru
          _
        // Predicated region
        $region45: #{tpu_custom_call.1} parent=11 // pred_check
          %p299 = pneg %p234
        $region46: #{tpu_custom_call.1} parent=11 // pred_check_branch
          %301 = sbr.rel (%p299) target = $region48
        $region47: #{tpu_custom_call.1} parent=11 // pred_region
          _
        $region48: #{tpu_custom_call.1} parent=11 // pred_fallthru
          _
      $region12: #{tpu_custom_call.1} parent=5 // pred_fallthru
        _
      %p302 = scmp.lt.s32.totalorder %s19, 2
      // Predicated region
      $region49: #{tpu_custom_call.1} parent=5 // pred_check
        %p303 = pneg %p302
      $region50: #{tpu_custom_call.1} parent=5 // pred_check_branch
        %305 = sbr.rel (%p303) target = $region52
      $region51: #{tpu_custom_call.1} parent=5 // pred_region
        // Predicated region
        $region53: #{tpu_custom_call.1} parent=51 // pred_check
          %p306 = pneg %p39
        $region54: #{tpu_custom_call.1} parent=51 // pred_check_branch
          %308 = sbr.rel (%p306) target = $region56
        $region55: #{tpu_custom_call.1} parent=51 // pred_region
          %p309 = scmp.lt.s32.totalorder %s19, 1
          %s310 = scalar_select %p309, %s19, 1
          %s311 = smul.addr %s310, 8
          %s312 = scalar_lea.vmem %s0, %s311
        $region56: #{tpu_custom_call.1} parent=51 // pred_fallthru
          _
      $region52: #{tpu_custom_call.1} parent=5 // pred_fallthru
        _
      %p313 = scmp.le.s32.totalorder 1, %s19
      %p314 = scmp.lt.s32.totalorder %s19, 3
      %p315 = pnand %p313, %p314
      %p316 = pneg %p315
      // Predicated region
      $region57: #{tpu_custom_call.1} parent=5 // pred_check
        _
      $region58: #{tpu_custom_call.1} parent=5 // pred_check_branch
        %318 = sbr.rel (%p315) target = $region60
      $region59: #{tpu_custom_call.1} parent=5 // pred_region
        %s319 = ssub.s32 %s19, 1
        %p320 = scmp.lt.s32.totalorder %s24, 1
        %s321 = scalar_select %p320, %s24, 1
        %s322 = smul.addr %s321, 8
        %s323 = scalar_lea.vmem %s0, %s322
        %p324 = pneg %p45
        %p325 = pneg %p42
        %p326 = pneg %p66
        %p327 = pneg %p63
        %p328 = pneg %p87
        %p329 = pneg %p84
        %p330 = pneg %p108
        %p331 = pneg %p105
        %p332 = pneg %p129
        %p333 = pneg %p126
        %p334 = pneg %p150
        %p335 = pneg %p147
        %p336 = pneg %p171
        %p337 = pneg %p168
        %p338 = pneg %p192
        %p339 = pneg %p189
        %p340 = pneg %p213
        %p341 = pneg %p210
        %p342 = pneg %p234
        %p343 = pneg %p231
        %p344 = pneg %p260
        %p345 = pneg %p257
        %s346 = sand.u32 %s247, 1
        %s347 = scalar_lea.sflag [#allocation3], %s346
        %s348 = sand.u32 %s247, 1
        %s349 = smul.addr %s348, 8
        %s350 = scalar_lea.vmem [#allocation2], %s349
        %p351 = scmp.lt.s32.totalorder %s24, 1
        %s352 = scalar_select %p351, %s24, 1
        %s353 = smul.addr %s352, 8
        %s354 = scalar_lea.vmem %s0, %s353
        %v356 = vld [vmem:[%s354] sm:$0xff]
        %vm357 = vcmask 261120
        %v358 = vsel %vm357, %v356, 0.0
        %359 = vadd.xlane.f32.xlu0 %v358
        %v360 = vpop.xlane.xlu0 %359
        %v361 = vrcp.pop 32.0
        %v362 = vmul.f32 %v360, %v361
        %v363 = vsub.f32 %v356, %v362
        %v364 = vmul.f32 %v363, %v363
        %v365 = vsel %vm357, %v364, 0.0
        %366 = vadd.xlane.f32.xlu0 %v365
        %v367 = vpop.xlane.xlu0 %366
        %v368 = vmul.f32 %v367, %v361
        %v369 = vadd.f32 %v368, 1e-05
        %v370 = vrsqrt.pop %v369
        %v371 = vmul.f32 %v363, %v370
        %v372 = vpack.c.bf16 %v371, %v371
        %v373 = vld [vmem:[%s2] sm:$0xff]
        %v374 = vld [vmem:[%s2 + $0x8] sm:$0xff]
        %v375 = vld [vmem:[%s2 + $0x10] sm:$0xff]
        %v376 = vld [vmem:[%s2 + $0x18] sm:$0xff]
        %v377 = vld [vmem:[%s3] sm:$0x3]
        %v379 = vlaneseq
        %v380 = vshrl.u32 %v379, 7
        %v381 = vsub.s32 0, %v380
        %v382 = vrot.slane %v377, %v381
        %v383 = vlaneseq
        %v384 = vshrl.u32 %v383, 7
        %v385 = vsub.s32 1, %v384
        %v386 = vrot.slane %v377, %v385
        %v393 = vunpack.c.l.b16 %v373
        %v394 = vunpack.c.h.b16 %v373
        %v395 = vunpack.c.l.b16 %v374
        %v396 = vunpack.c.h.b16 %v374
        %v397 = vunpack.c.l.b16 %v375
        %v398 = vunpack.c.h.b16 %v375
        %v399 = vunpack.c.l.b16 %v376
        %v400 = vunpack.c.h.b16 %v376
        %v401 = vpack.c.b16 %v395, %v393
        %v402 = vpack.c.b16 %v396, %v394
        %v403 = vpack.c.b16 %v399, %v397
        %v404 = vpack.c.b16 %v400, %v398
        %v410 = vsel %vm357, %v372, 0
        %412 = vmatprep.subr.bf16.mxu0 0
        %413 = vmatpush1.bf16.msra.mxu0 0
        %414 = vmatprep.subr.bf16.mxu0 0
        %415 = vmatpush1.bf16.msra.mxu0 0
        %416 = vmatprep.subr.bf16.mxu0 0
        %417 = vmatpush1.bf16.msra.mxu0 0
        %418 = vmatprep.subr.bf16.mxu0 0
        %419 = vmatpush1.bf16.msra.mxu0 0
        %420 = vmatprep.subr.bf16.mxu0 0
        %421 = vmatpush1.bf16.msra.mxu0 0
        %422 = vmatprep.subr.bf16.mxu0 0
        %423 = vmatpush1.bf16.msra.mxu0 0
        %424 = vmatprep.subr.bf16.mxu0 %v404
        %425 = vmatpush1.bf16.msra.mxu0 %v403
        %426 = vmatprep.subr.bf16.mxu0 %v402
        %427 = vmatpush1.bf16.msra.mxu0 %v401
        %428 = vmatprep.subr.bf16.mxu0 0
        %429 = vmatpush2.bf16.msra.mxu0 0
        %430 = vmatprep.subr.bf16.mxu0 0
        %431 = vmatpush2.bf16.msra.mxu0 0
        %432 = vmatprep.subr.bf16.mxu0 0
        %433 = vmatpush2.bf16.msra.mxu0 0
        %434 = vmatprep.subr.bf16.mxu0 0
        %435 = vmatpush2.bf16.msra.mxu0 0
        %436 = vmatprep.subr.bf16.mxu0 0
        %437 = vmatpush2.bf16.msra.mxu0 0
        %438 = vmatprep.subr.bf16.mxu0 0
        %439 = vmatpush2.bf16.msra.mxu0 0
        %440 = vmatprep.subr.bf16.mxu0 0
        %441 = vmatpush2.bf16.msra.mxu0 0
        %442 = vmatprep.subr.bf16.mxu0 0
        %443 = vmatpush2.bf16.msra.mxu0 0
        %444 = vmatprep.mubr.bf16.mxu0 0
        %445 = vmatmul.mubr.bf16.gmra.mxu0 %v410
        %v446 = vpop.f32.mrf.mxu0
        %v447 = vadd.f32 %v382, %v446
        %v448 = vpop.f32.mrf.mxu0
        %v449 = vadd.f32 %v386, %v448
        %v450 = vpop.f32.mrf.mxu0
        %v451 = vpop.f32.mrf.mxu0
        %452 = vdwg.mxu0
        %v453 = vld [vmem:[%s1] sm:$0xff]
        %s454 = scalar_lea.vmem %s1, 8
        %v455 = vld [vmem:[%s454] sm:$0xff]
        %v456 = vmul.f32 %v447, 0.25
        %v457 = vpack.c.bf16 %v456, %v456
        %v458 = vpack.c.bf16 %v447, %v447
        %460 = vrot.lane.b32.xlu0 %v458, 96
        %v461 = vpop.permute.xlu0 %460
        %vm462 = vcmask 130048
        %v464 = vsel %vm462, %v457, 0
        %v467 = vsel %vm462, %v461, 0
        %469 = vmatprep.subr.bf16.mxu0 0
        %470 = vmatpush1.bf16.xpose.msra.mxu0 0
        %471 = vmatprep.subr.bf16.mxu0 0
        %472 = vmatpush1.bf16.xpose.msra.mxu0 0
        %473 = vmatprep.subr.bf16.mxu0 0
        %474 = vmatpush1.bf16.xpose.msra.mxu0 0
        %475 = vmatprep.subr.bf16.mxu0 0
        %476 = vmatpush1.bf16.xpose.msra.mxu0 0
        %477 = vmatprep.subr.bf16.mxu0 0
        %478 = vmatpush1.bf16.xpose.msra.mxu0 0
        %479 = vmatprep.subr.bf16.mxu0 0
        %480 = vmatpush1.bf16.xpose.msra.mxu0 0
        %481 = vmatprep.subr.bf16.mxu0 0
        %482 = vmatpush1.bf16.xpose.msra.mxu0 0
        %483 = vmatprep.subr.bf16.mxu0 0
        %484 = vmatpush1.bf16.xpose.msra.mxu0 %v467
        %485 = vmatprep.subr.bf16.mxu0 0
        %486 = vmatpush2.bf16.xpose.msra.mxu0 0
        %487 = vmatprep.subr.bf16.mxu0 0
        %488 = vmatpush2.bf16.xpose.msra.mxu0 0
        %489 = vmatprep.subr.bf16.mxu0 0
        %490 = vmatpush2.bf16.xpose.msra.mxu0 0
        %491 = vmatprep.subr.bf16.mxu0 0
        %492 = vmatpush2.bf16.xpose.msra.mxu0 0
        %493 = vmatprep.subr.bf16.mxu0 0
        %494 = vmatpush2.bf16.xpose.msra.mxu0 0
        %495 = vmatprep.subr.bf16.mxu0 0
        %496 = vmatpush2.bf16.xpose.msra.mxu0 0
        %497 = vmatprep.subr.bf16.mxu0 0
        %498 = vmatpush2.bf16.xpose.msra.mxu0 0
        %499 = vmatprep.subr.bf16.mxu0 0
        %500 = vmatpush2.bf16.xpose.msra.mxu0 0
        %501 = vmatprep.mubr.bf16.mxu0 0
        %502 = vmatmul.mubr.bf16.gmra.mxu0 %v464
        %v503 = vpop.f32.mrf.mxu0
        %v504 = vadd.f32 %v453, %v503
        %v505 = vpop.f32.mrf.mxu0
        %v506 = vpop.f32.mrf.mxu0
        %v507 = vpop.f32.mrf.mxu0
        %508 = vdwg.mxu0
        %vm509 = vcmask 64512
        %v510 = vsel %vm509, %v504, -inf
        %511 = vmax.xlane.f32.xlu0 %v510
        %v512 = vpop.xlane.xlu0 %511
        %v513 = vsub.f32 %v504, %v512
        %v514 = vmul.f32 %v513, 1.442695
        %v515 = vpow.pop %v514
        %v516 = vsel %vm509, %v515, 0.0
        %517 = vadd.xlane.f32.xlu0 %v516
        %v518 = vpop.xlane.xlu0 %517
        %v519 = vrcp.pop %v518
        %v520 = vmul.f32 %v515, %v519
        %v521 = vpack.c.bf16 %v520, %v520
        %522 = vrot.lane.b32.xlu0 %v458, 64
        %v523 = vpop.permute.xlu0 %522
        %v525 = vsel %vm509, %v521, 0
        %vm527 = vcmask 1043456
        %v529 = vsel %vm527, %v523, 0
        %531 = vmatprep.subr.bf16.mxu0 0
        %532 = vmatpush1.bf16.msra.mxu0 0
        %533 = vmatprep.subr.bf16.mxu0 0
        %534 = vmatpush1.bf16.msra.mxu0 0
        %535 = vmatprep.subr.bf16.mxu0 0
        %536 = vmatpush1.bf16.msra.mxu0 0
        %537 = vmatprep.subr.bf16.mxu0 0
        %538 = vmatpush1.bf16.msra.mxu0 0
        %539 = vmatprep.subr.bf16.mxu0 0
        %540 = vmatpush1.bf16.msra.mxu0 0
        %541 = vmatprep.subr.bf16.mxu0 0
        %542 = vmatpush1.bf16.msra.mxu0 0
        %543 = vmatprep.subr.bf16.mxu0 0
        %544 = vmatpush1.bf16.msra.mxu0 0
        %545 = vmatprep.subr.bf16.mxu0 0
        %546 = vmatpush1.bf16.msra.mxu0 %v529
        %547 = vmatprep.subr.bf16.mxu0 0
        %548 = vmatpush2.bf16.msra.mxu0 0
        %549 = vmatprep.subr.bf16.mxu0 0
        %550 = vmatpush2.bf16.msra.mxu0 0
        %551 = vmatprep.subr.bf16.mxu0 0
        %552 = vmatpush2.bf16.msra.mxu0 0
        %553 = vmatprep.subr.bf16.mxu0 0
        %554 = vmatpush2.bf16.msra.mxu0 0
        %555 = vmatprep.subr.bf16.mxu0 0
        %556 = vmatpush2.bf16.msra.mxu0 0
        %557 = vmatprep.subr.bf16.mxu0 0
        %558 = vmatpush2.bf16.msra.mxu0 0
        %559 = vmatprep.subr.bf16.mxu0 0
        %560 = vmatpush2.bf16.msra.mxu0 0
        %561 = vmatprep.subr.bf16.mxu0 0
        %562 = vmatpush2.bf16.msra.mxu0 0
        %563 = vmatprep.mubr.bf16.mxu0 0
        %564 = vmatmul.mubr.bf16.gmra.mxu0 %v525
        %v565 = vpop.f32.mrf.mxu0
        %v566 = vadd.f32 0.0, %v565
        %v567 = vpop.f32.mrf.mxu0
        %v568 = vpop.f32.mrf.mxu0
        %v569 = vpop.f32.mrf.mxu0
        %570 = vdwg.mxu0
        %572 = vrot.lane.b32.xlu0 %v457, 112
        %v573 = vpop.permute.xlu0 %572
        %574 = vrot.lane.b32.xlu0 %v458, 80
        %v575 = vpop.permute.xlu0 %574
        %v577 = vsel %vm462, %v573, 0
        %v580 = vsel %vm462, %v575, 0
        %582 = vmatprep.subr.bf16.mxu0 0
        %583 = vmatpush1.bf16.xpose.msra.mxu0 0
        %584 = vmatprep.subr.bf16.mxu0 0
        %585 = vmatpush1.bf16.xpose.msra.mxu0 0
        %586 = vmatprep.subr.bf16.mxu0 0
        %587 = vmatpush1.bf16.xpose.msra.mxu0 0
        %588 = vmatprep.subr.bf16.mxu0 0
        %589 = vmatpush1.bf16.xpose.msra.mxu0 0
        %590 = vmatprep.subr.bf16.mxu0 0
        %591 = vmatpush1.bf16.xpose.msra.mxu0 0
        %592 = vmatprep.subr.bf16.mxu0 0
        %593 = vmatpush1.bf16.xpose.msra.mxu0 0
        %594 = vmatprep.subr.bf16.mxu0 0
        %595 = vmatpush1.bf16.xpose.msra.mxu0 0
        %596 = vmatprep.subr.bf16.mxu0 0
        %597 = vmatpush1.bf16.xpose.msra.mxu0 %v580
        %598 = vmatprep.subr.bf16.mxu0 0
        %599 = vmatpush2.bf16.xpose.msra.mxu0 0
        %600 = vmatprep.subr.bf16.mxu0 0
        %601 = vmatpush2.bf16.xpose.msra.mxu0 0
        %602 = vmatprep.subr.bf16.mxu0 0
        %603 = vmatpush2.bf16.xpose.msra.mxu0 0
        %604 = vmatprep.subr.bf16.mxu0 0
        %605 = vmatpush2.bf16.xpose.msra.mxu0 0
        %606 = vmatprep.subr.bf16.mxu0 0
        %607 = vmatpush2.bf16.xpose.msra.mxu0 0
        %608 = vmatprep.subr.bf16.mxu0 0
        %609 = vmatpush2.bf16.xpose.msra.mxu0 0
        %610 = vmatprep.subr.bf16.mxu0 0
        %611 = vmatpush2.bf16.xpose.msra.mxu0 0
        %612 = vmatprep.subr.bf16.mxu0 0
        %613 = vmatpush2.bf16.xpose.msra.mxu0 0
        %614 = vmatprep.mubr.bf16.mxu0 0
        %615 = vmatmul.mubr.bf16.gmra.mxu0 %v577
        %v616 = vpop.f32.mrf.mxu0
        %v617 = vadd.f32 %v453, %v616
        %v618 = vpop.f32.mrf.mxu0
        %v619 = vpop.f32.mrf.mxu0
        %v620 = vpop.f32.mrf.mxu0
        %621 = vdwg.mxu0
        %v622 = vsel %vm509, %v617, -inf
        %623 = vmax.xlane.f32.xlu0 %v622
        %v624 = vpop.xlane.xlu0 %623
        %v625 = vsub.f32 %v617, %v624
        %v626 = vmul.f32 %v625, 1.442695
        %v627 = vpow.pop %v626
        %v628 = vsel %vm509, %v627, 0.0
        %629 = vadd.xlane.f32.xlu0 %v628
        %v630 = vpop.xlane.xlu0 %629
        %v631 = vrcp.pop %v630
        %v632 = vmul.f32 %v627, %v631
        %v633 = vpack.c.bf16 %v632, %v632
        %634 = vrot.lane.b32.xlu0 %v458, 48
        %v635 = vpop.permute.xlu0 %634
        %v637 = vsel %vm509, %v633, 0
        %v640 = vsel %vm527, %v635, 0
        %642 = vmatprep.subr.bf16.mxu0 0
        %643 = vmatpush1.bf16.msra.mxu0 0
        %644 = vmatprep.subr.bf16.mxu0 0
        %645 = vmatpush1.bf16.msra.mxu0 0
        %646 = vmatprep.subr.bf16.mxu0 0
        %647 = vmatpush1.bf16.msra.mxu0 0
        %648 = vmatprep.subr.bf16.mxu0 0
        %649 = vmatpush1.bf16.msra.mxu0 0
        %650 = vmatprep.subr.bf16.mxu0 0
        %651 = vmatpush1.bf16.msra.mxu0 0
        %652 = vmatprep.subr.bf16.mxu0 0
        %653 = vmatpush1.bf16.msra.mxu0 0
        %654 = vmatprep.subr.bf16.mxu0 0
        %655 = vmatpush1.bf16.msra.mxu0 0
        %656 = vmatprep.subr.bf16.mxu0 0
        %657 = vmatpush1.bf16.msra.mxu0 %v640
        %658 = vmatprep.subr.bf16.mxu0 0
        %659 = vmatpush2.bf16.msra.mxu0 0
        %660 = vmatprep.subr.bf16.mxu0 0
        %661 = vmatpush2.bf16.msra.mxu0 0
        %662 = vmatprep.subr.bf16.mxu0 0
        %663 = vmatpush2.bf16.msra.mxu0 0
        %664 = vmatprep.subr.bf16.mxu0 0
        %665 = vmatpush2.bf16.msra.mxu0 0
        %666 = vmatprep.subr.bf16.mxu0 0
        %667 = vmatpush2.bf16.msra.mxu0 0
        %668 = vmatprep.subr.bf16.mxu0 0
        %669 = vmatpush2.bf16.msra.mxu0 0
        %670 = vmatprep.subr.bf16.mxu0 0
        %671 = vmatpush2.bf16.msra.mxu0 0
        %672 = vmatprep.subr.bf16.mxu0 0
        %673 = vmatpush2.bf16.msra.mxu0 0
        %674 = vmatprep.mubr.bf16.mxu0 0
        %675 = vmatmul.mubr.bf16.gmra.mxu0 %v637
        %v676 = vpop.f32.mrf.mxu0
        %v677 = vadd.f32 0.0, %v676
        %v678 = vpop.f32.mrf.mxu0
        %v679 = vpop.f32.mrf.mxu0
        %v680 = vpop.f32.mrf.mxu0
        %681 = vdwg.mxu0
        %v682 = vpack.c.bf16 %v449, %v449
        %683 = vrot.lane.b32.xlu0 %v457, 32
        %v684 = vpop.permute.xlu0 %683
        %v686 = vsel %vm462, %v684, 0
        %v689 = vsel %vm462, %v682, 0
        %691 = vmatprep.subr.bf16.mxu0 0
        %692 = vmatpush1.bf16.xpose.msra.mxu0 0
        %693 = vmatprep.subr.bf16.mxu0 0
        %694 = vmatpush1.bf16.xpose.msra.mxu0 0
        %695 = vmatprep.subr.bf16.mxu0 0
        %696 = vmatpush1.bf16.xpose.msra.mxu0 0
        %697 = vmatprep.subr.bf16.mxu0 0
        %698 = vmatpush1.bf16.xpose.msra.mxu0 0
        %699 = vmatprep.subr.bf16.mxu0 0
        %700 = vmatpush1.bf16.xpose.msra.mxu0 0
        %701 = vmatprep.subr.bf16.mxu0 0
        %702 = vmatpush1.bf16.xpose.msra.mxu0 0
        %703 = vmatprep.subr.bf16.mxu0 0
        %704 = vmatpush1.bf16.xpose.msra.mxu0 0
        %705 = vmatprep.subr.bf16.mxu0 0
        %706 = vmatpush1.bf16.xpose.msra.mxu0 %v689
        %707 = vmatprep.subr.bf16.mxu0 0
        %708 = vmatpush2.bf16.xpose.msra.mxu0 0
        %709 = vmatprep.subr.bf16.mxu0 0
        %710 = vmatpush2.bf16.xpose.msra.mxu0 0
        %711 = vmatprep.subr.bf16.mxu0 0
        %712 = vmatpush2.bf16.xpose.msra.mxu0 0
        %713 = vmatprep.subr.bf16.mxu0 0
        %714 = vmatpush2.bf16.xpose.msra.mxu0 0
        %715 = vmatprep.subr.bf16.mxu0 0
        %716 = vmatpush2.bf16.xpose.msra.mxu0 0
        %717 = vmatprep.subr.bf16.mxu0 0
        %718 = vmatpush2.bf16.xpose.msra.mxu0 0
        %719 = vmatprep.subr.bf16.mxu0 0
        %720 = vmatpush2.bf16.xpose.msra.mxu0 0
        %721 = vmatprep.subr.bf16.mxu0 0
        %722 = vmatpush2.bf16.xpose.msra.mxu0 0
        %723 = vmatprep.mubr.bf16.mxu0 0
        %724 = vmatmul.mubr.bf16.gmra.mxu0 %v686
        %v725 = vpop.f32.mrf.mxu0
        %v726 = vadd.f32 %v455, %v725
        %v727 = vpop.f32.mrf.mxu0
        %v728 = vpop.f32.mrf.mxu0
        %v729 = vpop.f32.mrf.mxu0
        %730 = vdwg.mxu0
        %v731 = vsel %vm509, %v726, -inf
        %732 = vmax.xlane.f32.xlu0 %v731
        %v733 = vpop.xlane.xlu0 %732
        %v734 = vsub.f32 %v726, %v733
        %v735 = vmul.f32 %v734, 1.442695
        %v736 = vpow.pop %v735
        %v737 = vsel %vm509, %v736, 0.0
        %738 = vadd.xlane.f32.xlu0 %v737
        %v739 = vpop.xlane.xlu0 %738
        %v740 = vrcp.pop %v739
        %v741 = vmul.f32 %v736, %v740
        %v742 = vpack.c.bf16 %v741, %v741
        %744 = vrot.lane.b32.xlu0 %v682, 96
        %v745 = vpop.permute.xlu0 %744
        %v747 = vsel %vm509, %v742, 0
        %v750 = vsel %vm527, %v745, 0
        %752 = vmatprep.subr.bf16.mxu0 0
        %753 = vmatpush1.bf16.msra.mxu0 0
        %754 = vmatprep.subr.bf16.mxu0 0
        %755 = vmatpush1.bf16.msra.mxu0 0
        %756 = vmatprep.subr.bf16.mxu0 0
        %757 = vmatpush1.bf16.msra.mxu0 0
        %758 = vmatprep.subr.bf16.mxu0 0
        %759 = vmatpush1.bf16.msra.mxu0 0
        %760 = vmatprep.subr.bf16.mxu0 0
        %761 = vmatpush1.bf16.msra.mxu0 0
        %762 = vmatprep.subr.bf16.mxu0 0
        %763 = vmatpush1.bf16.msra.mxu0 0
        %764 = vmatprep.subr.bf16.mxu0 0
        %765 = vmatpush1.bf16.msra.mxu0 0
        %766 = vmatprep.subr.bf16.mxu0 0
        %767 = vmatpush1.bf16.msra.mxu0 %v750
        %768 = vmatprep.subr.bf16.mxu0 0
        %769 = vmatpush2.bf16.msra.mxu0 0
        %770 = vmatprep.subr.bf16.mxu0 0
        %771 = vmatpush2.bf16.msra.mxu0 0
        %772 = vmatprep.subr.bf16.mxu0 0
        %773 = vmatpush2.bf16.msra.mxu0 0
        %774 = vmatprep.subr.bf16.mxu0 0
        %775 = vmatpush2.bf16.msra.mxu0 0
        %776 = vmatprep.subr.bf16.mxu0 0
        %777 = vmatpush2.bf16.msra.mxu0 0
        %778 = vmatprep.subr.bf16.mxu0 0
        %779 = vmatpush2.bf16.msra.mxu0 0
        %780 = vmatprep.subr.bf16.mxu0 0
        %781 = vmatpush2.bf16.msra.mxu0 0
        %782 = vmatprep.subr.bf16.mxu0 0
        %783 = vmatpush2.bf16.msra.mxu0 0
        %784 = vmatprep.mubr.bf16.mxu0 0
        %785 = vmatmul.mubr.bf16.gmra.mxu0 %v747
        %v786 = vpop.f32.mrf.mxu0
        %v787 = vadd.f32 0.0, %v786
        %v788 = vpop.f32.mrf.mxu0
        %v789 = vpop.f32.mrf.mxu0
        %v790 = vpop.f32.mrf.mxu0
        %791 = vdwg.mxu0
        %792 = vrot.lane.b32.xlu0 %v457, 16
        %v793 = vpop.permute.xlu0 %792
        %794 = vrot.lane.b32.xlu0 %v682, 112
        %v795 = vpop.permute.xlu0 %794
        %v797 = vsel %vm462, %v793, 0
        %v800 = vsel %vm462, %v795, 0
        %802 = vmatprep.subr.bf16.mxu0 0
        %803 = vmatpush1.bf16.xpose.msra.mxu0 0
        %804 = vmatprep.subr.bf16.mxu0 0
        %805 = vmatpush1.bf16.xpose.msra.mxu0 0
        %806 = vmatprep.subr.bf16.mxu0 0
        %807 = vmatpush1.bf16.xpose.msra.mxu0 0
        %808 = vmatprep.subr.bf16.mxu0 0
        %809 = vmatpush1.bf16.xpose.msra.mxu0 0
        %810 = vmatprep.subr.bf16.mxu0 0
        %811 = vmatpush1.bf16.xpose.msra.mxu0 0
        %812 = vmatprep.subr.bf16.mxu0 0
        %813 = vmatpush1.bf16.xpose.msra.mxu0 0
        %814 = vmatprep.subr.bf16.mxu0 0
        %815 = vmatpush1.bf16.xpose.msra.mxu0 0
        %816 = vmatprep.subr.bf16.mxu0 0
        %817 = vmatpush1.bf16.xpose.msra.mxu0 %v800
        %818 = vmatprep.subr.bf16.mxu0 0
        %819 = vmatpush2.bf16.xpose.msra.mxu0 0
        %820 = vmatprep.subr.bf16.mxu0 0
        %821 = vmatpush2.bf16.xpose.msra.mxu0 0
        %822 = vmatprep.subr.bf16.mxu0 0
        %823 = vmatpush2.bf16.xpose.msra.mxu0 0
        %824 = vmatprep.subr.bf16.mxu0 0
        %825 = vmatpush2.bf16.xpose.msra.mxu0 0
        %826 = vmatprep.subr.bf16.mxu0 0
        %827 = vmatpush2.bf16.xpose.msra.mxu0 0
        %828 = vmatprep.subr.bf16.mxu0 0
        %829 = vmatpush2.bf16.xpose.msra.mxu0 0
        %830 = vmatprep.subr.bf16.mxu0 0
        %831 = vmatpush2.bf16.xpose.msra.mxu0 0
        %832 = vmatprep.subr.bf16.mxu0 0
        %833 = vmatpush2.bf16.xpose.msra.mxu0 0
        %834 = vmatprep.mubr.bf16.mxu0 0
        %835 = vmatmul.mubr.bf16.gmra.mxu0 %v797
        %v836 = vpop.f32.mrf.mxu0
        %v837 = vadd.f32 %v455, %v836
        %v838 = vpop.f32.mrf.mxu0
        %v839 = vpop.f32.mrf.mxu0
        %v840 = vpop.f32.mrf.mxu0
        %841 = vdwg.mxu0
        %v842 = vsel %vm509, %v837, -inf
        %843 = vmax.xlane.f32.xlu0 %v842
        %v844 = vpop.xlane.xlu0 %843
        %v845 = vsub.f32 %v837, %v844
        %v846 = vmul.f32 %v845, 1.442695
        %v847 = vpow.pop %v846
        %v848 = vsel %vm509, %v847, 0.0
        %849 = vadd.xlane.f32.xlu0 %v848
        %v850 = vpop.xlane.xlu0 %849
        %v851 = vrcp.pop %v850
        %v852 = vmul.f32 %v847, %v851
        %v853 = vpack.c.bf16 %v852, %v852
        %854 = vrot.lane.b32.xlu0 %v682, 80
        %v855 = vpop.permute.xlu0 %854
        %v857 = vsel %vm509, %v853, 0
        %v860 = vsel %vm527, %v855, 0
        %862 = vmatprep.subr.bf16.mxu0 0
        %863 = vmatpush1.bf16.msra.mxu0 0
        %864 = vmatprep.subr.bf16.mxu0 0
        %865 = vmatpush1.bf16.msra.mxu0 0
        %866 = vmatprep.subr.bf16.mxu0 0
        %867 = vmatpush1.bf16.msra.mxu0 0
        %868 = vmatprep.subr.bf16.mxu0 0
        %869 = vmatpush1.bf16.msra.mxu0 0
        %870 = vmatprep.subr.bf16.mxu0 0
        %871 = vmatpush1.bf16.msra.mxu0 0
        %872 = vmatprep.subr.bf16.mxu0 0
        %873 = vmatpush1.bf16.msra.mxu0 0
        %874 = vmatprep.subr.bf16.mxu0 0
        %875 = vmatpush1.bf16.msra.mxu0 0
        %876 = vmatprep.subr.bf16.mxu0 0
        %877 = vmatpush1.bf16.msra.mxu0 %v860
        %878 = vmatprep.subr.bf16.mxu0 0
        %879 = vmatpush2.bf16.msra.mxu0 0
        %880 = vmatprep.subr.bf16.mxu0 0
        %881 = vmatpush2.bf16.msra.mxu0 0
        %882 = vmatprep.subr.bf16.mxu0 0
        %883 = vmatpush2.bf16.msra.mxu0 0
        %884 = vmatprep.subr.bf16.mxu0 0
        %885 = vmatpush2.bf16.msra.mxu0 0
        %886 = vmatprep.subr.bf16.mxu0 0
        %887 = vmatpush2.bf16.msra.mxu0 0
        %888 = vmatprep.subr.bf16.mxu0 0
        %889 = vmatpush2.bf16.msra.mxu0 0
        %890 = vmatprep.subr.bf16.mxu0 0
        %891 = vmatpush2.bf16.msra.mxu0 0
        %892 = vmatprep.subr.bf16.mxu0 0
        %893 = vmatpush2.bf16.msra.mxu0 0
        %894 = vmatprep.mubr.bf16.mxu0 0
        %895 = vmatmul.mubr.bf16.gmra.mxu0 %v857
        %v896 = vpop.f32.mrf.mxu0
        %v897 = vadd.f32 0.0, %v896
        %v898 = vpop.f32.mrf.mxu0
        %v899 = vpop.f32.mrf.mxu0
        %v900 = vpop.f32.mrf.mxu0
        %901 = vdwg.mxu0
        %903 = vrot.lane.b32.xlu0 %v677, 16
        %v904 = vpop.permute.xlu0 %903
        %907 = vrot.lane.b32.xlu0 %v787, 32
        %v908 = vpop.permute.xlu0 %907
        %911 = vrot.lane.b32.xlu0 %v897, 48
        %v912 = vpop.permute.xlu0 %911
        %v914 = vsel %vm462, %v566, %v904
        %v915 = vsel %vm357, %v914, %v908
        %vm916 = vcmask 392192
        %v917 = vsel %vm916, %v915, %v912
        %v918 = vpack.c.bf16 %v917, %v917
        %v919 = vld [vmem:[%s4] sm:$0xf]
        %v920 = vld [vmem:[%s4 + $0x4] sm:$0xf]
        %v921 = vld [vmem:[%s4 + $0x8] sm:$0xf]
        %v922 = vld [vmem:[%s4 + $0xc] sm:$0xf]
        %v923 = vld [vmem:[%s4 + $0x10] sm:$0xf]
        %v924 = vld [vmem:[%s4 + $0x14] sm:$0xf]
        %v925 = vld [vmem:[%s4 + $0x18] sm:$0xf]
        %v926 = vld [vmem:[%s4 + $0x1c] sm:$0xf]
        %v927 = vld [vmem:[%s5] sm:$0x1]
        %v929 = vlaneseq
        %v930 = vshrl.u32 %v929, 7
        %v931 = vsub.s32 0, %v930
        %v932 = vrot.slane %v927, %v931
        %v942 = vunpack.c.l.b16 %v919
        %v943 = vunpack.c.l.b16 %v920
        %v944 = vunpack.c.l.b16 %v921
        %v945 = vunpack.c.l.b16 %v922
        %v946 = vunpack.c.l.b16 %v923
        %v947 = vunpack.c.l.b16 %v924
        %v948 = vunpack.c.l.b16 %v925
        %v949 = vunpack.c.l.b16 %v926
        %v950 = vpack.c.b16 %v943, %v942
        %v951 = vpack.c.b16 %v945, %v944
        %v952 = vpack.c.b16 %v947, %v946
        %v953 = vpack.c.b16 %v949, %v948
        %vm958 = vcmask 523264
        %v960 = vsel %vm958, %v918, 0
        %962 = vmatprep.subr.bf16.mxu0 0
        %963 = vmatpush1.bf16.msra.mxu0 0
        %964 = vmatprep.subr.bf16.mxu0 0
        %965 = vmatpush1.bf16.msra.mxu0 0
        %966 = vmatprep.subr.bf16.mxu0 0
        %967 = vmatpush1.bf16.msra.mxu0 0
        %968 = vmatprep.subr.bf16.mxu0 0
        %969 = vmatpush1.bf16.msra.mxu0 0
        %970 = vmatprep.subr.bf16.mxu0 0
        %971 = vmatpush1.bf16.msra.mxu0 %v953
        %972 = vmatprep.subr.bf16.mxu0 0
        %973 = vmatpush1.bf16.msra.mxu0 %v952
        %974 = vmatprep.subr.bf16.mxu0 0
        %975 = vmatpush1.bf16.msra.mxu0 %v951
        %976 = vmatprep.subr.bf16.mxu0 0
        %977 = vmatpush1.bf16.msra.mxu0 %v950
        %978 = vmatprep.subr.bf16.mxu0 0
        %979 = vmatpush2.bf16.msra.mxu0 0
        %980 = vmatprep.subr.bf16.mxu0 0
        %981 = vmatpush2.bf16.msra.mxu0 0
        %982 = vmatprep.subr.bf16.mxu0 0
        %983 = vmatpush2.bf16.msra.mxu0 0
        %984 = vmatprep.subr.bf16.mxu0 0
        %985 = vmatpush2.bf16.msra.mxu0 0
        %986 = vmatprep.subr.bf16.mxu0 0
        %987 = vmatpush2.bf16.msra.mxu0 0
        %988 = vmatprep.subr.bf16.mxu0 0
        %989 = vmatpush2.bf16.msra.mxu0 0
        %990 = vmatprep.subr.bf16.mxu0 0
        %991 = vmatpush2.bf16.msra.mxu0 0
        %992 = vmatprep.subr.bf16.mxu0 0
        %993 = vmatpush2.bf16.msra.mxu0 0
        %994 = vmatprep.mubr.bf16.mxu0 0
        %995 = vmatmul.mubr.bf16.gmra.mxu0 %v960
        %v996 = vpop.f32.mrf.mxu0
        %v997 = vadd.f32 %v932, %v996
        %v998 = vpop.f32.mrf.mxu0
        %v999 = vpop.f32.mrf.mxu0
        %v1000 = vpop.f32.mrf.mxu0
        %1001 = vdwg.mxu0
        %v1002 = vadd.f32 %v997, %v356
        %v1003 = vsel %vm357, %v1002, 0.0
        %1004 = vadd.xlane.f32.xlu0 %v1003
        %v1005 = vpop.xlane.xlu0 %1004
        %v1006 = vmul.f32 %v1005, %v361
        %v1007 = vsub.f32 %v1002, %v1006
        %v1008 = vmul.f32 %v1007, %v1007
        %v1009 = vsel %vm357, %v1008, 0.0
        %1010 = vadd.xlane.f32.xlu0 %v1009
        %v1011 = vpop.xlane.xlu0 %1010
        %v1012 = vmul.f32 %v1011, %v361
        %v1013 = vadd.f32 %v1012, 1e-05
        %v1014 = vrsqrt.pop %v1013
        %v1015 = vmul.f32 %v1007, %v1014
        %v1016 = vpack.c.bf16 %v1015, %v1015
        %v1017 = vld [vmem:[%s6] sm:$0xf]
        %v1018 = vld [vmem:[%s6 + $0x4] sm:$0xf]
        %v1019 = vld [vmem:[%s6 + $0x8] sm:$0xf]
        %v1020 = vld [vmem:[%s6 + $0xc] sm:$0xf]
        %v1021 = vld [vmem:[%s7] sm:$0x1]
        %v1023 = vlaneseq
        %v1024 = vshrl.u32 %v1023, 7
        %v1025 = vsub.s32 0, %v1024
        %v1026 = vrot.slane %v1021, %v1025
        %v1032 = vunpack.c.l.b16 %v1017
        %v1033 = vunpack.c.l.b16 %v1018
        %v1034 = vunpack.c.l.b16 %v1019
        %v1035 = vunpack.c.l.b16 %v1020
        %v1036 = vpack.c.b16 %v1033, %v1032
        %v1037 = vpack.c.b16 %v1035, %v1034
        %v1041 = vsel %vm357, %v1016, 0
        %1043 = vmatprep.subr.bf16.mxu0 0
        %1044 = vmatpush1.bf16.msra.mxu0 0
        %1045 = vmatprep.subr.bf16.mxu0 0
        %1046 = vmatpush1.bf16.msra.mxu0 0
        %1047 = vmatprep.subr.bf16.mxu0 0
        %1048 = vmatpush1.bf16.msra.mxu0 0
        %1049 = vmatprep.subr.bf16.mxu0 0
        %1050 = vmatpush1.bf16.msra.mxu0 0
        %1051 = vmatprep.subr.bf16.mxu0 0
        %1052 = vmatpush1.bf16.msra.mxu0 0
        %1053 = vmatprep.subr.bf16.mxu0 0
        %1054 = vmatpush1.bf16.msra.mxu0 0
        %1055 = vmatprep.subr.bf16.mxu0 0
        %1056 = vmatpush1.bf16.msra.mxu0 %v1037
        %1057 = vmatprep.subr.bf16.mxu0 0
        %1058 = vmatpush1.bf16.msra.mxu0 %v1036
        %1059 = vmatprep.subr.bf16.mxu0 0
        %1060 = vmatpush2.bf16.msra.mxu0 0
        %1061 = vmatprep.subr.bf16.mxu0 0
        %1062 = vmatpush2.bf16.msra.mxu0 0
        %1063 = vmatprep.subr.bf16.mxu0 0
        %1064 = vmatpush2.bf16.msra.mxu0 0
        %1065 = vmatprep.subr.bf16.mxu0 0
        %1066 = vmatpush2.bf16.msra.mxu0 0
        %1067 = vmatprep.subr.bf16.mxu0 0
        %1068 = vmatpush2.bf16.msra.mxu0 0
        %1069 = vmatprep.subr.bf16.mxu0 0
        %1070 = vmatpush2.bf16.msra.mxu0 0
        %1071 = vmatprep.subr.bf16.mxu0 0
        %1072 = vmatpush2.bf16.msra.mxu0 0
        %1073 = vmatprep.subr.bf16.mxu0 0
        %1074 = vmatpush2.bf16.msra.mxu0 0
        %1075 = vmatprep.mubr.bf16.mxu0 0
        %1076 = vmatmul.mubr.bf16.gmra.mxu0 %v1041
        %v1077 = vpop.f32.mrf.mxu0
        %v1078 = vadd.f32 %v1026, %v1077
        %v1079 = vpop.f32.mrf.mxu0
        %v1080 = vpop.f32.mrf.mxu0
        %v1081 = vpop.f32.mrf.mxu0
        %1082 = vdwg.mxu0
        %v1083 = vmul.f32 %v1078, 0.5
        %v1084 = vmul.f32 %v1078, 0.70710677
        %vm1085 = vcmp.ge.f32.partialorder %v1084, 0.0
        %v1086 = vsel %vm1085, 1.0, -1.0
        %v1087 = vand.u32 2147483647, %v1084
        %v1088 = vmul.f32 %v1087, 0.3275911
        %v1089 = vadd.f32 %v1088, 1.0
        %v1090 = vrcp.pop %v1089
        %v1091 = vmul.f32 1.0, %v1090
        %v1092 = vmul.f32 %v1091, 1.0614054
        %v1093 = vadd.f32 %v1092, -1.4531521
        %v1094 = vmul.f32 %v1091, %v1093
        %v1095 = vadd.f32 %v1094, 1.4214138
        %v1096 = vmul.f32 %v1091, %v1095
        %v1097 = vadd.f32 %v1096, -0.28449672
        %v1098 = vmul.f32 %v1091, %v1097
        %v1099 = vadd.f32 %v1098, 0.2548296
        %v1100 = vmul.f32 %v1091, %v1099
        %v1101 = vsub.f32 0.0, %v1087
        %v1102 = vmul.f32 %v1101, %v1087
        %v1103 = vmul.f32 %v1102, 1.442695
        %v1104 = vpow.pop %v1103
        %v1105 = vmul.f32 %v1100, %v1104
        %v1106 = vsub.f32 1.0, %v1105
        %v1107 = vmul.f32 %v1086, %v1106
        %v1108 = vadd.f32 %v1107, 1.0
        %v1109 = vmul.f32 %v1083, %v1108
        %v1110 = vpack.c.bf16 %v1109, %v1109
        %v1111 = vld [vmem:[%s8] sm:$0xf]
        %v1112 = vld [vmem:[%s8 + $0x4] sm:$0xf]
        %v1113 = vld [vmem:[%s8 + $0x8] sm:$0xf]
        %v1114 = vld [vmem:[%s8 + $0xc] sm:$0xf]
        %v1115 = vld [vmem:[%s8 + $0x10] sm:$0xf]
        %v1116 = vld [vmem:[%s8 + $0x14] sm:$0xf]
        %v1117 = vld [vmem:[%s8 + $0x18] sm:$0xf]
        %v1118 = vld [vmem:[%s8 + $0x1c] sm:$0xf]
        %v1119 = vld [vmem:[%s9] sm:$0x1]
        %v1121 = vlaneseq
        %v1122 = vshrl.u32 %v1121, 7
        %v1123 = vsub.s32 0, %v1122
        %v1124 = vrot.slane %v1119, %v1123
        %v1134 = vunpack.c.l.b16 %v1111
        %v1135 = vunpack.c.l.b16 %v1112
        %v1136 = vunpack.c.l.b16 %v1113
        %v1137 = vunpack.c.l.b16 %v1114
        %v1138 = vunpack.c.l.b16 %v1115
        %v1139 = vunpack.c.l.b16 %v1116
        %v1140 = vunpack.c.l.b16 %v1117
        %v1141 = vunpack.c.l.b16 %v1118
        %v1142 = vpack.c.b16 %v1135, %v1134
        %v1143 = vpack.c.b16 %v1137, %v1136
        %v1144 = vpack.c.b16 %v1139, %v1138
        %v1145 = vpack.c.b16 %v1141, %v1140
        %v1151 = vsel %vm958, %v1110, 0
        %1153 = vmatprep.subr.bf16.mxu0 0
        %1154 = vmatpush1.bf16.msra.mxu0 0
        %1155 = vmatprep.subr.bf16.mxu0 0
        %1156 = vmatpush1.bf16.msra.mxu0 0
        %1157 = vmatprep.subr.bf16.mxu0 0
        %1158 = vmatpush1.bf16.msra.mxu0 0
        %1159 = vmatprep.subr.bf16.mxu0 0
        %1160 = vmatpush1.bf16.msra.mxu0 0
        %1161 = vmatprep.subr.bf16.mxu0 0
        %1162 = vmatpush1.bf16.msra.mxu0 %v1145
        %1163 = vmatprep.subr.bf16.mxu0 0
        %1164 = vmatpush1.bf16.msra.mxu0 %v1144
        %1165 = vmatprep.subr.bf16.mxu0 0
        %1166 = vmatpush1.bf16.msra.mxu0 %v1143
        %1167 = vmatprep.subr.bf16.mxu0 0
        %1168 = vmatpush1.bf16.msra.mxu0 %v1142
        %1169 = vmatprep.subr.bf16.mxu0 0
        %1170 = vmatpush2.bf16.msra.mxu0 0
        %1171 = vmatprep.subr.bf16.mxu0 0
        %1172 = vmatpush2.bf16.msra.mxu0 0
        %1173 = vmatprep.subr.bf16.mxu0 0
        %1174 = vmatpush2.bf16.msra.mxu0 0
        %1175 = vmatprep.subr.bf16.mxu0 0
        %1176 = vmatpush2.bf16.msra.mxu0 0
        %1177 = vmatprep.subr.bf16.mxu0 0
        %1178 = vmatpush2.bf16.msra.mxu0 0
        %1179 = vmatprep.subr.bf16.mxu0 0
        %1180 = vmatpush2.bf16.msra.mxu0 0
        %1181 = vmatprep.subr.bf16.mxu0 0
        %1182 = vmatpush2.bf16.msra.mxu0 0
        %1183 = vmatprep.subr.bf16.mxu0 0
        %1184 = vmatpush2.bf16.msra.mxu0 0
        %1185 = vmatprep.mubr.bf16.mxu0 0
        %1186 = vmatmul.mubr.bf16.gmra.mxu0 %v1151
        %v1187 = vpop.f32.mrf.mxu0
        %v1188 = vadd.f32 %v1124, %v1187
        %v1189 = vpop.f32.mrf.mxu0
        %v1190 = vpop.f32.mrf.mxu0
        %v1191 = vpop.f32.mrf.mxu0
        %1192 = vdwg.mxu0
        %v1193 = vadd.f32 %v1188, %v1002
        %1194 = vst.msk [vmem:[%s350] sm:$0xff] %vm357, %v1193
        %s1195 = sand.u32 %s247, 1
        %s1196 = scalar_lea.sflag [#allocation3], %s1195
        %s1197 = sand.u32 %s247, 1
        %s1198 = smul.addr %s1197, 8
        %s1199 = scalar_lea.vmem [#allocation2], %s1198
        // Predicated region
        $region61: #{tpu_custom_call.1} parent=59 // pred_check
          %p1200 = pneg %p257
        $region62: #{tpu_custom_call.1} parent=59 // pred_check_branch
          %1202 = sbr.rel (%p1200) target = $region64
        $region63: #{tpu_custom_call.1} parent=59 // pred_region
          %s1204 = ssub.s32 128, 128
          %1205 = vsyncadd %s1196, %s1204
          %s1206 = smul.addr %s24, 128
          %s1207 = scalar_lea.hbm %s10, %s1206
          %s1209 = sshll.u32 %s1199, 4
          %s1210 = int_to_ptr.vmem [resolvable:$true] %s1209
          %1212 = dma.vmem_to_hbm [thread:$0]  %s1210, 128, %s1207, %s1196
        $region64: #{tpu_custom_call.1} parent=59 // pred_fallthru
          _
      $region60: #{tpu_custom_call.1} parent=5 // pred_fallthru
        _
      %p1213 = scmp.le.s32.totalorder 2, %s19
      // Predicated region
      $region65: #{tpu_custom_call.1} parent=5 // pred_check
        %p1214 = pneg %p1213
      $region66: #{tpu_custom_call.1} parent=5 // pred_check_branch
        %1216 = sbr.rel (%p1214) target = $region68
      $region67: #{tpu_custom_call.1} parent=5 // pred_region
        %s1217 = ssub.s32 %s19, 2
        // Predicated region
        $region69: #{tpu_custom_call.1} parent=67 // pred_check
          %p1218 = pneg %p263
        $region70: #{tpu_custom_call.1} parent=67 // pred_check_branch
          %1220 = sbr.rel (%p1218) target = $region72
        $region71: #{tpu_custom_call.1} parent=67 // pred_region
          %s1221 = sand.u32 %s248, 1
          %s1222 = scalar_lea.sflag [#allocation3], %s1221
          %s1223 = sand.u32 %s248, 1
          %s1224 = smul.addr %s1223, 8
          %s1225 = scalar_lea.vmem [#allocation2], %s1224
          %1226 = dma.done %s1222, 128
        $region72: #{tpu_custom_call.1} parent=67 // pred_fallthru
          _
      $region68: #{tpu_custom_call.1} parent=5 // pred_fallthru
        _
    $region6: #{tpu_custom_call.1} parent=1 // loop_footer
      %s23 = sadd.s32 1, %s19
    $region7: #{tpu_custom_call.1} parent=1 // loop_footer_branch
      %18 = sbr.rel target = $region3
    $region8: #{tpu_custom_call.1} parent=1 // loop_exit
      _
    %1227 = vsyncpa [#allocation3], 1
    %s1228 = scalar_lea.sflag [#allocation3], 1
    %1229 = vsyncpa %s1228, 1

// kernel: tpu_custom_call.1
$region0: #{tpu_custom_call.1}
  #allocation0 [shape = 'u32[]', space=smem, size = 0x4, offset = 0x4, fixed_abs, tag = 'smem constant byte address 0x4 - core index']
  #allocation1 [shape = 'u32[144,128]{1,0:T(1,128)}', space=vmem, size = 0x12000, scoped, tag = 'internal scratch']
  %s0 = inlined_call_operand.vmem [shape: f32[2,8,32], index: 0, kind: input, shape index: {}]
  %s1 = inlined_call_operand.vmem [shape: f32[2,8,8], index: 1, kind: input, shape index: {}]
  %s2 = inlined_call_operand.vmem [shape: bf16[32,192], index: 2, kind: input, shape index: {}]
  %s3 = inlined_call_operand.vmem [shape: f32[1,192], index: 3, kind: input, shape index: {}]
  %s4 = inlined_call_operand.vmem [shape: bf16[64,32], index: 4, kind: input, shape index: {}]
  %s5 = inlined_call_operand.vmem [shape: f32[1,32], index: 5, kind: input, shape index: {}]
  %s6 = inlined_call_operand.vmem [shape: bf16[32,64], index: 6, kind: input, shape index: {}]
  %s7 = inlined_call_operand.vmem [shape: f32[1,64], index: 7, kind: input, shape index: {}]
  %s8 = inlined_call_operand.vmem [shape: bf16[64,32], index: 8, kind: input, shape index: {}]
  %s9 = inlined_call_operand.vmem [shape: f32[1,32], index: 9, kind: input, shape index: {}]
  %s10 = inlined_call_operand.hbm [shape: f32[2,8,32], index: 10, kind: output, shape index: {}]
  %s11 = sld [smem:[#allocation0]]
  $region73: #{tpu_custom_call.1} parent=0
    _
  %s13 = ssub.s32 1, %s11
  %s14 = scalar_select 0, %s13, %s11
  $region1: #{tpu_custom_call.1} parent=0
    #allocation2 [shape = 'u8[8192]{0}', space=vmem, size = 0x2000, scoped, tag = 'output window, operand 0']
    #allocation3 [shape = 's32[2]{0}', space=sflag, size = 0x8, scoped, tag = 'scoped memory for tpu_custom_call.1']
    %15 = vsyncpa [#allocation3], 0
    %s16 = scalar_lea.sflag [#allocation3], 1
    %17 = vsyncpa %s16, 0
    loop: start=0, step=1, limit=4
    $region2: #{tpu_custom_call.1} parent=1 // loop_pre_header
      _
    $region3: #{tpu_custom_call.1} parent=1 // loop_header
      %s19 = sphi 0, %s23
      %p20 = scmp.ge.s32.totalorder %s19, 4
      %s29 = sphi 0, %s31
      %s32 = sphi 0, %s29
      %s33 = sphi 0, %s32
      %s49 = sphi 0, %s33
      %s53 = sphi 0, %s53
      %s55 = sphi 0, %s53
      %s56 = sphi 0, %s55
      %s70 = sphi 0, %s56
      %s74 = sphi 0, %s74
      %s76 = sphi 0, %s74
      %s77 = sphi 0, %s76
      %s91 = sphi 0, %s77
      %s95 = sphi 0, %s95
      %s97 = sphi 0, %s95
      %s98 = sphi 0, %s97
      %s112 = sphi 0, %s98
      %s116 = sphi 0, %s116
      %s118 = sphi 0, %s116
      %s119 = sphi 0, %s118
      %s133 = sphi 0, %s119
      %s137 = sphi 0, %s137
      %s139 = sphi 0, %s137
      %s140 = sphi 0, %s139
      %s154 = sphi 0, %s140
      %s158 = sphi 0, %s158
      %s160 = sphi 0, %s158
      %s161 = sphi 0, %s160
      %s175 = sphi 0, %s161
      %s179 = sphi 0, %s179
      %s181 = sphi 0, %s179
      %s182 = sphi 0, %s181
      %s196 = sphi 0, %s182
      %s200 = sphi 0, %s200
      %s202 = sphi 0, %s200
      %s203 = sphi 0, %s202
      %s217 = sphi 0, %s203
      %s221 = sphi 0, %s221
      %s223 = sphi 0, %s221
      %s224 = sphi 0, %s223
      %s238 = sphi 0, %s224
      %s244 = sphi 0, %s246
      %s247 = sphi 0, %s244
      %s248 = sphi 0, %s247
      %s264 = sphi 0, %s248
    $region4: #{tpu_custom_call.1} parent=1 // loop_header_branch
      %22 = sbr.rel (%p20) target = $region8
    $region5: #{tpu_custom_call.1} parent=1 // loop_body
      %s24 = ssub.s32 %s19, 1
      %s25 = ssub.s32 %s19, 2
      %s26 = sadd.s32 %s19, 1
      %s27 = ssub.s32 %s19, %s26
      %p28 = scmp.eq.s32.totalorder %s27, 0
      %s30 = sadd.s32 %s29, 1
      %s31 = scalar_select %p28, %s29, %s30
      %p34 = pneg %p28
      %p35 = scmp.eq.s32.totalorder %s19, 1
      %p36 = por %p34, %p35
      %p37 = scmp.ne.s32.totalorder %s29, %s32
      %p38 = scmp.eq.s32.totalorder %s19, 0
      %p39 = por %p37, %p38
      %p40 = scmp.ne.s32.totalorder %s29, %s32
      %p41 = scmp.eq.s32.totalorder %s24, 1
      %p42 = por %p40, %p41
      %p43 = scmp.ne.s32.totalorder %s32, %s33
      %p44 = scmp.eq.s32.totalorder %s24, 0
      %p45 = por %p43, %p44
      %p46 = scmp.ne.s32.totalorder %s32, %s33
      %p47 = scmp.eq.s32.totalorder %s25, 1
      %p48 = por %p46, %p47
      %p50 = scmp.ne.s32.totalorder %s33, %s49
      %p51 = scmp.eq.s32.totalorder %s25, 0
      %p52 = por %p50, %p51
      %s54 = sadd.s32 %s53, 1
      %p57 = scmp.eq.s32.totalorder %s19, 1
      %p58 = scmp.ne.s32.totalorder %s53, %s55
      %p59 = scmp.eq.s32.totalorder %s19, 0
      %p60 = por %p58, %p59
      %p61 = scmp.ne.s32.totalorder %s53, %s55
      %p62 = scmp.eq.s32.totalorder %s24, 1
      %p63 = por %p61, %p62
      %p64 = scmp.ne.s32.totalorder %s55, %s56
      %p65 = scmp.eq.s32.totalorder %s24, 0
      %p66 = por %p64, %p65
      %p67 = scmp.ne.s32.totalorder %s55, %s56
      %p68 = scmp.eq.s32.totalorder %s25, 1
      %p69 = por %p67, %p68
      %p71 = scmp.ne.s32.totalorder %s56, %s70
      %p72 = scmp.eq.s32.totalorder %s25, 0
      %p73 = por %p71, %p72
      %s75 = sadd.s32 %s74, 1
      %p78 = scmp.eq.s32.totalorder %s19, 1
      %p79 = scmp.ne.s32.totalorder %s74, %s76
      %p80 = scmp.eq.s32.totalorder %s19, 0
      %p81 = por %p79, %p80
      %p82 = scmp.ne.s32.totalorder %s74, %s76
      %p83 = scmp.eq.s32.totalorder %s24, 1
      %p84 = por %p82, %p83
      %p85 = scmp.ne.s32.totalorder %s76, %s77
      %p86 = scmp.eq.s32.totalorder %s24, 0
      %p87 = por %p85, %p86
      %p88 = scmp.ne.s32.totalorder %s76, %s77
      %p89 = scmp.eq.s32.totalorder %s25, 1
      %p90 = por %p88, %p89
      %p92 = scmp.ne.s32.totalorder %s77, %s91
      %p93 = scmp.eq.s32.totalorder %s25, 0
      %p94 = por %p92, %p93
      %s96 = sadd.s32 %s95, 1
      %p99 = scmp.eq.s32.totalorder %s19, 1
      %p100 = scmp.ne.s32.totalorder %s95, %s97
      %p101 = scmp.eq.s32.totalorder %s19, 0
      %p102 = por %p100, %p101
      %p103 = scmp.ne.s32.totalorder %s95, %s97
      %p104 = scmp.eq.s32.totalorder %s24, 1
      %p105 = por %p103, %p104
      %p106 = scmp.ne.s32.totalorder %s97, %s98
      %p107 = scmp.eq.s32.totalorder %s24, 0
      %p108 = por %p106, %p107
      %p109 = scmp.ne.s32.totalorder %s97, %s98
      %p110 = scmp.eq.s32.totalorder %s25, 1
      %p111 = por %p109, %p110
      %p113 = scmp.ne.s32.totalorder %s98, %s112
      %p114 = scmp.eq.s32.totalorder %s25, 0
      %p115 = por %p113, %p114
      %s117 = sadd.s32 %s116, 1
      %p120 = scmp.eq.s32.totalorder %s19, 1
      %p121 = scmp.ne.s32.totalorder %s116, %s118
      %p122 = scmp.eq.s32.totalorder %s19, 0
      %p123 = por %p121, %p122
      %p124 = scmp.ne.s32.totalorder %s116, %s118
      %p125 = scmp.eq.s32.totalorder %s24, 1
      %p126 = por %p124, %p125
      %p127 = scmp.ne.s32.totalorder %s118, %s119
      %p128 = scmp.eq.s32.totalorder %s24, 0
      %p129 = por %p127, %p128
      %p130 = scmp.ne.s32.totalorder %s118, %s119
      %p131 = scmp.eq.s32.totalorder %s25, 1
      %p132 = por %p130, %p131
      %p134 = scmp.ne.s32.totalorder %s119, %s133
      %p135 = scmp.eq.s32.totalorder %s25, 0
      %p136 = por %p134, %p135
      %s138 = sadd.s32 %s137, 1
      %p141 = scmp.eq.s32.totalorder %s19, 1
      %p142 = scmp.ne.s32.totalorder %s137, %s139
      %p143 = scmp.eq.s32.totalorder %s19, 0
      %p144 = por %p142, %p143
      %p145 = scmp.ne.s32.totalorder %s137, %s139
      %p146 = scmp.eq.s32.totalorder %s24, 1
      %p147 = por %p145, %p146
      %p148 = scmp.ne.s32.totalorder %s139, %s140
      %p149 = scmp.eq.s32.totalorder %s24, 0
      %p150 = por %p148, %p149
      %p151 = scmp.ne.s32.totalorder %s139, %s140
      %p152 = scmp.eq.s32.totalorder %s25, 1
      %p153 = por %p151, %p152
      %p155 = scmp.ne.s32.totalorder %s140, %s154
      %p156 = scmp.eq.s32.totalorder %s25, 0
      %p157 = por %p155, %p156
      %s159 = sadd.s32 %s158, 1
      %p162 = scmp.eq.s32.totalorder %s19, 1
      %p163 = scmp.ne.s32.totalorder %s158, %s160
      %p164 = scmp.eq.s32.totalorder %s19, 0
      %p165 = por %p163, %p164
      %p166 = scmp.ne.s32.totalorder %s158, %s160
      %p167 = scmp.eq.s32.totalorder %s24, 1
      %p168 = por %p166, %p167
      %p169 = scmp.ne.s32.totalorder %s160, %s161
      %p170 = scmp.eq.s32.totalorder %s24, 0
      %p171 = por %p169, %p170
      %p172 = scmp.ne.s32.totalorder %s160, %s161
      %p173 = scmp.eq.s32.totalorder %s25, 1
      %p174 = por %p172, %p173
      %p176 = scmp.ne.s32.totalorder %s161, %s175
      %p177 = scmp.eq.s32.totalorder %s25, 0
      %p178 = por %p176, %p177
      %s180 = sadd.s32 %s179, 1
      %p183 = scmp.eq.s32.totalorder %s19, 1
      %p184 = scmp.ne.s32.totalorder %s179, %s181
      %p185 = scmp.eq.s32.totalorder %s19, 0
      %p186 = por %p184, %p185
      %p187 = scmp.ne.s32.totalorder %s179, %s181
      %p188 = scmp.eq.s32.totalorder %s24, 1
      %p189 = por %p187, %p188
      %p190 = scmp.ne.s32.totalorder %s181, %s182
      %p191 = scmp.eq.s32.totalorder %s24, 0
      %p192 = por %p190, %p191
      %p193 = scmp.ne.s32.totalorder %s181, %s182
      %p194 = scmp.eq.s32.totalorder %s25, 1
      %p195 = por %p193, %p194
      %p197 = scmp.ne.s32.totalorder %s182, %s196
      %p198 = scmp.eq.s32.totalorder %s25, 0
      %p199 = por %p197, %p198
      %s201 = sadd.s32 %s200, 1
      %p204 = scmp.eq.s32.totalorder %s19, 1
      %p205 = scmp.ne.s32.totalorder %s200, %s202
      %p206 = scmp.eq.s32.totalorder %s19, 0
      %p207 = por %p205, %p206
      %p208 = scmp.ne.s32.totalorder %s200, %s202
      %p209 = scmp.eq.s32.totalorder %s24, 1
      %p210 = por %p208, %p209
      %p211 = scmp.ne.s32.totalorder %s202, %s203
      %p212 = scmp.eq.s32.totalorder %s24, 0
      %p213 = por %p211, %p212
      %p214 = scmp.ne.s32.totalorder %s202, %s203
      %p215 = scmp.eq.s32.totalorder %s25, 1
      %p216 = por %p214, %p215
      %p218 = scmp.ne.s32.totalorder %s203, %s217
      %p219 = scmp.eq.s32.totalorder %s25, 0
      %p220 = por %p218, %p219
      %s222 = sadd.s32 %s221, 1
      %p225 = scmp.eq.s32.totalorder %s19, 1
      %p226 = scmp.ne.s32.totalorder %s221, %s223
      %p227 = scmp.eq.s32.totalorder %s19, 0
      %p228 = por %p226, %p227
      %p229 = scmp.ne.s32.totalorder %s221, %s223
      %p230 = scmp.eq.s32.totalorder %s24, 1
      %p231 = por %p229, %p230
      %p232 = scmp.ne.s32.totalorder %s223, %s224
      %p233 = scmp.eq.s32.totalorder %s24, 0
      %p234 = por %p232, %p233
      %p235 = scmp.ne.s32.totalorder %s223, %s224
      %p236 = scmp.eq.s32.totalorder %s25, 1
      %p237 = por %p235, %p236
      %p239 = scmp.ne.s32.totalorder %s224, %s238
      %p240 = scmp.eq.s32.totalorder %s25, 0
      %p241 = por %p239, %p240
      %s242 = ssub.s32 %s19, %s26
      %p243 = scmp.eq.s32.totalorder %s242, 0
      %s245 = sadd.s32 %s244, 1
      %s246 = scalar_select %p243, %s244, %s245
      %p249 = pneg %p243
      %p250 = scmp.eq.s32.totalorder %s19, 1
      %p251 = por %p249, %p250
      %p252 = scmp.ne.s32.totalorder %s244, %s247
      %p253 = scmp.eq.s32.totalorder %s19, 0
      %p254 = por %p252, %p253
      %p255 = scmp.ne.s32.totalorder %s244, %s247
      %p256 = scmp.eq.s32.totalorder %s24, 1
      %p257 = por %p255, %p256
      %p258 = scmp.ne.s32.totalorder %s247, %s248
      %p259 = scmp.eq.s32.totalorder %s24, 0
      %p260 = por %p258, %p259
      %p261 = scmp.ne.s32.totalorder %s247, %s248
      %p262 = scmp.eq.s32.totalorder %s25, 1
      %p263 = por %p261, %p262
      %p265 = scmp.ne.s32.totalorder %s248, %s264
      %p266 = scmp.eq.s32.totalorder %s25, 0
      %p267 = por %p265, %p266
      %p268 = scmp.le.s32.totalorder 1, %s19
      %p269 = scmp.lt.s32.totalorder %s19, 3
      %p270 = pnand %p268, %p269
      %p271 = pneg %p270
      // Predicated region
      $region9: #{tpu_custom_call.1} parent=5 // pred_check
        _
      $region10: #{tpu_custom_call.1} parent=5 // pred_check_branch
        %273 = sbr.rel (%p270) target = $region12
      $region11: #{tpu_custom_call.1} parent=5 // pred_region
        %s274 = ssub.s32 %s19, 1
        // Predicated region
        $region13: #{tpu_custom_call.1} parent=11 // pred_check
          %p275 = pneg %p66
        $region14: #{tpu_custom_call.1} parent=11 // pred_check_branch
          %277 = sbr.rel (%p275) target = $region16
        $region15: #{tpu_custom_call.1} parent=11 // pred_region
          _
        $region16: #{tpu_custom_call.1} parent=11 // pred_fallthru
          _
        // Predicated region
        $region17: #{tpu_custom_call.1} parent=11 // pred_check
          %p278 = pneg %p87
        $region18: #{tpu_custom_call.1} parent=11 // pred_check_branch
          %280 = sbr.rel (%p278) target = $region20
        $region19: #{tpu_custom_call.1} parent=11 // pred_region
          _
        $region20: #{tpu_custom_call.1} parent=11 // pred_fallthru
          _
        // Predicated region
        $region21: #{tpu_custom_call.1} parent=11 // pred_check
          %p281 = pneg %p108
        $region22: #{tpu_custom_call.1} parent=11 // pred_check_branch
          %283 = sbr.rel (%p281) target = $region24
        $region23: #{tpu_custom_call.1} parent=11 // pred_region
          _
        $region24: #{tpu_custom_call.1} parent=11 // pred_fallthru
          _
        // Predicated region
        $region25: #{tpu_custom_call.1} parent=11 // pred_check
          %p284 = pneg %p129
        $region26: #{tpu_custom_call.1} parent=11 // pred_check_branch
          %286 = sbr.rel (%p284) target = $region28
        $region27: #{tpu_custom_call.1} parent=11 // pred_region
          _
        $region28: #{tpu_custom_call.1} parent=11 // pred_fallthru
          _
        // Predicated region
        $region29: #{tpu_custom_call.1} parent=11 // pred_check
          %p287 = pneg %p150
        $region30: #{tpu_custom_call.1} parent=11 // pred_check_branch
          %289 = sbr.rel (%p287) target = $region32
        $region31: #{tpu_custom_call.1} parent=11 // pred_region
          _
        $region32: #{tpu_custom_call.1} parent=11 // pred_fallthru
          _
        // Predicated region
        $region33: #{tpu_custom_call.1} parent=11 // pred_check
          %p290 = pneg %p171
        $region34: #{tpu_custom_call.1} parent=11 // pred_check_branch
          %292 = sbr.rel (%p290) target = $region36
        $region35: #{tpu_custom_call.1} parent=11 // pred_region
          _
        $region36: #{tpu_custom_call.1} parent=11 // pred_fallthru
          _
        // Predicated region
        $region37: #{tpu_custom_call.1} parent=11 // pred_check
          %p293 = pneg %p192
        $region38: #{tpu_custom_call.1} parent=11 // pred_check_branch
          %295 = sbr.rel (%p293) target = $region40
        $region39: #{tpu_custom_call.1} parent=11 // pred_region
          _
        $region40: #{tpu_custom_call.1} parent=11 // pred_fallthru
          _
        // Predicated region
        $region41: #{tpu_custom_call.1} parent=11 // pred_check
          %p296 = pneg %p213
        $region42: #{tpu_custom_call.1} parent=11 // pred_check_branch
          %298 = sbr.rel (%p296) target = $region44
        $region43: #{tpu_custom_call.1} parent=11 // pred_region
          _
        $region44: #{tpu_custom_call.1} parent=11 // pred_fallthru
          _
        // Predicated region
        $region45: #{tpu_custom_call.1} parent=11 // pred_check
          %p299 = pneg %p234
        $region46: #{tpu_custom_call.1} parent=11 // pred_check_branch
          %301 = sbr.rel (%p299) target = $region48
        $region47: #{tpu_custom_call.1} parent=11 // pred_region
          _
        $region48: #{tpu_custom_call.1} parent=11 // pred_fallthru
          _
      $region12: #{tpu_custom_call.1} parent=5 // pred_fallthru
        _
      %p302 = scmp.lt.s32.totalorder %s19, 2
      // Predicated region
      $region49: #{tpu_custom_call.1} parent=5 // pred_check
        %p303 = pneg %p302
      $region50: #{tpu_custom_call.1} parent=5 // pred_check_branch
        %305 = sbr.rel (%p303) target = $region52
      $region51: #{tpu_custom_call.1} parent=5 // pred_region
        // Predicated region
        $region53: #{tpu_custom_call.1} parent=51 // pred_check
          %p306 = pneg %p39
        $region54: #{tpu_custom_call.1} parent=51 // pred_check_branch
          %308 = sbr.rel (%p306) target = $region56
        $region55: #{tpu_custom_call.1} parent=51 // pred_region
          %p309 = scmp.lt.s32.totalorder %s19, 1
          %s310 = scalar_select %p309, %s19, 1
          %s311 = smul.addr %s310, 8
          %s312 = scalar_lea.vmem %s0, %s311
        $region56: #{tpu_custom_call.1} parent=51 // pred_fallthru
          _
      $region52: #{tpu_custom_call.1} parent=5 // pred_fallthru
        _
      %p313 = scmp.le.s32.totalorder 1, %s19
      %p314 = scmp.lt.s32.totalorder %s19, 3
      %p315 = pnand %p313, %p314
      %p316 = pneg %p315
      // Predicated region
      $region57: #{tpu_custom_call.1} parent=5 // pred_check
        _
      $region58: #{tpu_custom_call.1} parent=5 // pred_check_branch
        %318 = sbr.rel (%p315) target = $region60
      $region59: #{tpu_custom_call.1} parent=5 // pred_region
        %s319 = ssub.s32 %s19, 1
        %p320 = scmp.lt.s32.totalorder %s24, 1
        %s321 = scalar_select %p320, %s24, 1
        %s322 = smul.addr %s321, 8
        %s323 = scalar_lea.vmem %s0, %s322
        %p324 = pneg %p45
        %p325 = pneg %p42
        %p326 = pneg %p66
        %p327 = pneg %p63
        %p328 = pneg %p87
        %p329 = pneg %p84
        %p330 = pneg %p108
        %p331 = pneg %p105
        %p332 = pneg %p129
        %p333 = pneg %p126
        %p334 = pneg %p150
        %p335 = pneg %p147
        %p336 = pneg %p171
        %p337 = pneg %p168
        %p338 = pneg %p192
        %p339 = pneg %p189
        %p340 = pneg %p213
        %p341 = pneg %p210
        %p342 = pneg %p234
        %p343 = pneg %p231
        %p344 = pneg %p260
        %p345 = pneg %p257
        %s346 = sand.u32 %s247, 1
        %s347 = scalar_lea.sflag [#allocation3], %s346
        %s348 = sand.u32 %s247, 1
        %s349 = smul.addr %s348, 8
        %s350 = scalar_lea.vmem [#allocation2], %s349
        %p351 = scmp.lt.s32.totalorder %s24, 1
        %s352 = scalar_select %p351, %s24, 1
        %s353 = smul.addr %s352, 8
        %s354 = scalar_lea.vmem %s0, %s353
        %v356 = vld [vmem:[%s354] sm:$0xff]
        %vm357 = vcmask 261120
        %v358 = vsel %vm357, %v356, 0.0
        %359 = vadd.xlane.f32.xlu0 %v358
        %v360 = vpop.xlane.xlu0 %359
        %v361 = vrcp.pop 32.0
        %v362 = vmul.f32 %v360, %v361
        %v363 = vsub.f32 %v356, %v362
        %v364 = vmul.f32 %v363, %v363
        %v365 = vsel %vm357, %v364, 0.0
        %366 = vadd.xlane.f32.xlu0 %v365
        %v367 = vpop.xlane.xlu0 %366
        %v368 = vmul.f32 %v367, %v361
        %v369 = vadd.f32 %v368, 1e-05
        %v370 = vrsqrt.pop %v369
        %v371 = vmul.f32 %v363, %v370
        %v372 = vpack.c.bf16 %v371, %v371
        %v373 = vld [vmem:[%s2] sm:$0xff]
        %v374 = vld [vmem:[%s2 + $0x8] sm:$0xff]
        %v375 = vld [vmem:[%s2 + $0x10] sm:$0xff]
        %v376 = vld [vmem:[%s2 + $0x18] sm:$0xff]
        %v377 = vld [vmem:[%s3] sm:$0x3]
        %v379 = vlaneseq
        %v380 = vshrl.u32 %v379, 7
        %v381 = vsub.s32 0, %v380
        %v382 = vrot.slane %v377, %v381
        %v383 = vlaneseq
        %v384 = vshrl.u32 %v383, 7
        %v385 = vsub.s32 1, %v384
        %v386 = vrot.slane %v377, %v385
        %v393 = vunpack.c.l.b16 %v373
        %v394 = vunpack.c.h.b16 %v373
        %v395 = vunpack.c.l.b16 %v374
        %v396 = vunpack.c.h.b16 %v374
        %v397 = vunpack.c.l.b16 %v375
        %v398 = vunpack.c.h.b16 %v375
        %v399 = vunpack.c.l.b16 %v376
        %v400 = vunpack.c.h.b16 %v376
        %v401 = vpack.c.b16 %v395, %v393
        %v402 = vpack.c.b16 %v396, %v394
        %v403 = vpack.c.b16 %v399, %v397
        %v404 = vpack.c.b16 %v400, %v398
        %v410 = vsel %vm357, %v372, 0
        %412 = vmatprep.subr.bf16.mxu0 0
        %413 = vmatpush1.bf16.msra.mxu0 0
        %414 = vmatprep.subr.bf16.mxu0 0
        %415 = vmatpush1.bf16.msra.mxu0 0
        %416 = vmatprep.subr.bf16.mxu0 0
        %417 = vmatpush1.bf16.msra.mxu0 0
        %418 = vmatprep.subr.bf16.mxu0 0
        %419 = vmatpush1.bf16.msra.mxu0 0
        %420 = vmatprep.subr.bf16.mxu0 0
        %421 = vmatpush1.bf16.msra.mxu0 0
        %422 = vmatprep.subr.bf16.mxu0 0
        %423 = vmatpush1.bf16.msra.mxu0 0
        %424 = vmatprep.subr.bf16.mxu0 %v404
        %425 = vmatpush1.bf16.msra.mxu0 %v403
        %426 = vmatprep.subr.bf16.mxu0 %v402
        %427 = vmatpush1.bf16.msra.mxu0 %v401
        %428 = vmatprep.subr.bf16.mxu0 0
        %429 = vmatpush2.bf16.msra.mxu0 0
        %430 = vmatprep.subr.bf16.mxu0 0
        %431 = vmatpush2.bf16.msra.mxu0 0
        %432 = vmatprep.subr.bf16.mxu0 0
        %433 = vmatpush2.bf16.msra.mxu0 0
        %434 = vmatprep.subr.bf16.mxu0 0
        %435 = vmatpush2.bf16.msra.mxu0 0
        %436 = vmatprep.subr.bf16.mxu0 0
        %437 = vmatpush2.bf16.msra.mxu0 0
        %438 = vmatprep.subr.bf16.mxu0 0
        %439 = vmatpush2.bf16.msra.mxu0 0
        %440 = vmatprep.subr.bf16.mxu0 0
        %441 = vmatpush2.bf16.msra.mxu0 0
        %442 = vmatprep.subr.bf16.mxu0 0
        %443 = vmatpush2.bf16.msra.mxu0 0
        %444 = vmatprep.mubr.bf16.mxu0 0
        %445 = vmatmul.mubr.bf16.gmra.mxu0 %v410
        %v446 = vpop.f32.mrf.mxu0
        %v447 = vadd.f32 %v382, %v446
        %v448 = vpop.f32.mrf.mxu0
        %v449 = vadd.f32 %v386, %v448
        %v450 = vpop.f32.mrf.mxu0
        %v451 = vpop.f32.mrf.mxu0
        %452 = vdwg.mxu0
        %v453 = vld [vmem:[%s1] sm:$0xff]
        %s454 = scalar_lea.vmem %s1, 8
        %v455 = vld [vmem:[%s454] sm:$0xff]
        %v456 = vmul.f32 %v447, 0.25
        %v457 = vpack.c.bf16 %v456, %v456
        %v458 = vpack.c.bf16 %v447, %v447
        %460 = vrot.lane.b32.xlu0 %v458, 96
        %v461 = vpop.permute.xlu0 %460
        %vm462 = vcmask 130048
        %v464 = vsel %vm462, %v457, 0
        %v467 = vsel %vm462, %v461, 0
        %469 = vmatprep.subr.bf16.mxu0 0
        %470 = vmatpush1.bf16.xpose.msra.mxu0 0
        %471 = vmatprep.subr.bf16.mxu0 0
        %472 = vmatpush1.bf16.xpose.msra.mxu0 0
        %473 = vmatprep.subr.bf16.mxu0 0
        %474 = vmatpush1.bf16.xpose.msra.mxu0 0
        %475 = vmatprep.subr.bf16.mxu0 0
        %476 = vmatpush1.bf16.xpose.msra.mxu0 0
        %477 = vmatprep.subr.bf16.mxu0 0
        %478 = vmatpush1.bf16.xpose.msra.mxu0 0
        %479 = vmatprep.subr.bf16.mxu0 0
        %480 = vmatpush1.bf16.xpose.msra.mxu0 0
        %481 = vmatprep.subr.bf16.mxu0 0
        %482 = vmatpush1.bf16.xpose.msra.mxu0 0
        %483 = vmatprep.subr.bf16.mxu0 0
        %484 = vmatpush1.bf16.xpose.msra.mxu0 %v467
        %485 = vmatprep.subr.bf16.mxu0 0
        %486 = vmatpush2.bf16.xpose.msra.mxu0 0
        %487 = vmatprep.subr.bf16.mxu0 0
        %488 = vmatpush2.bf16.xpose.msra.mxu0 0
        %489 = vmatprep.subr.bf16.mxu0 0
        %490 = vmatpush2.bf16.xpose.msra.mxu0 0
        %491 = vmatprep.subr.bf16.mxu0 0
        %492 = vmatpush2.bf16.xpose.msra.mxu0 0
        %493 = vmatprep.subr.bf16.mxu0 0
        %494 = vmatpush2.bf16.xpose.msra.mxu0 0
        %495 = vmatprep.subr.bf16.mxu0 0
        %496 = vmatpush2.bf16.xpose.msra.mxu0 0
        %497 = vmatprep.subr.bf16.mxu0 0
        %498 = vmatpush2.bf16.xpose.msra.mxu0 0
        %499 = vmatprep.subr.bf16.mxu0 0
        %500 = vmatpush2.bf16.xpose.msra.mxu0 0
        %501 = vmatprep.mubr.bf16.mxu0 0
        %502 = vmatmul.mubr.bf16.gmra.mxu0 %v464
        %v503 = vpop.f32.mrf.mxu0
        %v504 = vadd.f32 %v453, %v503
        %v505 = vpop.f32.mrf.mxu0
        %v506 = vpop.f32.mrf.mxu0
        %v507 = vpop.f32.mrf.mxu0
        %508 = vdwg.mxu0
        %vm509 = vcmask 64512
        %v510 = vsel %vm509, %v504, -inf
        %511 = vmax.xlane.f32.xlu0 %v510
        %v512 = vpop.xlane.xlu0 %511
        %v513 = vsub.f32 %v504, %v512
        %v514 = vmul.f32 %v513, 1.442695
        %v515 = vpow.pop %v514
        %v516 = vsel %vm509, %v515, 0.0
        %517 = vadd.xlane.f32.xlu0 %v516
        %v518 = vpop.xlane.xlu0 %517
        %v519 = vrcp.pop %v518
        %v520 = vmul.f32 %v515, %v519
        %v521 = vpack.c.bf16 %v520, %v520
        %522 = vrot.lane.b32.xlu0 %v458, 64
        %v523 = vpop.permute.xlu0 %522
        %v525 = vsel %vm509, %v521, 0
        %vm527 = vcmask 1043456
        %v529 = vsel %vm527, %v523, 0
        %531 = vmatprep.subr.bf16.mxu0 0
        %532 = vmatpush1.bf16.msra.mxu0 0
        %533 = vmatprep.subr.bf16.mxu0 0
        %534 = vmatpush1.bf16.msra.mxu0 0
        %535 = vmatprep.subr.bf16.mxu0 0
        %536 = vmatpush1.bf16.msra.mxu0 0
        %537 = vmatprep.subr.bf16.mxu0 0
        %538 = vmatpush1.bf16.msra.mxu0 0
        %539 = vmatprep.subr.bf16.mxu0 0
        %540 = vmatpush1.bf16.msra.mxu0 0
        %541 = vmatprep.subr.bf16.mxu0 0
        %542 = vmatpush1.bf16.msra.mxu0 0
        %543 = vmatprep.subr.bf16.mxu0 0
        %544 = vmatpush1.bf16.msra.mxu0 0
        %545 = vmatprep.subr.bf16.mxu0 0
        %546 = vmatpush1.bf16.msra.mxu0 %v529
        %547 = vmatprep.subr.bf16.mxu0 0
        %548 = vmatpush2.bf16.msra.mxu0 0
        %549 = vmatprep.subr.bf16.mxu0 0
        %550 = vmatpush2.bf16.msra.mxu0 0
        %551 = vmatprep.subr.bf16.mxu0 0
        %552 = vmatpush2.bf16.msra.mxu0 0
        %553 = vmatprep.subr.bf16.mxu0 0
        %554 = vmatpush2.bf16.msra.mxu0 0
        %555 = vmatprep.subr.bf16.mxu0 0
        %556 = vmatpush2.bf16.msra.mxu0 0
        %557 = vmatprep.subr.bf16.mxu0 0
        %558 = vmatpush2.bf16.msra.mxu0 0
        %559 = vmatprep.subr.bf16.mxu0 0
        %560 = vmatpush2.bf16.msra.mxu0 0
        %561 = vmatprep.subr.bf16.mxu0 0
        %562 = vmatpush2.bf16.msra.mxu0 0
        %563 = vmatprep.mubr.bf16.mxu0 0
        %564 = vmatmul.mubr.bf16.gmra.mxu0 %v525
        %v565 = vpop.f32.mrf.mxu0
        %v566 = vadd.f32 0.0, %v565
        %v567 = vpop.f32.mrf.mxu0
        %v568 = vpop.f32.mrf.mxu0
        %v569 = vpop.f32.mrf.mxu0
        %570 = vdwg.mxu0
        %572 = vrot.lane.b32.xlu0 %v457, 112
        %v573 = vpop.permute.xlu0 %572
        %574 = vrot.lane.b32.xlu0 %v458, 80
        %v575 = vpop.permute.xlu0 %574
        %v577 = vsel %vm462, %v573, 0
        %v580 = vsel %vm462, %v575, 0
        %582 = vmatprep.subr.bf16.mxu0 0
        %583 = vmatpush1.bf16.xpose.msra.mxu0 0
        %584 = vmatprep.subr.bf16.mxu0 0
        %585 = vmatpush1.bf16.xpose.msra.mxu0 0
        %586 = vmatprep.subr.bf16.mxu0 0
        %587 = vmatpush1.bf16.xpose.msra.mxu0 0
        %588 = vmatprep.subr.bf16.mxu0 0
        %589 = vmatpush1.bf16.xpose.msra.mxu0 0
        %590 = vmatprep.subr.bf16.mxu0 0
        %591 = vmatpush1.bf16.xpose.msra.mxu0 0
        %592 = vmatprep.subr.bf16.mxu0 0
        %593 = vmatpush1.bf16.xpose.msra.mxu0 0
        %594 = vmatprep.subr.bf16.mxu0 0
        %595 = vmatpush1.bf16.xpose.msra.mxu0 0
        %596 = vmatprep.subr.bf16.mxu0 0
        %597 = vmatpush1.bf16.xpose.msra.mxu0 %v580
        %598 = vmatprep.subr.bf16.mxu0 0
        %599 = vmatpush2.bf16.xpose.msra.mxu0 0
        %600 = vmatprep.subr.bf16.mxu0 0
        %601 = vmatpush2.bf16.xpose.msra.mxu0 0
        %602 = vmatprep.subr.bf16.mxu0 0
        %603 = vmatpush2.bf16.xpose.msra.mxu0 0
        %604 = vmatprep.subr.bf16.mxu0 0
        %605 = vmatpush2.bf16.xpose.msra.mxu0 0
        %606 = vmatprep.subr.bf16.mxu0 0
        %607 = vmatpush2.bf16.xpose.msra.mxu0 0
        %608 = vmatprep.subr.bf16.mxu0 0
        %609 = vmatpush2.bf16.xpose.msra.mxu0 0
        %610 = vmatprep.subr.bf16.mxu0 0
        %611 = vmatpush2.bf16.xpose.msra.mxu0 0
        %612 = vmatprep.subr.bf16.mxu0 0
        %613 = vmatpush2.bf16.xpose.msra.mxu0 0
        %614 = vmatprep.mubr.bf16.mxu0 0
        %615 = vmatmul.mubr.bf16.gmra.mxu0 %v577
        %v616 = vpop.f32.mrf.mxu0
        %v617 = vadd.f32 %v453, %v616
        %v618 = vpop.f32.mrf.mxu0
        %v619 = vpop.f32.mrf.mxu0
        %v620 = vpop.f32.mrf.mxu0
        %621 = vdwg.mxu0
        %v622 = vsel %vm509, %v617, -inf
        %623 = vmax.xlane.f32.xlu0 %v622
        %v624 = vpop.xlane.xlu0 %623
        %v625 = vsub.f32 %v617, %v624
        %v626 = vmul.f32 %v625, 1.442695
        %v627 = vpow.pop %v626
        %v628 = vsel %vm509, %v627, 0.0
        %629 = vadd.xlane.f32.xlu0 %v628
        %v630 = vpop.xlane.xlu0 %629
        %v631 = vrcp.pop %v630
        %v632 = vmul.f32 %v627, %v631
        %v633 = vpack.c.bf16 %v632, %v632
        %634 = vrot.lane.b32.xlu0 %v458, 48
        %v635 = vpop.permute.xlu0 %634
        %v637 = vsel %vm509, %v633, 0
        %v640 = vsel %vm527, %v635, 0
        %642 = vmatprep.subr.bf16.mxu0 0
        %643 = vmatpush1.bf16.msra.mxu0 0
        %644 = vmatprep.subr.bf16.mxu0 0
        %645 = vmatpush1.bf16.msra.mxu0 0
        %646 = vmatprep.subr.bf16.mxu0 0
        %647 = vmatpush1.bf16.msra.mxu0 0
        %648 = vmatprep.subr.bf16.mxu0 0
        %649 = vmatpush1.bf16.msra.mxu0 0
        %650 = vmatprep.subr.bf16.mxu0 0
        %651 = vmatpush1.bf16.msra.mxu0 0
        %652 = vmatprep.subr.bf16.mxu0 0
        %653 = vmatpush1.bf16.msra.mxu0 0
        %654 = vmatprep.subr.bf16.mxu0 0
        %655 = vmatpush1.bf16.msra.mxu0 0
        %656 = vmatprep.subr.bf16.mxu0 0
        %657 = vmatpush1.bf16.msra.mxu0 %v640
        %658 = vmatprep.subr.bf16.mxu0 0
        %659 = vmatpush2.bf16.msra.mxu0 0
        %660 = vmatprep.subr.bf16.mxu0 0
        %661 = vmatpush2.bf16.msra.mxu0 0
        %662 = vmatprep.subr.bf16.mxu0 0
        %663 = vmatpush2.bf16.msra.mxu0 0
        %664 = vmatprep.subr.bf16.mxu0 0
        %665 = vmatpush2.bf16.msra.mxu0 0
        %666 = vmatprep.subr.bf16.mxu0 0
        %667 = vmatpush2.bf16.msra.mxu0 0
        %668 = vmatprep.subr.bf16.mxu0 0
        %669 = vmatpush2.bf16.msra.mxu0 0
        %670 = vmatprep.subr.bf16.mxu0 0
        %671 = vmatpush2.bf16.msra.mxu0 0
        %672 = vmatprep.subr.bf16.mxu0 0
        %673 = vmatpush2.bf16.msra.mxu0 0
        %674 = vmatprep.mubr.bf16.mxu0 0
        %675 = vmatmul.mubr.bf16.gmra.mxu0 %v637
        %v676 = vpop.f32.mrf.mxu0
        %v677 = vadd.f32 0.0, %v676
        %v678 = vpop.f32.mrf.mxu0
        %v679 = vpop.f32.mrf.mxu0
        %v680 = vpop.f32.mrf.mxu0
        %681 = vdwg.mxu0
        %v682 = vpack.c.bf16 %v449, %v449
        %683 = vrot.lane.b32.xlu0 %v457, 32
        %v684 = vpop.permute.xlu0 %683
        %v686 = vsel %vm462, %v684, 0
        %v689 = vsel %vm462, %v682, 0
        %691 = vmatprep.subr.bf16.mxu0 0
        %692 = vmatpush1.bf16.xpose.msra.mxu0 0
        %693 = vmatprep.subr.bf16.mxu0 0
        %694 = vmatpush1.bf16.xpose.msra.mxu0 0
        %695 = vmatprep.subr.bf16.mxu0 0
        %696 = vmatpush1.bf16.xpose.msra.mxu0 0
        %697 = vmatprep.subr.bf16.mxu0 0
        %698 = vmatpush1.bf16.xpose.msra.mxu0 0
        %699 = vmatprep.subr.bf16.mxu0 0
        %700 = vmatpush1.bf16.xpose.msra.mxu0 0
        %701 = vmatprep.subr.bf16.mxu0 0
        %702 = vmatpush1.bf16.xpose.msra.mxu0 0
        %703 = vmatprep.subr.bf16.mxu0 0
        %704 = vmatpush1.bf16.xpose.msra.mxu0 0
        %705 = vmatprep.subr.bf16.mxu0 0
        %706 = vmatpush1.bf16.xpose.msra.mxu0 %v689
        %707 = vmatprep.subr.bf16.mxu0 0
        %708 = vmatpush2.bf16.xpose.msra.mxu0 0
        %709 = vmatprep.subr.bf16.mxu0 0
        %710 = vmatpush2.bf16.xpose.msra.mxu0 0
        %711 = vmatprep.subr.bf16.mxu0 0
        %712 = vmatpush2.bf16.xpose.msra.mxu0 0
        %713 = vmatprep.subr.bf16.mxu0 0
        %714 = vmatpush2.bf16.xpose.msra.mxu0 0
        %715 = vmatprep.subr.bf16.mxu0 0
        %716 = vmatpush2.bf16.xpose.msra.mxu0 0
        %717 = vmatprep.subr.bf16.mxu0 0
        %718 = vmatpush2.bf16.xpose.msra.mxu0 0
        %719 = vmatprep.subr.bf16.mxu0 0
        %720 = vmatpush2.bf16.xpose.msra.mxu0 0
        %721 = vmatprep.subr.bf16.mxu0 0
        %722 = vmatpush2.bf16.xpose.msra.mxu0 0
        %723 = vmatprep.mubr.bf16.mxu0 0
        %724 = vmatmul.mubr.bf16.gmra.mxu0 %v686
        %v725 = vpop.f32.mrf.mxu0
        %v726 = vadd.f32 %v455, %v725
        %v727 = vpop.f32.mrf.mxu0
        %v728 = vpop.f32.mrf.mxu0
        %v729 = vpop.f32.mrf.mxu0
        %730 = vdwg.mxu0
        %v731 = vsel %vm509, %v726, -inf
        %732 = vmax.xlane.f32.xlu0 %v731
        %v733 = vpop.xlane.xlu0 %732
        %v734 = vsub.f32 %v726, %v733
        %v735 = vmul.f32 %v734, 1.442695
        %v736 = vpow.pop %v735
        %v737 = vsel %vm509, %v736, 0.0
        %738 = vadd.xlane.f32.xlu0 %v737
        %v739 = vpop.xlane.xlu0 %738
        %v740 = vrcp.pop %v739
        %v741 = vmul.f32 %v736, %v740
        %v742 = vpack.c.bf16 %v741, %v741
        %744 = vrot.lane.b32.xlu0 %v682, 96
        %v745 = vpop.permute.xlu0 %744
        %v747 = vsel %vm509, %v742, 0
        %v750 = vsel %vm527, %v745, 0
        %752 = vmatprep.subr.bf16.mxu0 0
        %753 = vmatpush1.bf16.msra.mxu0 0
        %754 = vmatprep.subr.bf16.mxu0 0
        %755 = vmatpush1.bf16.msra.mxu0 0
        %756 = vmatprep.subr.bf16.mxu0 0
        %757 = vmatpush1.bf16.msra.mxu0 0
        %758 = vmatprep.subr.bf16.mxu0 0
        %759 = vmatpush1.bf16.msra.mxu0 0
        %760 = vmatprep.subr.bf16.mxu0 0
        %761 = vmatpush1.bf16.msra.mxu0 0
        %762 = vmatprep.subr.bf16.mxu0 0
        %763 = vmatpush1.bf16.msra.mxu0 0
        %764 = vmatprep.subr.bf16.mxu0 0
        %765 = vmatpush1.bf16.msra.mxu0 0
        %766 = vmatprep.subr.bf16.mxu0 0
        %767 = vmatpush1.bf16.msra.mxu0 %v750
        %768 = vmatprep.subr.bf16.mxu0 0
        %769 = vmatpush2.bf16.msra.mxu0 0
        %770 = vmatprep.subr.bf16.mxu0 0
        %771 = vmatpush2.bf16.msra.mxu0 0
        %772 = vmatprep.subr.bf16.mxu0 0
        %773 = vmatpush2.bf16.msra.mxu0 0
        %774 = vmatprep.subr.bf16.mxu0 0
        %775 = vmatpush2.bf16.msra.mxu0 0
        %776 = vmatprep.subr.bf16.mxu0 0
        %777 = vmatpush2.bf16.msra.mxu0 0
        %778 = vmatprep.subr.bf16.mxu0 0
        %779 = vmatpush2.bf16.msra.mxu0 0
        %780 = vmatprep.subr.bf16.mxu0 0
        %781 = vmatpush2.bf16.msra.mxu0 0
        %782 = vmatprep.subr.bf16.mxu0 0
        %783 = vmatpush2.bf16.msra.mxu0 0
        %784 = vmatprep.mubr.bf16.mxu0 0
        %785 = vmatmul.mubr.bf16.gmra.mxu0 %v747
        %v786 = vpop.f32.mrf.mxu0
        %v787 = vadd.f32 0.0, %v786
        %v788 = vpop.f32.mrf.mxu0
        %v789 = vpop.f32.mrf.mxu0
        %v790 = vpop.f32.mrf.mxu0
        %791 = vdwg.mxu0
        %792 = vrot.lane.b32.xlu0 %v457, 16
        %v793 = vpop.permute.xlu0 %792
        %794 = vrot.lane.b32.xlu0 %v682, 112
        %v795 = vpop.permute.xlu0 %794
        %v797 = vsel %vm462, %v793, 0
        %v800 = vsel %vm462, %v795, 0
        %802 = vmatprep.subr.bf16.mxu0 0
        %803 = vmatpush1.bf16.xpose.msra.mxu0 0
        %804 = vmatprep.subr.bf16.mxu0 0
        %805 = vmatpush1.bf16.xpose.msra.mxu0 0
        %806 = vmatprep.subr.bf16.mxu0 0
        %807 = vmatpush1.bf16.xpose.msra.mxu0 0
        %808 = vmatprep.subr.bf16.mxu0 0
        %809 = vmatpush1.bf16.xpose.msra.mxu0 0
        %810 = vmatprep.subr.bf16.mxu0 0
        %811 = vmatpush1.bf16.xpose.msra.mxu0 0
        %812 = vmatprep.subr.bf16.mxu0 0
        %813 = vmatpush1.bf16.xpose.msra.mxu0 0
        %814 = vmatprep.subr.bf16.mxu0 0
        %815 = vmatpush1.bf16.xpose.msra.mxu0 0
        %816 = vmatprep.subr.bf16.mxu0 0
        %817 = vmatpush1.bf16.xpose.msra.mxu0 %v800
        %818 = vmatprep.subr.bf16.mxu0 0
        %819 = vmatpush2.bf16.xpose.msra.mxu0 0
        %820 = vmatprep.subr.bf16.mxu0 0
        %821 = vmatpush2.bf16.xpose.msra.mxu0 0
        %822 = vmatprep.subr.bf16.mxu0 0
        %823 = vmatpush2.bf16.xpose.msra.mxu0 0
        %824 = vmatprep.subr.bf16.mxu0 0
        %825 = vmatpush2.bf16.xpose.msra.mxu0 0
        %826 = vmatprep.subr.bf16.mxu0 0
        %827 = vmatpush2.bf16.xpose.msra.mxu0 0
        %828 = vmatprep.subr.bf16.mxu0 0
        %829 = vmatpush2.bf16.xpose.msra.mxu0 0
        %830 = vmatprep.subr.bf16.mxu0 0
        %831 = vmatpush2.bf16.xpose.msra.mxu0 0
        %832 = vmatprep.subr.bf16.mxu0 0
        %833 = vmatpush2.bf16.xpose.msra.mxu0 0
        %834 = vmatprep.mubr.bf16.mxu0 0
        %835 = vmatmul.mubr.bf16.gmra.mxu0 %v797
        %v836 = vpop.f32.mrf.mxu0
        %v837 = vadd.f32 %v455, %v836
        %v838 = vpop.f32.mrf.mxu0
        %v839 = vpop.f32.mrf.mxu0
        %v840 = vpop.f32.mrf.mxu0
        %841 = vdwg.mxu0
        %v842 = vsel %vm509, %v837, -inf
        %843 = vmax.xlane.f32.xlu0 %v842
        %v844 = vpop.xlane.xlu0 %843
        %v845 = vsub.f32 %v837, %v844
        %v846 = vmul.f32 %v845, 1.442695
        %v847 = vpow.pop %v846
        %v848 = vsel %vm509, %v847, 0.0
        %849 = vadd.xlane.f32.xlu0 %v848
        %v850 = vpop.xlane.xlu0 %849
        %v851 = vrcp.pop %v850
        %v852 = vmul.f32 %v847, %v851
        %v853 = vpack.c.bf16 %v852, %v852
        %854 = vrot.lane.b32.xlu0 %v682, 80
        %v855 = vpop.permute.xlu0 %854
        %v857 = vsel %vm509, %v853, 0
        %v860 = vsel %vm527, %v855, 0
        %862 = vmatprep.subr.bf16.mxu0 0
        %863 = vmatpush1.bf16.msra.mxu0 0
        %864 = vmatprep.subr.bf16.mxu0 0
        %865 = vmatpush1.bf16.msra.mxu0 0
        %866 = vmatprep.subr.bf16.mxu0 0
        %867 = vmatpush1.bf16.msra.mxu0 0
        %868 = vmatprep.subr.bf16.mxu0 0
        %869 = vmatpush1.bf16.msra.mxu0 0
        %870 = vmatprep.subr.bf16.mxu0 0
        %871 = vmatpush1.bf16.msra.mxu0 0
        %872 = vmatprep.subr.bf16.mxu0 0
        %873 = vmatpush1.bf16.msra.mxu0 0
        %874 = vmatprep.subr.bf16.mxu0 0
        %875 = vmatpush1.bf16.msra.mxu0 0
        %876 = vmatprep.subr.bf16.mxu0 0
        %877 = vmatpush1.bf16.msra.mxu0 %v860
        %878 = vmatprep.subr.bf16.mxu0 0
        %879 = vmatpush2.bf16.msra.mxu0 0
        %880 = vmatprep.subr.bf16.mxu0 0
        %881 = vmatpush2.bf16.msra.mxu0 0
        %882 = vmatprep.subr.bf16.mxu0 0
        %883 = vmatpush2.bf16.msra.mxu0 0
        %884 = vmatprep.subr.bf16.mxu0 0
        %885 = vmatpush2.bf16.msra.mxu0 0
        %886 = vmatprep.subr.bf16.mxu0 0
        %887 = vmatpush2.bf16.msra.mxu0 0
        %888 = vmatprep.subr.bf16.mxu0 0
        %889 = vmatpush2.bf16.msra.mxu0 0
        %890 = vmatprep.subr.bf16.mxu0 0
        %891 = vmatpush2.bf16.msra.mxu0 0
        %892 = vmatprep.subr.bf16.mxu0 0
        %893 = vmatpush2.bf16.msra.mxu0 0
        %894 = vmatprep.mubr.bf16.mxu0 0
        %895 = vmatmul.mubr.bf16.gmra.mxu0 %v857
        %v896 = vpop.f32.mrf.mxu0
        %v897 = vadd.f32 0.0, %v896
        %v898 = vpop.f32.mrf.mxu0
        %v899 = vpop.f32.mrf.mxu0
        %v900 = vpop.f32.mrf.mxu0
        %901 = vdwg.mxu0
        %903 = vrot.lane.b32.xlu0 %v677, 16
        %v904 = vpop.permute.xlu0 %903
        %907 = vrot.lane.b32.xlu0 %v787, 32
        %v908 = vpop.permute.xlu0 %907
        %911 = vrot.lane.b32.xlu0 %v897, 48
        %v912 = vpop.permute.xlu0 %911
        %v914 = vsel %vm462, %v566, %v904
        %v915 = vsel %vm357, %v914, %v908
        %vm916 = vcmask 392192
        %v917 = vsel %vm916, %v915, %v912
        %v918 = vpack.c.bf16 %v917, %v917
        %v919 = vld [vmem:[%s4] sm:$0xf]
        %v920 = vld [vmem:[%s4 + $0x4] sm:$0xf]
        %v921 = vld [vmem:[%s4 + $0x8] sm:$0xf]
        %v922 = vld [vmem:[%s4 + $0xc] sm:$0xf]
        %v923 = vld [vmem:[%s4 + $0x10] sm:$0xf]
        %v924 = vld [vmem:[%s4 + $0x14] sm:$0xf]
        %v925 = vld [vmem:[%s4 + $0x18] sm:$0xf]
        %v926 = vld [vmem:[%s4 + $0x1c] sm:$0xf]
        %v927 = vld [vmem:[%s5] sm:$0x1]
        %v929 = vlaneseq
        %v930 = vshrl.u32 %v929, 7
        %v931 = vsub.s32 0, %v930
        %v932 = vrot.slane %v927, %v931
        %v942 = vunpack.c.l.b16 %v919
        %v943 = vunpack.c.l.b16 %v920
        %v944 = vunpack.c.l.b16 %v921
        %v945 = vunpack.c.l.b16 %v922
        %v946 = vunpack.c.l.b16 %v923
        %v947 = vunpack.c.l.b16 %v924
        %v948 = vunpack.c.l.b16 %v925
        %v949 = vunpack.c.l.b16 %v926
        %v950 = vpack.c.b16 %v943, %v942
        %v951 = vpack.c.b16 %v945, %v944
        %v952 = vpack.c.b16 %v947, %v946
        %v953 = vpack.c.b16 %v949, %v948
        %vm958 = vcmask 523264
        %v960 = vsel %vm958, %v918, 0
        %962 = vmatprep.subr.bf16.mxu0 0
        %963 = vmatpush1.bf16.msra.mxu0 0
        %964 = vmatprep.subr.bf16.mxu0 0
        %965 = vmatpush1.bf16.msra.mxu0 0
        %966 = vmatprep.subr.bf16.mxu0 0
        %967 = vmatpush1.bf16.msra.mxu0 0
        %968 = vmatprep.subr.bf16.mxu0 0
        %969 = vmatpush1.bf16.msra.mxu0 0
        %970 = vmatprep.subr.bf16.mxu0 0
        %971 = vmatpush1.bf16.msra.mxu0 %v953
        %972 = vmatprep.subr.bf16.mxu0 0
        %973 = vmatpush1.bf16.msra.mxu0 %v952
        %974 = vmatprep.subr.bf16.mxu0 0
        %975 = vmatpush1.bf16.msra.mxu0 %v951
        %976 = vmatprep.subr.bf16.mxu0 0
        %977 = vmatpush1.bf16.msra.mxu0 %v950
        %978 = vmatprep.subr.bf16.mxu0 0
        %979 = vmatpush2.bf16.msra.mxu0 0
        %980 = vmatprep.subr.bf16.mxu0 0
        %981 = vmatpush2.bf16.msra.mxu0 0
        %982 = vmatprep.subr.bf16.mxu0 0
        %983 = vmatpush2.bf16.msra.mxu0 0
        %984 = vmatprep.subr.bf16.mxu0 0
        %985 = vmatpush2.bf16.msra.mxu0 0
        %986 = vmatprep.subr.bf16.mxu0 0
        %987 = vmatpush2.bf16.msra.mxu0 0
        %988 = vmatprep.subr.bf16.mxu0 0
        %989 = vmatpush2.bf16.msra.mxu0 0
        %990 = vmatprep.subr.bf16.mxu0 0
        %991 = vmatpush2.bf16.msra.mxu0 0
        %992 = vmatprep.subr.bf16.mxu0 0
        %993 = vmatpush2.bf16.msra.mxu0 0
        %994 = vmatprep.mubr.bf16.mxu0 0
        %995 = vmatmul.mubr.bf16.gmra.mxu0 %v960
        %v996 = vpop.f32.mrf.mxu0
        %v997 = vadd.f32 %v932, %v996
        %v998 = vpop.f32.mrf.mxu0
        %v999 = vpop.f32.mrf.mxu0
        %v1000 = vpop.f32.mrf.mxu0
        %1001 = vdwg.mxu0
        %v1002 = vadd.f32 %v997, %v356
        %v1003 = vsel %vm357, %v1002, 0.0
        %1004 = vadd.xlane.f32.xlu0 %v1003
        %v1005 = vpop.xlane.xlu0 %1004
        %v1006 = vmul.f32 %v1005, %v361
        %v1007 = vsub.f32 %v1002, %v1006
        %v1008 = vmul.f32 %v1007, %v1007
        %v1009 = vsel %vm357, %v1008, 0.0
        %1010 = vadd.xlane.f32.xlu0 %v1009
        %v1011 = vpop.xlane.xlu0 %1010
        %v1012 = vmul.f32 %v1011, %v361
        %v1013 = vadd.f32 %v1012, 1e-05
        %v1014 = vrsqrt.pop %v1013
        %v1015 = vmul.f32 %v1007, %v1014
        %v1016 = vpack.c.bf16 %v1015, %v1015
        %v1017 = vld [vmem:[%s6] sm:$0xf]
        %v1018 = vld [vmem:[%s6 + $0x4] sm:$0xf]
        %v1019 = vld [vmem:[%s6 + $0x8] sm:$0xf]
        %v1020 = vld [vmem:[%s6 + $0xc] sm:$0xf]
        %v1021 = vld [vmem:[%s7] sm:$0x1]
        %v1023 = vlaneseq
        %v1024 = vshrl.u32 %v1023, 7
        %v1025 = vsub.s32 0, %v1024
        %v1026 = vrot.slane %v1021, %v1025
        %v1032 = vunpack.c.l.b16 %v1017
        %v1033 = vunpack.c.l.b16 %v1018
        %v1034 = vunpack.c.l.b16 %v1019
        %v1035 = vunpack.c.l.b16 %v1020
        %v1036 = vpack.c.b16 %v1033, %v1032
        %v1037 = vpack.c.b16 %v1035, %v1034
        %v1041 = vsel %vm357, %v1016, 0
        %1043 = vmatprep.subr.bf16.mxu0 0
        %1044 = vmatpush1.bf16.msra.mxu0 0
        %1045 = vmatprep.subr.bf16.mxu0 0
        %1046 = vmatpush1.bf16.msra.mxu0 0
        %1047 = vmatprep.subr.bf16.mxu0 0
        %1048 = vmatpush1.bf16.msra.mxu0 0
        %1049 = vmatprep.subr.bf16.mxu0 0
        %1050 = vmatpush1.bf16.msra.mxu0 0
        %1051 = vmatprep.subr.bf16.mxu0 0
        %1052 = vmatpush1.bf16.msra.mxu0 0
        %1053 = vmatprep.subr.bf16.mxu0 0
        %1054 = vmatpush1.bf16.msra.mxu0 0
        %1055 = vmatprep.subr.bf16.mxu0 0
        %1056 = vmatpush1.bf16.msra.mxu0 %v1037
        %1057 = vmatprep.subr.bf16.mxu0 0
        %1058 = vmatpush1.bf16.msra.mxu0 %v1036
        %1059 = vmatprep.subr.bf16.mxu0 0
        %1060 = vmatpush2.bf16.msra.mxu0 0
        %1061 = vmatprep.subr.bf16.mxu0 0
        %1062 = vmatpush2.bf16.msra.mxu0 0
        %1063 = vmatprep.subr.bf16.mxu0 0
        %1064 = vmatpush2.bf16.msra.mxu0 0
        %1065 = vmatprep.subr.bf16.mxu0 0
        %1066 = vmatpush2.bf16.msra.mxu0 0
        %1067 = vmatprep.subr.bf16.mxu0 0
        %1068 = vmatpush2.bf16.msra.mxu0 0
        %1069 = vmatprep.subr.bf16.mxu0 0
        %1070 = vmatpush2.bf16.msra.mxu0 0
        %1071 = vmatprep.subr.bf16.mxu0 0
        %1072 = vmatpush2.bf16.msra.mxu0 0
        %1073 = vmatprep.subr.bf16.mxu0 0
        %1074 = vmatpush2.bf16.msra.mxu0 0
        %1075 = vmatprep.mubr.bf16.mxu0 0
        %1076 = vmatmul.mubr.bf16.gmra.mxu0 %v1041
        %v1077 = vpop.f32.mrf.mxu0
        %v1078 = vadd.f32 %v1026, %v1077
        %v1079 = vpop.f32.mrf.mxu0
        %v1080 = vpop.f32.mrf.mxu0
        %v1081 = vpop.f32.mrf.mxu0
        %1082 = vdwg.mxu0
        %v1083 = vmul.f32 %v1078, 0.5
        %v1084 = vmul.f32 %v1078, 0.70710677
        %vm1085 = vcmp.ge.f32.partialorder %v1084, 0.0
        %v1086 = vsel %vm1085, 1.0, -1.0
        %v1087 = vand.u32 2147483647, %v1084
        %v1088 = vmul.f32 %v1087, 0.3275911
        %v1089 = vadd.f32 %v1088, 1.0
        %v1090 = vrcp.pop %v1089
        %v1091 = vmul.f32 1.0, %v1090
        %v1092 = vmul.f32 %v1091, 1.0614054
        %v1093 = vadd.f32 %v1092, -1.4531521
        %v1094 = vmul.f32 %v1091, %v1093
        %v1095 = vadd.f32 %v1094, 1.4214138
        %v1096 = vmul.f32 %v1091, %v1095
        %v1097 = vadd.f32 %v1096, -0.28449672
        %v1098 = vmul.f32 %v1091, %v1097
        %v1099 = vadd.f32 %v1098, 0.2548296
        %v1100 = vmul.f32 %v1091, %v1099
        %v1101 = vsub.f32 0.0, %v1087
        %v1102 = vmul.f32 %v1101, %v1087
        %v1103 = vmul.f32 %v1102, 1.442695
        %v1104 = vpow.pop %v1103
        %v1105 = vmul.f32 %v1100, %v1104
        %v1106 = vsub.f32 1.0, %v1105
        %v1107 = vmul.f32 %v1086, %v1106
        %v1108 = vadd.f32 %v1107, 1.0
        %v1109 = vmul.f32 %v1083, %v1108
        %v1110 = vpack.c.bf16 %v1109, %v1109
        %v1111 = vld [vmem:[%s8] sm:$0xf]
        %v1112 = vld [vmem:[%s8 + $0x4] sm:$0xf]
        %v1113 = vld [vmem:[%s8 + $0x8] sm:$0xf]
        %v1114 = vld [vmem:[%s8 + $0xc] sm:$0xf]
        %v1115 = vld [vmem:[%s8 + $0x10] sm:$0xf]
        %v1116 = vld [vmem:[%s8 + $0x14] sm:$0xf]
        %v1117 = vld [vmem:[%s8 + $0x18] sm:$0xf]
        %v1118 = vld [vmem:[%s8 + $0x1c] sm:$0xf]
        %v1119 = vld [vmem:[%s9] sm:$0x1]
        %v1121 = vlaneseq
        %v1122 = vshrl.u32 %v1121, 7
        %v1123 = vsub.s32 0, %v1122
        %v1124 = vrot.slane %v1119, %v1123
        %v1134 = vunpack.c.l.b16 %v1111
        %v1135 = vunpack.c.l.b16 %v1112
        %v1136 = vunpack.c.l.b16 %v1113
        %v1137 = vunpack.c.l.b16 %v1114
        %v1138 = vunpack.c.l.b16 %v1115
        %v1139 = vunpack.c.l.b16 %v1116
        %v1140 = vunpack.c.l.b16 %v1117
        %v1141 = vunpack.c.l.b16 %v1118
        %v1142 = vpack.c.b16 %v1135, %v1134
        %v1143 = vpack.c.b16 %v1137, %v1136
        %v1144 = vpack.c.b16 %v1139, %v1138
        %v1145 = vpack.c.b16 %v1141, %v1140
        %v1151 = vsel %vm958, %v1110, 0
        %1153 = vmatprep.subr.bf16.mxu0 0
        %1154 = vmatpush1.bf16.msra.mxu0 0
        %1155 = vmatprep.subr.bf16.mxu0 0
        %1156 = vmatpush1.bf16.msra.mxu0 0
        %1157 = vmatprep.subr.bf16.mxu0 0
        %1158 = vmatpush1.bf16.msra.mxu0 0
        %1159 = vmatprep.subr.bf16.mxu0 0
        %1160 = vmatpush1.bf16.msra.mxu0 0
        %1161 = vmatprep.subr.bf16.mxu0 0
        %1162 = vmatpush1.bf16.msra.mxu0 %v1145
        %1163 = vmatprep.subr.bf16.mxu0 0
        %1164 = vmatpush1.bf16.msra.mxu0 %v1144
        %1165 = vmatprep.subr.bf16.mxu0 0
        %1166 = vmatpush1.bf16.msra.mxu0 %v1143
        %1167 = vmatprep.subr.bf16.mxu0 0
        %1168 = vmatpush1.bf16.msra.mxu0 %v1142
        %1169 = vmatprep.subr.bf16.mxu0 0
        %1170 = vmatpush2.bf16.msra.mxu0 0
        %1171 = vmatprep.subr.bf16.mxu0 0
        %1172 = vmatpush2.bf16.msra.mxu0 0
        %1173 = vmatprep.subr.bf16.mxu0 0
        %1174 = vmatpush2.bf16.msra.mxu0 0
        %1175 = vmatprep.subr.bf16.mxu0 0
        %1176 = vmatpush2.bf16.msra.mxu0 0
        %1177 = vmatprep.subr.bf16.mxu0 0
        %1178 = vmatpush2.bf16.msra.mxu0 0
        %1179 = vmatprep.subr.bf16.mxu0 0
        %1180 = vmatpush2.bf16.msra.mxu0 0
        %1181 = vmatprep.subr.bf16.mxu0 0
        %1182 = vmatpush2.bf16.msra.mxu0 0
        %1183 = vmatprep.subr.bf16.mxu0 0
        %1184 = vmatpush2.bf16.msra.mxu0 0
        %1185 = vmatprep.mubr.bf16.mxu0 0
        %1186 = vmatmul.mubr.bf16.gmra.mxu0 %v1151
        %v1187 = vpop.f32.mrf.mxu0
        %v1188 = vadd.f32 %v1124, %v1187
        %v1189 = vpop.f32.mrf.mxu0
        %v1190 = vpop.f32.mrf.mxu0
        %v1191 = vpop.f32.mrf.mxu0
        %1192 = vdwg.mxu0
        %v1193 = vadd.f32 %v1188, %v1002
        %1194 = vst.msk [vmem:[%s350] sm:$0xff] %vm357, %v1193
        %s1195 = sand.u32 %s247, 1
        %s1196 = scalar_lea.sflag [#allocation3], %s1195
        %s1197 = sand.u32 %s247, 1
        %s1198 = smul.addr %s1197, 8
        %s1199 = scalar_lea.vmem [#allocation2], %s1198
        // Predicated region
        $region61: #{tpu_custom_call.1} parent=59 // pred_check
          %p1200 = pneg %p257
        $region62: #{tpu_custom_call.1} parent=59 // pred_check_branch
          %1202 = sbr.rel (%p1200) target = $region64
        $region63: #{tpu_custom_call.1} parent=59 // pred_region
          %s1204 = ssub.s32 128, 128
          %1205 = vsyncadd %s1196, %s1204
          %s1206 = smul.addr %s24, 128
          %s1207 = scalar_lea.hbm %s10, %s1206
          %s1209 = sshll.u32 %s1199, 4
          %s1210 = int_to_ptr.vmem [resolvable:$true] %s1209
          %1212 = dma.vmem_to_hbm [thread:$0]  %s1210, 128, %s1207, %s1196
        $region64: #{tpu_custom_call.1} parent=59 // pred_fallthru
          _
      $region60: #{tpu_custom_call.1} parent=5 // pred_fallthru
        _
      %p1213 = scmp.le.s32.totalorder 2, %s19
      // Predicated region
      $region65: #{tpu_custom_call.1} parent=5 // pred_check
        %p1214 = pneg %p1213
      $region66: #{tpu_custom_call.1} parent=5 // pred_check_branch
        %1216 = sbr.rel (%p1214) target = $region68
      $region67: #{tpu_custom_call.1} parent=5 // pred_region
        %s1217 = ssub.s32 %s19, 2
        // Predicated region
        $region69: #{tpu_custom_call.1} parent=67 // pred_check
          %p1218 = pneg %p263
        $region70: #{tpu_custom_call.1} parent=67 // pred_check_branch
          %1220 = sbr.rel (%p1218) target = $region72
        $region71: #{tpu_custom_call.1} parent=67 // pred_region
          %s1221 = sand.u32 %s248, 1
          %s1222 = scalar_lea.sflag [#allocation3], %s1221
          %s1223 = sand.u32 %s248, 1
          %s1224 = smul.addr %s1223, 8
          %s1225 = scalar_lea.vmem [#allocation2], %s1224
          %1226 = dma.done %s1222, 128
        $region72: #{tpu_custom_call.1} parent=67 // pred_fallthru
          _
      $region68: #{tpu_custom_call.1} parent=5 // pred_fallthru
        _
    $region6: #{tpu_custom_call.1} parent=1 // loop_footer
      %s23 = sadd.s32 1, %s19
    $region7: #{tpu_custom_call.1} parent=1 // loop_footer_branch
      %18 = sbr.rel target = $region3
    $region8: #{tpu_custom_call.1} parent=1 // loop_exit
      _
    %1227 = vsyncpa [#allocation3], 1
    %s1228 = scalar_lea.sflag [#allocation3], 1
    %1229 = vsyncpa %s1228, 1

</llo_original>
